<compile_context>
chip_gen: v7x
topology: tpu7x:2x2x1
jax: 0.10.0
libtpu: 0.0.40
codegen_flags: <defaults>
</compile_context>

<pallas_src>
import functools

import jax
import jax.numpy as jnp
from jax import lax
from jax.experimental import pallas as pl
from jax.experimental.pallas import tpu as pltpu

LEAK = 0.1  # nn.LeakyReLU(0.1)


def _temporal_block_kernel(xp_ref, w1_ref, b1_ref, w2_ref, b2_ref, wd_ref,
                           bd_ref, o_ref, ypad_ref, *, H, W, ph, pw, dh, dw,
                           KH, KW):
    """Fused TemporalBlock2D forward for one batch item.

    xp_ref  : (Hp, Wp, Cin)       f32   zero-padded input, NHWC
    w1_ref  : (KH*KW*Cin,  Cmid)  bf16  conv1 weight, im2col layout
    b1_ref  : (1, Cmid)           f32
    w2_ref  : (KH*KW*Cmid, Cout)  bf16  conv2 weight, im2col layout
    b2_ref  : (1, Cout)           f32
    wd_ref  : (Cin, Cout)         bf16  1x1 downsample weight
    bd_ref  : (1, Cout)           f32
    o_ref   : (Cout, H*W)         f32   lane-dense output (NCHW, spatial flattened)
    ypad_ref: (Hp, Wp, Cmid)      f32   VMEM scratch: padded conv1 activation
    """
    M = H * W
    Cin = xp_ref.shape[-1]
    Cmid = w1_ref.shape[-1]

    def im2col(src_ref, c):
        # Gather all KH*KW taps for every output position into one
        # (H*W, KH*KW*c) bf16 matrix: taps folded into the contraction dim.
        cols = []
        for kh in range(KH):
            for kw in range(KW):
                slab = src_ref[kh * dh:kh * dh + H, kw * dw:kw * dw + W, :]
                cols.append(slab.reshape(M, c).astype(jnp.bfloat16))
        return jnp.concatenate(cols, axis=1)

    # ---- conv1 + bias + LeakyReLU(0.1): one MXU matmul, f32 accumulation ----
    patch1 = im2col(xp_ref, Cin)                              # (M, KH*KW*Cin)
    y = jnp.dot(patch1, w1_ref[...], preferred_element_type=jnp.float32)
    y = y + b1_ref[...]
    y = jnp.where(y > 0, y, LEAK * y)                         # (M, Cmid) f32

    # Keep the zero-padded conv1 activation in VMEM scratch (no HBM round-trip).
    ypad_ref[...] = jnp.zeros_like(ypad_ref)
    ypad_ref[ph:ph + H, pw:pw + W, :] = y.reshape(H, W, Cmid)

    # ---- conv2 + bias + LeakyReLU(0.1): one MXU matmul from VMEM scratch ----
    patch2 = im2col(ypad_ref, Cmid)                           # (M, KH*KW*Cmid)
    o = jnp.dot(patch2, w2_ref[...], preferred_element_type=jnp.float32)
    o = o + b2_ref[...]
    o = jnp.where(o > 0, o, LEAK * o)                         # (M, Cout)

    # ---- 1x1 downsample residual: a single (M, Cin) x (Cin, Cout) matmul ----
    xc = xp_ref[ph:ph + H, pw:pw + W, :].reshape(M, Cin).astype(jnp.bfloat16)
    res = jnp.dot(xc, wd_ref[...], preferred_element_type=jnp.float32)
    res = res + bd_ref[...]

    # Final ReLU; store transposed so the dense spatial dim sits on the lanes.
    o_ref[...] = jnp.maximum(o + res, 0.0).T                  # (Cout, M)


def temporal_block_2d(x_nchw, params, *, kernel_size=(3, 3), dilation=(2, 1)):
    """Forward pass of TemporalBlock2D (n_inputs != n_outputs -> 1x1 downsample)."""
    w1, b1, w2, b2, wd, bd = params
    N, Cin, H, W = x_nchw.shape
    KH, KW = kernel_size
    dh, dw = dilation
    Cmid = w1.shape[-1]
    Cout = w2.shape[-1]
    ph = (KH - 1) * dh // 2
    pw = (KW - 1) * dw // 2
    Hp, Wp = H + 2 * ph, W + 2 * pw
    K1, K2 = KH * KW * Cin, KH * KW * Cmid

    # NCHW -> NHWC + nn.ZeroPad2d (glue); convs/activations/residual run in Pallas.
    x = jnp.transpose(x_nchw, (0, 2, 3, 1)).astype(jnp.float32)
    xp = jnp.pad(x, ((0, 0), (ph, ph), (pw, pw), (0, 0)))

    # Pre-reshape weights to the im2col matmul layout; bf16 at the MXU inputs.
    w1r = w1.reshape(K1, Cmid).astype(jnp.bfloat16)
    w2r = w2.reshape(K2, Cout).astype(jnp.bfloat16)
    wdr = wd.astype(jnp.bfloat16)
    b1r = b1.reshape(1, Cmid).astype(jnp.float32)
    b2r = b2.reshape(1, Cout).astype(jnp.float32)
    bdr = bd.reshape(1, Cout).astype(jnp.float32)

    kernel = functools.partial(_temporal_block_kernel, H=H, W=W, ph=ph, pw=pw,
                               dh=dh, dw=dw, KH=KH, KW=KW)

    out_t = pl.pallas_call(
        kernel,
        out_shape=jax.ShapeDtypeStruct((N, Cout, H * W), jnp.float32),
        grid=(N,),
        in_specs=[
            pl.BlockSpec((None, Hp, Wp, Cin), lambda b: (b, 0, 0, 0)),  # xp
            pl.BlockSpec((K1, Cmid), lambda b: (0, 0)),                 # w1r
            pl.BlockSpec((1, Cmid), lambda b: (0, 0)),                  # b1
            pl.BlockSpec((K2, Cout), lambda b: (0, 0)),                 # w2r
            pl.BlockSpec((1, Cout), lambda b: (0, 0)),                  # b2
            pl.BlockSpec((Cin, Cout), lambda b: (0, 0)),                # wd
            pl.BlockSpec((1, Cout), lambda b: (0, 0)),                  # bd
        ],
        out_specs=pl.BlockSpec((None, Cout, H * W), lambda b: (b, 0, 0)),
        scratch_shapes=[pltpu.VMEM((Hp, Wp, Cmid), jnp.float32)],
        compiler_params=pltpu.CompilerParams(
            dimension_semantics=("parallel",)),
    )(xp, w1r, b1r, w2r, b2r, wdr, bdr)

    # Lane-dense (Cout, H*W) blocks already come out in NCHW order: free reshape.
    return out_t.reshape(N, Cout, H, W)


def reference(x_nchw, params, *, kernel_size=(3, 3), dilation=(2, 1)):
    """Pure-JAX f32 reference of the PyTorch forward (eval semantics)."""
    w1, b1, w2, b2, wd, bd = params
    KH, KW = kernel_size
    dh, dw = dilation
    ph = (KH - 1) * dh // 2
    pw = (KW - 1) * dw // 2
    x = jnp.transpose(x_nchw, (0, 2, 3, 1)).astype(jnp.float32)
    dn = ("NHWC", "HWIO", "NHWC")

    def conv(inp, w, d):
        return lax.conv_general_dilated(
            inp, w, window_strides=(1, 1), padding="VALID",
            rhs_dilation=d, dimension_numbers=dn,
            precision=lax.Precision.HIGHEST)

    xp = jnp.pad(x, ((0, 0), (ph, ph), (pw, pw), (0, 0)))
    o = conv(xp, w1, (dh, dw)) + b1
    o = jnp.where(o > 0, o, LEAK * o)
    op = jnp.pad(o, ((0, 0), (ph, ph), (pw, pw), (0, 0)))
    o = conv(op, w2, (dh, dw)) + b2
    o = jnp.where(o > 0, o, LEAK * o)
    res = conv(x, wd.reshape(1, 1, *wd.shape), (1, 1)) + bd
    out = jnp.maximum(o + res, 0.0)
    return jnp.transpose(out, (0, 3, 1, 2))


if __name__ == "__main__":
    key = jax.random.PRNGKey(0)
    kx, k1, k2, k3, k4, k5, k6 = jax.random.split(key, 7)

    N, Cin, H, W = 2, 4, 16, 16          # n_inputs=4
    Cout = 8                              # n_outputs=8 (!= n_inputs -> downsample)
    KH, KW = 3, 3                         # kernel_size
    dilation = (2, 1)                     # dilation (stride fixed to (1,1))

    x = jax.random.normal(kx, (N, Cin, H, W), jnp.float32)
    w1 = 0.1 * jax.random.normal(k1, (KH, KW, Cin, Cout), jnp.float32)   # HWIO
    b1 = 0.1 * jax.random.normal(k2, (Cout,), jnp.float32)
    w2 = 0.1 * jax.random.normal(k3, (KH, KW, Cout, Cout), jnp.float32)
    b2 = 0.1 * jax.random.normal(k4, (Cout,), jnp.float32)
    wd = 0.1 * jax.random.normal(k5, (Cin, Cout), jnp.float32)           # 1x1 conv
    bd = 0.1 * jax.random.normal(k6, (Cout,), jnp.float32)
    params = (w1, b1, w2, b2, wd, bd)

    out = temporal_block_2d(x, params, kernel_size=(KH, KW), dilation=dilation)
    out = jax.block_until_ready(out)
    assert out.shape == (N, Cout, H, W), out.shape

    ref = reference(x, params, kernel_size=(KH, KW), dilation=dilation)
    max_err = float(jnp.max(jnp.abs(out - ref)))
    # Tolerance covers bf16 MXU inputs (f32 accumulation/epilogue) vs f32 reference.
    if not (max_err < 5e-2):
        raise AssertionError(f"Pallas result mismatch vs reference, max abs err={max_err}")

    print("KERNEL_OK")
</pallas_src>

<mosaic_0001>
module attributes {stable_mosaic.version = 11 : i64} {
  func.func @_temporal_block_kernel(%arg0: i32, %arg1: memref<1x20x18x4xf32, #tpu.memory_space<vmem>>, %arg2: memref<36x8xbf16, #tpu.memory_space<vmem>>, %arg3: memref<1x8xf32, #tpu.memory_space<vmem>>, %arg4: memref<72x8xbf16, #tpu.memory_space<vmem>>, %arg5: memref<1x8xf32, #tpu.memory_space<vmem>>, %arg6: memref<4x8xbf16, #tpu.memory_space<vmem>>, %arg7: memref<1x8xf32, #tpu.memory_space<vmem>>, %arg8: memref<1x8x256xf32, #tpu.memory_space<vmem>>, %arg9: memref<20x18x8xf32, #tpu.memory_space<vmem>>) attributes {dimension_semantics = [#tpu.dimension_semantics<parallel>], iteration_bounds = array<i64: 2>, scalar_prefetch = 0 : i64, scratch_operands = 1 : i64, tpu.core_type = #tpu.core_type<tc>, window_params = [{transform_indices = @transform_0, window_bounds = array<i64: 1, 20, 18, 4>}, {pipeline_mode = #tpu.pipeline_mode<synchronous>, transform_indices = @transform_1, window_bounds = array<i64: 36, 8>}, {pipeline_mode = #tpu.pipeline_mode<synchronous>, transform_indices = @transform_2, window_bounds = array<i64: 1, 8>}, {pipeline_mode = #tpu.pipeline_mode<synchronous>, transform_indices = @transform_3, window_bounds = array<i64: 72, 8>}, {pipeline_mode = #tpu.pipeline_mode<synchronous>, transform_indices = @transform_4, window_bounds = array<i64: 1, 8>}, {pipeline_mode = #tpu.pipeline_mode<synchronous>, transform_indices = @transform_5, window_bounds = array<i64: 4, 8>}, {pipeline_mode = #tpu.pipeline_mode<synchronous>, transform_indices = @transform_6, window_bounds = array<i64: 1, 8>}, {transform_indices = @transform_7, window_bounds = array<i64: 1, 8, 256>}]} {
    %c0 = arith.constant 0 : index
    %c0_0 = arith.constant 0 : index
    %c0_1 = arith.constant 0 : index
    %c0_2 = arith.constant 0 : index
    %0 = vector.load %arg1[%c0, %c0_0, %c0_1, %c0_2] : memref<1x20x18x4xf32, #tpu.memory_space<vmem>>, vector<1x16x16x4xf32>
    %1 = vector.shape_cast %0 : vector<1x16x16x4xf32> to vector<16x16x4xf32>
    %2 = vector.shape_cast %1 : vector<16x16x4xf32> to vector<256x4xf32>
    %3 = arith.truncf %2 : vector<256x4xf32> to vector<256x4xbf16>
    %c0_3 = arith.constant 0 : index
    %c0_4 = arith.constant 0 : index
    %c1 = arith.constant 1 : index
    %c0_5 = arith.constant 0 : index
    %4 = vector.load %arg1[%c0_3, %c0_4, %c1, %c0_5] : memref<1x20x18x4xf32, #tpu.memory_space<vmem>>, vector<1x16x16x4xf32>
    %5 = vector.shape_cast %4 : vector<1x16x16x4xf32> to vector<16x16x4xf32>
    %6 = vector.shape_cast %5 : vector<16x16x4xf32> to vector<256x4xf32>
    %7 = arith.truncf %6 : vector<256x4xf32> to vector<256x4xbf16>
    %c0_6 = arith.constant 0 : index
    %c0_7 = arith.constant 0 : index
    %c2 = arith.constant 2 : index
    %c0_8 = arith.constant 0 : index
    %8 = vector.load %arg1[%c0_6, %c0_7, %c2, %c0_8] : memref<1x20x18x4xf32, #tpu.memory_space<vmem>>, vector<1x16x16x4xf32>
    %9 = vector.shape_cast %8 : vector<1x16x16x4xf32> to vector<16x16x4xf32>
    %10 = vector.shape_cast %9 : vector<16x16x4xf32> to vector<256x4xf32>
    %11 = arith.truncf %10 : vector<256x4xf32> to vector<256x4xbf16>
    %c0_9 = arith.constant 0 : index
    %c2_10 = arith.constant 2 : index
    %c0_11 = arith.constant 0 : index
    %c0_12 = arith.constant 0 : index
    %12 = vector.load %arg1[%c0_9, %c2_10, %c0_11, %c0_12] : memref<1x20x18x4xf32, #tpu.memory_space<vmem>>, vector<1x16x16x4xf32>
    %13 = vector.shape_cast %12 : vector<1x16x16x4xf32> to vector<16x16x4xf32>
    %14 = vector.shape_cast %13 : vector<16x16x4xf32> to vector<256x4xf32>
    %15 = arith.truncf %14 : vector<256x4xf32> to vector<256x4xbf16>
    %c0_13 = arith.constant 0 : index
    %c2_14 = arith.constant 2 : index
    %c1_15 = arith.constant 1 : index
    %c0_16 = arith.constant 0 : index
    %16 = vector.load %arg1[%c0_13, %c2_14, %c1_15, %c0_16] : memref<1x20x18x4xf32, #tpu.memory_space<vmem>>, vector<1x16x16x4xf32>
    %17 = vector.shape_cast %16 : vector<1x16x16x4xf32> to vector<16x16x4xf32>
    %18 = vector.shape_cast %17 : vector<16x16x4xf32> to vector<256x4xf32>
    %19 = arith.truncf %18 : vector<256x4xf32> to vector<256x4xbf16>
    %c0_17 = arith.constant 0 : index
    %c2_18 = arith.constant 2 : index
    %c2_19 = arith.constant 2 : index
    %c0_20 = arith.constant 0 : index
    %20 = vector.load %arg1[%c0_17, %c2_18, %c2_19, %c0_20] : memref<1x20x18x4xf32, #tpu.memory_space<vmem>>, vector<1x16x16x4xf32>
    %21 = vector.shape_cast %20 : vector<1x16x16x4xf32> to vector<16x16x4xf32>
    %22 = vector.shape_cast %21 : vector<16x16x4xf32> to vector<256x4xf32>
    %23 = arith.truncf %22 : vector<256x4xf32> to vector<256x4xbf16>
    %c0_21 = arith.constant 0 : index
    %c4 = arith.constant 4 : index
    %c0_22 = arith.constant 0 : index
    %c0_23 = arith.constant 0 : index
    %24 = vector.load %arg1[%c0_21, %c4, %c0_22, %c0_23] : memref<1x20x18x4xf32, #tpu.memory_space<vmem>>, vector<1x16x16x4xf32>
    %25 = vector.shape_cast %24 : vector<1x16x16x4xf32> to vector<16x16x4xf32>
    %26 = vector.shape_cast %25 : vector<16x16x4xf32> to vector<256x4xf32>
    %27 = arith.truncf %26 : vector<256x4xf32> to vector<256x4xbf16>
    %c0_24 = arith.constant 0 : index
    %c4_25 = arith.constant 4 : index
    %c1_26 = arith.constant 1 : index
    %c0_27 = arith.constant 0 : index
    %28 = vector.load %arg1[%c0_24, %c4_25, %c1_26, %c0_27] : memref<1x20x18x4xf32, #tpu.memory_space<vmem>>, vector<1x16x16x4xf32>
    %29 = vector.shape_cast %28 : vector<1x16x16x4xf32> to vector<16x16x4xf32>
    %30 = vector.shape_cast %29 : vector<16x16x4xf32> to vector<256x4xf32>
    %31 = arith.truncf %30 : vector<256x4xf32> to vector<256x4xbf16>
    %c0_28 = arith.constant 0 : index
    %c4_29 = arith.constant 4 : index
    %c2_30 = arith.constant 2 : index
    %c0_31 = arith.constant 0 : index
    %32 = vector.load %arg1[%c0_28, %c4_29, %c2_30, %c0_31] : memref<1x20x18x4xf32, #tpu.memory_space<vmem>>, vector<1x16x16x4xf32>
    %33 = vector.shape_cast %32 : vector<1x16x16x4xf32> to vector<16x16x4xf32>
    %34 = vector.shape_cast %33 : vector<16x16x4xf32> to vector<256x4xf32>
    %35 = arith.truncf %34 : vector<256x4xf32> to vector<256x4xbf16>
    %36 = tpu.concatenate %3, %7, %11, %15, %19, %23, %27, %31, %35 in 1 : vector<256x4xbf16>, vector<256x4xbf16>, vector<256x4xbf16>, vector<256x4xbf16>, vector<256x4xbf16>, vector<256x4xbf16>, vector<256x4xbf16>, vector<256x4xbf16>, vector<256x4xbf16> -> vector<256x36xbf16>
    %c0_32 = arith.constant 0 : index
    %c0_33 = arith.constant 0 : index
    %37 = vector.load %arg2[%c0_32, %c0_33] : memref<36x8xbf16, #tpu.memory_space<vmem>>, vector<36x8xbf16>
    %cst = arith.constant dense<0.000000e+00> : vector<256x8xf32>
    %38 = tpu.matmul %36, %37, %cst {dimension_numbers = #tpu.dot_dimension_numbers<[1], [0], [0], [1], [0, 0, 1, 1], [], []>} : vector<256x36xbf16>, vector<36x8xbf16>, vector<256x8xf32> -> vector<256x8xf32>
    %c0_34 = arith.constant 0 : index
    %c0_35 = arith.constant 0 : index
    %39 = vector.load %arg3[%c0_34, %c0_35] : memref<1x8xf32, #tpu.memory_space<vmem>>, vector<1x8xf32>
    %40 = vector.broadcast %39 : vector<1x8xf32> to vector<256x8xf32>
    %41 = arith.addf %38, %40 : vector<256x8xf32>
    %cst_36 = arith.constant 0.000000e+00 : f32
    %42 = vector.broadcast %cst_36 : f32 to vector<256x8xf32>
    %43 = arith.cmpf ogt, %41, %42 : vector<256x8xf32>
    %cst_37 = arith.constant 1.000000e-01 : f32
    %44 = vector.broadcast %cst_37 : f32 to vector<256x8xf32>
    %45 = arith.mulf %44, %41 : vector<256x8xf32>
    %46 = arith.select %43, %41, %45 : vector<256x8xi1>, vector<256x8xf32>
    %cst_38 = arith.constant 0.000000e+00 : f32
    %47 = vector.broadcast %cst_38 : f32 to vector<20x18x8xf32>
    %c0_39 = arith.constant 0 : index
    %c0_40 = arith.constant 0 : index
    %c0_41 = arith.constant 0 : index
    %48 = vector.load %arg9[%c0_39, %c0_40, %c0_41] : memref<20x18x8xf32, #tpu.memory_space<vmem>>, vector<20x18x8xf32>
    tpu.vector_store %arg9[%c0_39, %c0_40, %c0_41], %47 {strides = array<i32>} : memref<20x18x8xf32, #tpu.memory_space<vmem>>, vector<20x18x8xf32>,
    %49 = vector.shape_cast %46 : vector<256x8xf32> to vector<16x16x8xf32>
    %c2_42 = arith.constant 2 : index
    %c1_43 = arith.constant 1 : index
    %c0_44 = arith.constant 0 : index
    %50 = vector.load %arg9[%c2_42, %c1_43, %c0_44] : memref<20x18x8xf32, #tpu.memory_space<vmem>>, vector<16x16x8xf32>
    tpu.vector_store %arg9[%c2_42, %c1_43, %c0_44], %49 {strides = array<i32>} : memref<20x18x8xf32, #tpu.memory_space<vmem>>, vector<16x16x8xf32>,
    %c0_45 = arith.constant 0 : index
    %c0_46 = arith.constant 0 : index
    %c0_47 = arith.constant 0 : index
    %51 = vector.load %arg9[%c0_45, %c0_46, %c0_47] : memref<20x18x8xf32, #tpu.memory_space<vmem>>, vector<16x16x8xf32>
    %52 = vector.shape_cast %51 : vector<16x16x8xf32> to vector<256x8xf32>
    %53 = arith.truncf %52 : vector<256x8xf32> to vector<256x8xbf16>
    %c0_48 = arith.constant 0 : index
    %c1_49 = arith.constant 1 : index
    %c0_50 = arith.constant 0 : index
    %54 = vector.load %arg9[%c0_48, %c1_49, %c0_50] : memref<20x18x8xf32, #tpu.memory_space<vmem>>, vector<16x16x8xf32>
    %55 = vector.shape_cast %54 : vector<16x16x8xf32> to vector<256x8xf32>
    %56 = arith.truncf %55 : vector<256x8xf32> to vector<256x8xbf16>
    %c0_51 = arith.constant 0 : index
    %c2_52 = arith.constant 2 : index
    %c0_53 = arith.constant 0 : index
    %57 = vector.load %arg9[%c0_51, %c2_52, %c0_53] : memref<20x18x8xf32, #tpu.memory_space<vmem>>, vector<16x16x8xf32>
    %58 = vector.shape_cast %57 : vector<16x16x8xf32> to vector<256x8xf32>
    %59 = arith.truncf %58 : vector<256x8xf32> to vector<256x8xbf16>
    %c2_54 = arith.constant 2 : index
    %c0_55 = arith.constant 0 : index
    %c0_56 = arith.constant 0 : index
    %60 = vector.load %arg9[%c2_54, %c0_55, %c0_56] : memref<20x18x8xf32, #tpu.memory_space<vmem>>, vector<16x16x8xf32>
    %61 = vector.shape_cast %60 : vector<16x16x8xf32> to vector<256x8xf32>
    %62 = arith.truncf %61 : vector<256x8xf32> to vector<256x8xbf16>
    %c2_57 = arith.constant 2 : index
    %c1_58 = arith.constant 1 : index
    %c0_59 = arith.constant 0 : index
    %63 = vector.load %arg9[%c2_57, %c1_58, %c0_59] : memref<20x18x8xf32, #tpu.memory_space<vmem>>, vector<16x16x8xf32>
    %64 = vector.shape_cast %63 : vector<16x16x8xf32> to vector<256x8xf32>
    %65 = arith.truncf %64 : vector<256x8xf32> to vector<256x8xbf16>
    %c2_60 = arith.constant 2 : index
    %c2_61 = arith.constant 2 : index
    %c0_62 = arith.constant 0 : index
    %66 = vector.load %arg9[%c2_60, %c2_61, %c0_62] : memref<20x18x8xf32, #tpu.memory_space<vmem>>, vector<16x16x8xf32>
    %67 = vector.shape_cast %66 : vector<16x16x8xf32> to vector<256x8xf32>
    %68 = arith.truncf %67 : vector<256x8xf32> to vector<256x8xbf16>
    %c4_63 = arith.constant 4 : index
    %c0_64 = arith.constant 0 : index
    %c0_65 = arith.constant 0 : index
    %69 = vector.load %arg9[%c4_63, %c0_64, %c0_65] : memref<20x18x8xf32, #tpu.memory_space<vmem>>, vector<16x16x8xf32>
    %70 = vector.shape_cast %69 : vector<16x16x8xf32> to vector<256x8xf32>
    %71 = arith.truncf %70 : vector<256x8xf32> to vector<256x8xbf16>
    %c4_66 = arith.constant 4 : index
    %c1_67 = arith.constant 1 : index
    %c0_68 = arith.constant 0 : index
    %72 = vector.load %arg9[%c4_66, %c1_67, %c0_68] : memref<20x18x8xf32, #tpu.memory_space<vmem>>, vector<16x16x8xf32>
    %73 = vector.shape_cast %72 : vector<16x16x8xf32> to vector<256x8xf32>
    %74 = arith.truncf %73 : vector<256x8xf32> to vector<256x8xbf16>
    %c4_69 = arith.constant 4 : index
    %c2_70 = arith.constant 2 : index
    %c0_71 = arith.constant 0 : index
    %75 = vector.load %arg9[%c4_69, %c2_70, %c0_71] : memref<20x18x8xf32, #tpu.memory_space<vmem>>, vector<16x16x8xf32>
    %76 = vector.shape_cast %75 : vector<16x16x8xf32> to vector<256x8xf32>
    %77 = arith.truncf %76 : vector<256x8xf32> to vector<256x8xbf16>
    %78 = tpu.concatenate %53, %56, %59, %62, %65, %68, %71, %74, %77 in 1 : vector<256x8xbf16>, vector<256x8xbf16>, vector<256x8xbf16>, vector<256x8xbf16>, vector<256x8xbf16>, vector<256x8xbf16>, vector<256x8xbf16>, vector<256x8xbf16>, vector<256x8xbf16> -> vector<256x72xbf16>
    %c0_72 = arith.constant 0 : index
    %c0_73 = arith.constant 0 : index
    %79 = vector.load %arg4[%c0_72, %c0_73] : memref<72x8xbf16, #tpu.memory_space<vmem>>, vector<72x8xbf16>
    %cst_74 = arith.constant dense<0.000000e+00> : vector<256x8xf32>
    %80 = tpu.matmul %78, %79, %cst_74 {dimension_numbers = #tpu.dot_dimension_numbers<[1], [0], [0], [1], [0, 0, 1, 1], [], []>} : vector<256x72xbf16>, vector<72x8xbf16>, vector<256x8xf32> -> vector<256x8xf32>
    %c0_75 = arith.constant 0 : index
    %c0_76 = arith.constant 0 : index
    %81 = vector.load %arg5[%c0_75, %c0_76] : memref<1x8xf32, #tpu.memory_space<vmem>>, vector<1x8xf32>
    %82 = vector.broadcast %81 : vector<1x8xf32> to vector<256x8xf32>
    %83 = arith.addf %80, %82 : vector<256x8xf32>
    %cst_77 = arith.constant 0.000000e+00 : f32
    %84 = vector.broadcast %cst_77 : f32 to vector<256x8xf32>
    %85 = arith.cmpf ogt, %83, %84 : vector<256x8xf32>
    %cst_78 = arith.constant 1.000000e-01 : f32
    %86 = vector.broadcast %cst_78 : f32 to vector<256x8xf32>
    %87 = arith.mulf %86, %83 : vector<256x8xf32>
    %88 = arith.select %85, %83, %87 : vector<256x8xi1>, vector<256x8xf32>
    %c0_79 = arith.constant 0 : index
    %c2_80 = arith.constant 2 : index
    %c1_81 = arith.constant 1 : index
    %c0_82 = arith.constant 0 : index
    %89 = vector.load %arg1[%c0_79, %c2_80, %c1_81, %c0_82] : memref<1x20x18x4xf32, #tpu.memory_space<vmem>>, vector<1x16x16x4xf32>
    %90 = vector.shape_cast %89 : vector<1x16x16x4xf32> to vector<16x16x4xf32>
    %91 = vector.shape_cast %90 : vector<16x16x4xf32> to vector<256x4xf32>
    %92 = arith.truncf %91 : vector<256x4xf32> to vector<256x4xbf16>
    %c0_83 = arith.constant 0 : index
    %c0_84 = arith.constant 0 : index
    %93 = vector.load %arg6[%c0_83, %c0_84] : memref<4x8xbf16, #tpu.memory_space<vmem>>, vector<4x8xbf16>
    %cst_85 = arith.constant dense<0.000000e+00> : vector<256x8xf32>
    %94 = tpu.matmul %92, %93, %cst_85 {dimension_numbers = #tpu.dot_dimension_numbers<[1], [0], [0], [1], [0, 0, 1, 1], [], []>} : vector<256x4xbf16>, vector<4x8xbf16>, vector<256x8xf32> -> vector<256x8xf32>
    %c0_86 = arith.constant 0 : index
    %c0_87 = arith.constant 0 : index
    %95 = vector.load %arg7[%c0_86, %c0_87] : memref<1x8xf32, #tpu.memory_space<vmem>>, vector<1x8xf32>
    %96 = vector.broadcast %95 : vector<1x8xf32> to vector<256x8xf32>
    %97 = arith.addf %94, %96 : vector<256x8xf32>
    %98 = arith.addf %88, %97 : vector<256x8xf32>
    %cst_88 = arith.constant 0.000000e+00 : f32
    %99 = vector.broadcast %cst_88 : f32 to vector<256x8xf32>
    %100 = arith.maximumf %98, %99 : vector<256x8xf32>
    %101 = tpu.transpose %100, [1, 0] : vector<256x8xf32> -> vector<8x256xf32>
    %c0_89 = arith.constant 0 : index
    %c0_90 = arith.constant 0 : index
    %c0_91 = arith.constant 0 : index
    %102 = vector.load %arg8[%c0_89, %c0_90, %c0_91] : memref<1x8x256xf32, #tpu.memory_space<vmem>>, vector<1x8x256xf32>
    %103 = vector.shape_cast %102 : vector<1x8x256xf32> to vector<8x256xf32>
    %104 = vector.shape_cast %101 : vector<8x256xf32> to vector<1x8x256xf32>
    tpu.vector_store %arg8[%c0_89, %c0_90, %c0_91], %104 {strides = array<i32>} : memref<1x8x256xf32, #tpu.memory_space<vmem>>, vector<1x8x256xf32>,
    return
  }
  func.func @transform_0(%arg0: i32) -> (i32, i32, i32, i32) {
    %c0_i32 = arith.constant 0 : i32
    %c0_i32_0 = arith.constant 0 : i32
    %c0_i32_1 = arith.constant 0 : i32
    %c0_i32_2 = arith.constant 0 : i32
    return %arg0, %c0_i32, %c0_i32_0, %c0_i32_1 : i32, i32, i32, i32
  }
  func.func @transform_1(%arg0: i32) -> (i32, i32) {
    %c0_i32 = arith.constant 0 : i32
    %c0_i32_0 = arith.constant 0 : i32
    %c0_i32_1 = arith.constant 0 : i32
    return %c0_i32, %c0_i32_0 : i32, i32
  }
  func.func @transform_2(%arg0: i32) -> (i32, i32) {
    %c0_i32 = arith.constant 0 : i32
    %c0_i32_0 = arith.constant 0 : i32
    %c0_i32_1 = arith.constant 0 : i32
    return %c0_i32, %c0_i32_0 : i32, i32
  }
  func.func @transform_3(%arg0: i32) -> (i32, i32) {
    %c0_i32 = arith.constant 0 : i32
    %c0_i32_0 = arith.constant 0 : i32
    %c0_i32_1 = arith.constant 0 : i32
    return %c0_i32, %c0_i32_0 : i32, i32
  }
  func.func @transform_4(%arg0: i32) -> (i32, i32) {
    %c0_i32 = arith.constant 0 : i32
    %c0_i32_0 = arith.constant 0 : i32
    %c0_i32_1 = arith.constant 0 : i32
    return %c0_i32, %c0_i32_0 : i32, i32
  }
  func.func @transform_5(%arg0: i32) -> (i32, i32) {
    %c0_i32 = arith.constant 0 : i32
    %c0_i32_0 = arith.constant 0 : i32
    %c0_i32_1 = arith.constant 0 : i32
    return %c0_i32, %c0_i32_0 : i32, i32
  }
  func.func @transform_6(%arg0: i32) -> (i32, i32) {
    %c0_i32 = arith.constant 0 : i32
    %c0_i32_0 = arith.constant 0 : i32
    %c0_i32_1 = arith.constant 0 : i32
    return %c0_i32, %c0_i32_0 : i32, i32
  }
  func.func @transform_7(%arg0: i32) -> (i32, i32, i32) {
    %c0_i32 = arith.constant 0 : i32
    %c0_i32_0 = arith.constant 0 : i32
    %c0_i32_1 = arith.constant 0 : i32
    return %arg0, %c0_i32, %c0_i32_0 : i32, i32, i32
  }
}

</mosaic_0001>

<llo_original>
// kernel: tpu_custom_call.1
$region0: #{tpu_custom_call.1}
  #allocation0 [shape = 'u32[]', space=smem, size = 0x4, offset = 0x4, fixed_abs, tag = 'smem constant byte address 0x4 - core index']
  #allocation1 [shape = 'u32[144,128]{1,0:T(1,128)}', space=vmem, size = 0x12000, scoped, tag = 'internal scratch']
  #allocation2 [shape = 'f32[20,18,8]{2,1,0:T(8,128)}', space=vmem, size = 0x3c000, scoped, tag = 'scratch operand']
  %s0 = inlined_call_operand.vmem [shape: f32[2,20,18,4], index: 0, kind: input, shape index: {}]
  %s1 = inlined_call_operand.vmem [shape: bf16[36,8], index: 1, kind: input, shape index: {}]
  %s2 = inlined_call_operand.vmem [shape: f32[1,8], index: 2, kind: input, shape index: {}]
  %s3 = inlined_call_operand.vmem [shape: bf16[72,8], index: 3, kind: input, shape index: {}]
  %s4 = inlined_call_operand.vmem [shape: f32[1,8], index: 4, kind: input, shape index: {}]
  %s5 = inlined_call_operand.vmem [shape: bf16[4,8], index: 5, kind: input, shape index: {}]
  %s6 = inlined_call_operand.vmem [shape: f32[1,8], index: 6, kind: input, shape index: {}]
  %s7 = inlined_call_operand.hbm [shape: f32[2,8,256], index: 7, kind: output, shape index: {}]
  %s8 = sld [smem:[#allocation0]]
  $region61: #{tpu_custom_call.1} parent=0
    _
  %s10 = ssub.s32 1, %s8
  %s11 = scalar_select 0, %s10, %s8
  $region1: #{tpu_custom_call.1} parent=0
    #allocation3 [shape = 'u8[16384]{0}', space=vmem, size = 0x4000, scoped, tag = 'output window, operand 0']
    #allocation4 [shape = 's32[2]{0}', space=sflag, size = 0x8, scoped, tag = 'scoped memory for tpu_custom_call.1']
    %12 = vsyncpa [#allocation4], 0
    %s13 = scalar_lea.sflag [#allocation4], 1
    %14 = vsyncpa %s13, 0
    loop: start=0, step=1, limit=4
    $region2: #{tpu_custom_call.1} parent=1 // loop_pre_header
      _
    $region3: #{tpu_custom_call.1} parent=1 // loop_header
      %s16 = sphi 0, %s20
      %p17 = scmp.ge.s32.totalorder %s16, 4
      %s26 = sphi 0, %s28
      %s29 = sphi 0, %s26
      %s30 = sphi 0, %s29
      %s46 = sphi 0, %s30
      %s50 = sphi 0, %s50
      %s52 = sphi 0, %s50
      %s53 = sphi 0, %s52
      %s67 = sphi 0, %s53
      %s71 = sphi 0, %s71
      %s73 = sphi 0, %s71
      %s74 = sphi 0, %s73
      %s88 = sphi 0, %s74
      %s92 = sphi 0, %s92
      %s94 = sphi 0, %s92
      %s95 = sphi 0, %s94
      %s109 = sphi 0, %s95
      %s113 = sphi 0, %s113
      %s115 = sphi 0, %s113
      %s116 = sphi 0, %s115
      %s130 = sphi 0, %s116
      %s134 = sphi 0, %s134
      %s136 = sphi 0, %s134
      %s137 = sphi 0, %s136
      %s151 = sphi 0, %s137
      %s155 = sphi 0, %s155
      %s157 = sphi 0, %s155
      %s158 = sphi 0, %s157
      %s172 = sphi 0, %s158
      %s178 = sphi 0, %s180
      %s181 = sphi 0, %s178
      %s182 = sphi 0, %s181
      %s198 = sphi 0, %s182
    $region4: #{tpu_custom_call.1} parent=1 // loop_header_branch
      %19 = sbr.rel (%p17) target = $region8
    $region5: #{tpu_custom_call.1} parent=1 // loop_body
      %s21 = ssub.s32 %s16, 1
      %s22 = ssub.s32 %s16, 2
      %s23 = sadd.s32 %s16, 1
      %s24 = ssub.s32 %s16, %s23
      %p25 = scmp.eq.s32.totalorder %s24, 0
      %s27 = sadd.s32 %s26, 1
      %s28 = scalar_select %p25, %s26, %s27
      %p31 = pneg %p25
      %p32 = scmp.eq.s32.totalorder %s16, 1
      %p33 = por %p31, %p32
      %p34 = scmp.ne.s32.totalorder %s26, %s29
      %p35 = scmp.eq.s32.totalorder %s16, 0
      %p36 = por %p34, %p35
      %p37 = scmp.ne.s32.totalorder %s26, %s29
      %p38 = scmp.eq.s32.totalorder %s21, 1
      %p39 = por %p37, %p38
      %p40 = scmp.ne.s32.totalorder %s29, %s30
      %p41 = scmp.eq.s32.totalorder %s21, 0
      %p42 = por %p40, %p41
      %p43 = scmp.ne.s32.totalorder %s29, %s30
      %p44 = scmp.eq.s32.totalorder %s22, 1
      %p45 = por %p43, %p44
      %p47 = scmp.ne.s32.totalorder %s30, %s46
      %p48 = scmp.eq.s32.totalorder %s22, 0
      %p49 = por %p47, %p48
      %s51 = sadd.s32 %s50, 1
      %p54 = scmp.eq.s32.totalorder %s16, 1
      %p55 = scmp.ne.s32.totalorder %s50, %s52
      %p56 = scmp.eq.s32.totalorder %s16, 0
      %p57 = por %p55, %p56
      %p58 = scmp.ne.s32.totalorder %s50, %s52
      %p59 = scmp.eq.s32.totalorder %s21, 1
      %p60 = por %p58, %p59
      %p61 = scmp.ne.s32.totalorder %s52, %s53
      %p62 = scmp.eq.s32.totalorder %s21, 0
      %p63 = por %p61, %p62
      %p64 = scmp.ne.s32.totalorder %s52, %s53
      %p65 = scmp.eq.s32.totalorder %s22, 1
      %p66 = por %p64, %p65
      %p68 = scmp.ne.s32.totalorder %s53, %s67
      %p69 = scmp.eq.s32.totalorder %s22, 0
      %p70 = por %p68, %p69
      %s72 = sadd.s32 %s71, 1
      %p75 = scmp.eq.s32.totalorder %s16, 1
      %p76 = scmp.ne.s32.totalorder %s71, %s73
      %p77 = scmp.eq.s32.totalorder %s16, 0
      %p78 = por %p76, %p77
      %p79 = scmp.ne.s32.totalorder %s71, %s73
      %p80 = scmp.eq.s32.totalorder %s21, 1
      %p81 = por %p79, %p80
      %p82 = scmp.ne.s32.totalorder %s73, %s74
      %p83 = scmp.eq.s32.totalorder %s21, 0
      %p84 = por %p82, %p83
      %p85 = scmp.ne.s32.totalorder %s73, %s74
      %p86 = scmp.eq.s32.totalorder %s22, 1
      %p87 = por %p85, %p86
      %p89 = scmp.ne.s32.totalorder %s74, %s88
      %p90 = scmp.eq.s32.totalorder %s22, 0
      %p91 = por %p89, %p90
      %s93 = sadd.s32 %s92, 1
      %p96 = scmp.eq.s32.totalorder %s16, 1
      %p97 = scmp.ne.s32.totalorder %s92, %s94
      %p98 = scmp.eq.s32.totalorder %s16, 0
      %p99 = por %p97, %p98
      %p100 = scmp.ne.s32.totalorder %s92, %s94
      %p101 = scmp.eq.s32.totalorder %s21, 1
      %p102 = por %p100, %p101
      %p103 = scmp.ne.s32.totalorder %s94, %s95
      %p104 = scmp.eq.s32.totalorder %s21, 0
      %p105 = por %p103, %p104
      %p106 = scmp.ne.s32.totalorder %s94, %s95
      %p107 = scmp.eq.s32.totalorder %s22, 1
      %p108 = por %p106, %p107
      %p110 = scmp.ne.s32.totalorder %s95, %s109
      %p111 = scmp.eq.s32.totalorder %s22, 0
      %p112 = por %p110, %p111
      %s114 = sadd.s32 %s113, 1
      %p117 = scmp.eq.s32.totalorder %s16, 1
      %p118 = scmp.ne.s32.totalorder %s113, %s115
      %p119 = scmp.eq.s32.totalorder %s16, 0
      %p120 = por %p118, %p119
      %p121 = scmp.ne.s32.totalorder %s113, %s115
      %p122 = scmp.eq.s32.totalorder %s21, 1
      %p123 = por %p121, %p122
      %p124 = scmp.ne.s32.totalorder %s115, %s116
      %p125 = scmp.eq.s32.totalorder %s21, 0
      %p126 = por %p124, %p125
      %p127 = scmp.ne.s32.totalorder %s115, %s116
      %p128 = scmp.eq.s32.totalorder %s22, 1
      %p129 = por %p127, %p128
      %p131 = scmp.ne.s32.totalorder %s116, %s130
      %p132 = scmp.eq.s32.totalorder %s22, 0
      %p133 = por %p131, %p132
      %s135 = sadd.s32 %s134, 1
      %p138 = scmp.eq.s32.totalorder %s16, 1
      %p139 = scmp.ne.s32.totalorder %s134, %s136
      %p140 = scmp.eq.s32.totalorder %s16, 0
      %p141 = por %p139, %p140
      %p142 = scmp.ne.s32.totalorder %s134, %s136
      %p143 = scmp.eq.s32.totalorder %s21, 1
      %p144 = por %p142, %p143
      %p145 = scmp.ne.s32.totalorder %s136, %s137
      %p146 = scmp.eq.s32.totalorder %s21, 0
      %p147 = por %p145, %p146
      %p148 = scmp.ne.s32.totalorder %s136, %s137
      %p149 = scmp.eq.s32.totalorder %s22, 1
      %p150 = por %p148, %p149
      %p152 = scmp.ne.s32.totalorder %s137, %s151
      %p153 = scmp.eq.s32.totalorder %s22, 0
      %p154 = por %p152, %p153
      %s156 = sadd.s32 %s155, 1
      %p159 = scmp.eq.s32.totalorder %s16, 1
      %p160 = scmp.ne.s32.totalorder %s155, %s157
      %p161 = scmp.eq.s32.totalorder %s16, 0
      %p162 = por %p160, %p161
      %p163 = scmp.ne.s32.totalorder %s155, %s157
      %p164 = scmp.eq.s32.totalorder %s21, 1
      %p165 = por %p163, %p164
      %p166 = scmp.ne.s32.totalorder %s157, %s158
      %p167 = scmp.eq.s32.totalorder %s21, 0
      %p168 = por %p166, %p167
      %p169 = scmp.ne.s32.totalorder %s157, %s158
      %p170 = scmp.eq.s32.totalorder %s22, 1
      %p171 = por %p169, %p170
      %p173 = scmp.ne.s32.totalorder %s158, %s172
      %p174 = scmp.eq.s32.totalorder %s22, 0
      %p175 = por %p173, %p174
      %s176 = ssub.s32 %s16, %s23
      %p177 = scmp.eq.s32.totalorder %s176, 0
      %s179 = sadd.s32 %s178, 1
      %s180 = scalar_select %p177, %s178, %s179
      %p183 = pneg %p177
      %p184 = scmp.eq.s32.totalorder %s16, 1
      %p185 = por %p183, %p184
      %p186 = scmp.ne.s32.totalorder %s178, %s181
      %p187 = scmp.eq.s32.totalorder %s16, 0
      %p188 = por %p186, %p187
      %p189 = scmp.ne.s32.totalorder %s178, %s181
      %p190 = scmp.eq.s32.totalorder %s21, 1
      %p191 = por %p189, %p190
      %p192 = scmp.ne.s32.totalorder %s181, %s182
      %p193 = scmp.eq.s32.totalorder %s21, 0
      %p194 = por %p192, %p193
      %p195 = scmp.ne.s32.totalorder %s181, %s182
      %p196 = scmp.eq.s32.totalorder %s22, 1
      %p197 = por %p195, %p196
      %p199 = scmp.ne.s32.totalorder %s182, %s198
      %p200 = scmp.eq.s32.totalorder %s22, 0
      %p201 = por %p199, %p200
      %p202 = scmp.le.s32.totalorder 1, %s16
      %p203 = scmp.lt.s32.totalorder %s16, 3
      %p204 = pnand %p202, %p203
      %p205 = pneg %p204
      // Predicated region
      $region9: #{tpu_custom_call.1} parent=5 // pred_check
        _
      $region10: #{tpu_custom_call.1} parent=5 // pred_check_branch
        %207 = sbr.rel (%p204) target = $region12
      $region11: #{tpu_custom_call.1} parent=5 // pred_region
        %s208 = ssub.s32 %s16, 1
        // Predicated region
        $region13: #{tpu_custom_call.1} parent=11 // pred_check
          %p209 = pneg %p63
        $region14: #{tpu_custom_call.1} parent=11 // pred_check_branch
          %211 = sbr.rel (%p209) target = $region16
        $region15: #{tpu_custom_call.1} parent=11 // pred_region
          _
        $region16: #{tpu_custom_call.1} parent=11 // pred_fallthru
          _
        // Predicated region
        $region17: #{tpu_custom_call.1} parent=11 // pred_check
          %p212 = pneg %p84
        $region18: #{tpu_custom_call.1} parent=11 // pred_check_branch
          %214 = sbr.rel (%p212) target = $region20
        $region19: #{tpu_custom_call.1} parent=11 // pred_region
          _
        $region20: #{tpu_custom_call.1} parent=11 // pred_fallthru
          _
        // Predicated region
        $region21: #{tpu_custom_call.1} parent=11 // pred_check
          %p215 = pneg %p105
        $region22: #{tpu_custom_call.1} parent=11 // pred_check_branch
          %217 = sbr.rel (%p215) target = $region24
        $region23: #{tpu_custom_call.1} parent=11 // pred_region
          _
        $region24: #{tpu_custom_call.1} parent=11 // pred_fallthru
          _
        // Predicated region
        $region25: #{tpu_custom_call.1} parent=11 // pred_check
          %p218 = pneg %p126
        $region26: #{tpu_custom_call.1} parent=11 // pred_check_branch
          %220 = sbr.rel (%p218) target = $region28
        $region27: #{tpu_custom_call.1} parent=11 // pred_region
          _
        $region28: #{tpu_custom_call.1} parent=11 // pred_fallthru
          _
        // Predicated region
        $region29: #{tpu_custom_call.1} parent=11 // pred_check
          %p221 = pneg %p147
        $region30: #{tpu_custom_call.1} parent=11 // pred_check_branch
          %223 = sbr.rel (%p221) target = $region32
        $region31: #{tpu_custom_call.1} parent=11 // pred_region
          _
        $region32: #{tpu_custom_call.1} parent=11 // pred_fallthru
          _
        // Predicated region
        $region33: #{tpu_custom_call.1} parent=11 // pred_check
          %p224 = pneg %p168
        $region34: #{tpu_custom_call.1} parent=11 // pred_check_branch
          %226 = sbr.rel (%p224) target = $region36
        $region35: #{tpu_custom_call.1} parent=11 // pred_region
          _
        $region36: #{tpu_custom_call.1} parent=11 // pred_fallthru
          _
      $region12: #{tpu_custom_call.1} parent=5 // pred_fallthru
        _
      %p227 = scmp.lt.s32.totalorder %s16, 2
      // Predicated region
      $region37: #{tpu_custom_call.1} parent=5 // pred_check
        %p228 = pneg %p227
      $region38: #{tpu_custom_call.1} parent=5 // pred_check_branch
        %230 = sbr.rel (%p228) target = $region40
      $region39: #{tpu_custom_call.1} parent=5 // pred_region
        // Predicated region
        $region41: #{tpu_custom_call.1} parent=39 // pred_check
          %p231 = pneg %p36
        $region42: #{tpu_custom_call.1} parent=39 // pred_check_branch
          %233 = sbr.rel (%p231) target = $region44
        $region43: #{tpu_custom_call.1} parent=39 // pred_region
          %p234 = scmp.lt.s32.totalorder %s16, 1
          %s235 = scalar_select %p234, %s16, 1
          %s236 = smul.addr %s235, 60
          %s237 = smul.addr %s236, 8
          %s238 = scalar_lea.vmem %s0, %s237
        $region44: #{tpu_custom_call.1} parent=39 // pred_fallthru
          _
      $region40: #{tpu_custom_call.1} parent=5 // pred_fallthru
        _
      %p239 = scmp.le.s32.totalorder 1, %s16
      %p240 = scmp.lt.s32.totalorder %s16, 3
      %p241 = pnand %p239, %p240
      %p242 = pneg %p241
      // Predicated region
      $region45: #{tpu_custom_call.1} parent=5 // pred_check
        _
      $region46: #{tpu_custom_call.1} parent=5 // pred_check_branch
        %244 = sbr.rel (%p241) target = $region48
      $region47: #{tpu_custom_call.1} parent=5 // pred_region
        %s245 = ssub.s32 %s16, 1
        %p246 = scmp.lt.s32.totalorder %s21, 1
        %s247 = scalar_select %p246, %s21, 1
        %s248 = smul.addr %s247, 60
        %s249 = smul.addr %s248, 8
        %s250 = scalar_lea.vmem %s0, %s249
        %p251 = pneg %p42
        %p252 = pneg %p39
        %p253 = pneg %p63
        %p254 = pneg %p60
        %p255 = pneg %p84
        %p256 = pneg %p81
        %p257 = pneg %p105
        %p258 = pneg %p102
        %p259 = pneg %p126
        %p260 = pneg %p123
        %p261 = pneg %p147
        %p262 = pneg %p144
        %p263 = pneg %p168
        %p264 = pneg %p165
        %p265 = pneg %p194
        %p266 = pneg %p191
        %s267 = sand.u32 %s181, 1
        %s268 = scalar_lea.sflag [#allocation4], %s267
        %s269 = sand.u32 %s181, 1
        %s270 = smul.addr %s269, 16
        %s271 = scalar_lea.vmem [#allocation3], %s270
        %p272 = scmp.lt.s32.totalorder %s21, 1
        %s273 = scalar_select %p272, %s21, 1
        %s274 = smul.addr %s273, 60
        %s275 = smul.addr %s274, 8
        %s276 = scalar_lea.vmem %s0, %s275
        %v278 = vld [vmem:[%s276] sm:$0xff]
        %v279 = vld [vmem:[%s276 + $0x8] sm:$0xff]
        %v280 = vld [vmem:[%s276 + $0x18] sm:$0xff]
        %v281 = vld [vmem:[%s276 + $0x20] sm:$0xff]
        %v282 = vld [vmem:[%s276 + $0x30] sm:$0xff]
        %v283 = vld [vmem:[%s276 + $0x38] sm:$0xff]
        %v284 = vld [vmem:[%s276 + $0x48] sm:$0xff]
        %v285 = vld [vmem:[%s276 + $0x50] sm:$0xff]
        %v286 = vld [vmem:[%s276 + $0x60] sm:$0xff]
        %v287 = vld [vmem:[%s276 + $0x68] sm:$0xff]
        %v288 = vld [vmem:[%s276 + $0x78] sm:$0xff]
        %v289 = vld [vmem:[%s276 + $0x80] sm:$0xff]
        %v290 = vld [vmem:[%s276 + $0x90] sm:$0xff]
        %v291 = vld [vmem:[%s276 + $0x98] sm:$0xff]
        %v292 = vld [vmem:[%s276 + $0xa8] sm:$0xff]
        %v293 = vld [vmem:[%s276 + $0xb0] sm:$0xff]
        %v294 = vld [vmem:[%s276 + $0xc0] sm:$0xff]
        %v295 = vld [vmem:[%s276 + $0xc8] sm:$0xff]
        %v296 = vld [vmem:[%s276 + $0xd8] sm:$0xff]
        %v297 = vld [vmem:[%s276 + $0xe0] sm:$0xff]
        %v298 = vld [vmem:[%s276 + $0xf0] sm:$0xff]
        %v299 = vld [vmem:[%s276 + $0xf8] sm:$0xff]
        %v300 = vld [vmem:[%s276 + $0x108] sm:$0xff]
        %v301 = vld [vmem:[%s276 + $0x110] sm:$0xff]
        %v302 = vld [vmem:[%s276 + $0x120] sm:$0xff]
        %v303 = vld [vmem:[%s276 + $0x128] sm:$0xff]
        %v304 = vld [vmem:[%s276 + $0x138] sm:$0xff]
        %v305 = vld [vmem:[%s276 + $0x140] sm:$0xff]
        %v306 = vld [vmem:[%s276 + $0x150] sm:$0xff]
        %v307 = vld [vmem:[%s276 + $0x158] sm:$0xff]
        %v308 = vld [vmem:[%s276 + $0x168] sm:$0xff]
        %v309 = vld [vmem:[%s276 + $0x170] sm:$0xff]
        %v310 = vpack.c.bf16 %v279, %v278
        %v311 = vpack.c.bf16 %v281, %v280
        %v312 = vpack.c.bf16 %v283, %v282
        %v313 = vpack.c.bf16 %v285, %v284
        %v314 = vpack.c.bf16 %v287, %v286
        %v315 = vpack.c.bf16 %v289, %v288
        %v316 = vpack.c.bf16 %v291, %v290
        %v317 = vpack.c.bf16 %v293, %v292
        %v318 = vpack.c.bf16 %v295, %v294
        %v319 = vpack.c.bf16 %v297, %v296
        %v320 = vpack.c.bf16 %v299, %v298
        %v321 = vpack.c.bf16 %v301, %v300
        %v322 = vpack.c.bf16 %v303, %v302
        %v323 = vpack.c.bf16 %v305, %v304
        %v324 = vpack.c.bf16 %v307, %v306
        %v325 = vpack.c.bf16 %v309, %v308
        %v326 = vld [vmem:[%s276 + $0x1] sm:$0xff]
        %v327 = vld [vmem:[%s276 + $0x9] sm:$0xff]
        %v328 = vld [vmem:[%s276 + $0x19] sm:$0xff]
        %v329 = vld [vmem:[%s276 + $0x21] sm:$0xff]
        %v330 = vld [vmem:[%s276 + $0x31] sm:$0xff]
        %v331 = vld [vmem:[%s276 + $0x39] sm:$0xff]
        %v332 = vld [vmem:[%s276 + $0x49] sm:$0xff]
        %v333 = vld [vmem:[%s276 + $0x51] sm:$0xff]
        %v334 = vld [vmem:[%s276 + $0x61] sm:$0xff]
        %v335 = vld [vmem:[%s276 + $0x69] sm:$0xff]
        %v336 = vld [vmem:[%s276 + $0x79] sm:$0xff]
        %v337 = vld [vmem:[%s276 + $0x81] sm:$0xff]
        %v338 = vld [vmem:[%s276 + $0x91] sm:$0xff]
        %v339 = vld [vmem:[%s276 + $0x99] sm:$0xff]
        %v340 = vld [vmem:[%s276 + $0xa9] sm:$0xff]
        %v341 = vld [vmem:[%s276 + $0xb1] sm:$0xff]
        %v342 = vld [vmem:[%s276 + $0xc1] sm:$0xff]
        %v343 = vld [vmem:[%s276 + $0xc9] sm:$0xff]
        %v344 = vld [vmem:[%s276 + $0xd9] sm:$0xff]
        %v345 = vld [vmem:[%s276 + $0xe1] sm:$0xff]
        %v346 = vld [vmem:[%s276 + $0xf1] sm:$0xff]
        %v347 = vld [vmem:[%s276 + $0xf9] sm:$0xff]
        %v348 = vld [vmem:[%s276 + $0x109] sm:$0xff]
        %v349 = vld [vmem:[%s276 + $0x111] sm:$0xff]
        %v350 = vld [vmem:[%s276 + $0x121] sm:$0xff]
        %v351 = vld [vmem:[%s276 + $0x129] sm:$0xff]
        %v352 = vld [vmem:[%s276 + $0x139] sm:$0xff]
        %v353 = vld [vmem:[%s276 + $0x141] sm:$0xff]
        %v354 = vld [vmem:[%s276 + $0x151] sm:$0xff]
        %v355 = vld [vmem:[%s276 + $0x159] sm:$0xff]
        %v356 = vld [vmem:[%s276 + $0x169] sm:$0xff]
        %v357 = vld [vmem:[%s276 + $0x171] sm:$0xff]
        %v358 = vpack.c.bf16 %v327, %v326
        %v359 = vpack.c.bf16 %v329, %v328
        %v360 = vpack.c.bf16 %v331, %v330
        %v361 = vpack.c.bf16 %v333, %v332
        %v362 = vpack.c.bf16 %v335, %v334
        %v363 = vpack.c.bf16 %v337, %v336
        %v364 = vpack.c.bf16 %v339, %v338
        %v365 = vpack.c.bf16 %v341, %v340
        %v366 = vpack.c.bf16 %v343, %v342
        %v367 = vpack.c.bf16 %v345, %v344
        %v368 = vpack.c.bf16 %v347, %v346
        %v369 = vpack.c.bf16 %v349, %v348
        %v370 = vpack.c.bf16 %v351, %v350
        %v371 = vpack.c.bf16 %v353, %v352
        %v372 = vpack.c.bf16 %v355, %v354
        %v373 = vpack.c.bf16 %v357, %v356
        %v374 = vld [vmem:[%s276 + $0x2] sm:$0xff]
        %v375 = vld [vmem:[%s276 + $0xa] sm:$0xff]
        %v376 = vld [vmem:[%s276 + $0x1a] sm:$0xff]
        %v377 = vld [vmem:[%s276 + $0x22] sm:$0xff]
        %v378 = vld [vmem:[%s276 + $0x32] sm:$0xff]
        %v379 = vld [vmem:[%s276 + $0x3a] sm:$0xff]
        %v380 = vld [vmem:[%s276 + $0x4a] sm:$0xff]
        %v381 = vld [vmem:[%s276 + $0x52] sm:$0xff]
        %v382 = vld [vmem:[%s276 + $0x62] sm:$0xff]
        %v383 = vld [vmem:[%s276 + $0x6a] sm:$0xff]
        %v384 = vld [vmem:[%s276 + $0x7a] sm:$0xff]
        %v385 = vld [vmem:[%s276 + $0x82] sm:$0xff]
        %v386 = vld [vmem:[%s276 + $0x92] sm:$0xff]
        %v387 = vld [vmem:[%s276 + $0x9a] sm:$0xff]
        %v388 = vld [vmem:[%s276 + $0xaa] sm:$0xff]
        %v389 = vld [vmem:[%s276 + $0xb2] sm:$0xff]
        %v390 = vld [vmem:[%s276 + $0xc2] sm:$0xff]
        %v391 = vld [vmem:[%s276 + $0xca] sm:$0xff]
        %v392 = vld [vmem:[%s276 + $0xda] sm:$0xff]
        %v393 = vld [vmem:[%s276 + $0xe2] sm:$0xff]
        %v394 = vld [vmem:[%s276 + $0xf2] sm:$0xff]
        %v395 = vld [vmem:[%s276 + $0xfa] sm:$0xff]
        %v396 = vld [vmem:[%s276 + $0x10a] sm:$0xff]
        %v397 = vld [vmem:[%s276 + $0x112] sm:$0xff]
        %v398 = vld [vmem:[%s276 + $0x122] sm:$0xff]
        %v399 = vld [vmem:[%s276 + $0x12a] sm:$0xff]
        %v400 = vld [vmem:[%s276 + $0x13a] sm:$0xff]
        %v401 = vld [vmem:[%s276 + $0x142] sm:$0xff]
        %v402 = vld [vmem:[%s276 + $0x152] sm:$0xff]
        %v403 = vld [vmem:[%s276 + $0x15a] sm:$0xff]
        %v404 = vld [vmem:[%s276 + $0x16a] sm:$0xff]
        %v405 = vld [vmem:[%s276 + $0x172] sm:$0xff]
        %v406 = vpack.c.bf16 %v375, %v374
        %v407 = vpack.c.bf16 %v377, %v376
        %v408 = vpack.c.bf16 %v379, %v378
        %v409 = vpack.c.bf16 %v381, %v380
        %v410 = vpack.c.bf16 %v383, %v382
        %v411 = vpack.c.bf16 %v385, %v384
        %v412 = vpack.c.bf16 %v387, %v386
        %v413 = vpack.c.bf16 %v389, %v388
        %v414 = vpack.c.bf16 %v391, %v390
        %v415 = vpack.c.bf16 %v393, %v392
        %v416 = vpack.c.bf16 %v395, %v394
        %v417 = vpack.c.bf16 %v397, %v396
        %v418 = vpack.c.bf16 %v399, %v398
        %v419 = vpack.c.bf16 %v401, %v400
        %v420 = vpack.c.bf16 %v403, %v402
        %v421 = vpack.c.bf16 %v405, %v404
        %s422 = scalar_lea.vmem %s276, 48
        %v423 = vld [vmem:[%s422] sm:$0xff]
        %v424 = vld [vmem:[%s422 + $0x8] sm:$0xff]
        %v425 = vld [vmem:[%s422 + $0x18] sm:$0xff]
        %v426 = vld [vmem:[%s422 + $0x20] sm:$0xff]
        %v427 = vld [vmem:[%s422 + $0x30] sm:$0xff]
        %v428 = vld [vmem:[%s422 + $0x38] sm:$0xff]
        %v429 = vld [vmem:[%s422 + $0x48] sm:$0xff]
        %v430 = vld [vmem:[%s422 + $0x50] sm:$0xff]
        %v431 = vld [vmem:[%s422 + $0x60] sm:$0xff]
        %v432 = vld [vmem:[%s422 + $0x68] sm:$0xff]
        %v433 = vld [vmem:[%s422 + $0x78] sm:$0xff]
        %v434 = vld [vmem:[%s422 + $0x80] sm:$0xff]
        %v435 = vld [vmem:[%s422 + $0x90] sm:$0xff]
        %v436 = vld [vmem:[%s422 + $0x98] sm:$0xff]
        %v437 = vld [vmem:[%s422 + $0xa8] sm:$0xff]
        %v438 = vld [vmem:[%s422 + $0xb0] sm:$0xff]
        %v439 = vld [vmem:[%s422 + $0xc0] sm:$0xff]
        %v440 = vld [vmem:[%s422 + $0xc8] sm:$0xff]
        %v441 = vld [vmem:[%s422 + $0xd8] sm:$0xff]
        %v442 = vld [vmem:[%s422 + $0xe0] sm:$0xff]
        %v443 = vld [vmem:[%s422 + $0xf0] sm:$0xff]
        %v444 = vld [vmem:[%s422 + $0xf8] sm:$0xff]
        %v445 = vld [vmem:[%s422 + $0x108] sm:$0xff]
        %v446 = vld [vmem:[%s422 + $0x110] sm:$0xff]
        %v447 = vld [vmem:[%s422 + $0x120] sm:$0xff]
        %v448 = vld [vmem:[%s422 + $0x128] sm:$0xff]
        %v449 = vld [vmem:[%s422 + $0x138] sm:$0xff]
        %v450 = vld [vmem:[%s422 + $0x140] sm:$0xff]
        %v451 = vld [vmem:[%s422 + $0x150] sm:$0xff]
        %v452 = vld [vmem:[%s422 + $0x158] sm:$0xff]
        %v453 = vld [vmem:[%s422 + $0x168] sm:$0xff]
        %v454 = vld [vmem:[%s422 + $0x170] sm:$0xff]
        %v455 = vpack.c.bf16 %v424, %v423
        %v456 = vpack.c.bf16 %v426, %v425
        %v457 = vpack.c.bf16 %v428, %v427
        %v458 = vpack.c.bf16 %v430, %v429
        %v459 = vpack.c.bf16 %v432, %v431
        %v460 = vpack.c.bf16 %v434, %v433
        %v461 = vpack.c.bf16 %v436, %v435
        %v462 = vpack.c.bf16 %v438, %v437
        %v463 = vpack.c.bf16 %v440, %v439
        %v464 = vpack.c.bf16 %v442, %v441
        %v465 = vpack.c.bf16 %v444, %v443
        %v466 = vpack.c.bf16 %v446, %v445
        %v467 = vpack.c.bf16 %v448, %v447
        %v468 = vpack.c.bf16 %v450, %v449
        %v469 = vpack.c.bf16 %v452, %v451
        %v470 = vpack.c.bf16 %v454, %v453
        %v471 = vld [vmem:[%s422 + $0x1] sm:$0xff]
        %v472 = vld [vmem:[%s422 + $0x9] sm:$0xff]
        %v473 = vld [vmem:[%s422 + $0x19] sm:$0xff]
        %v474 = vld [vmem:[%s422 + $0x21] sm:$0xff]
        %v475 = vld [vmem:[%s422 + $0x31] sm:$0xff]
        %v476 = vld [vmem:[%s422 + $0x39] sm:$0xff]
        %v477 = vld [vmem:[%s422 + $0x49] sm:$0xff]
        %v478 = vld [vmem:[%s422 + $0x51] sm:$0xff]
        %v479 = vld [vmem:[%s422 + $0x61] sm:$0xff]
        %v480 = vld [vmem:[%s422 + $0x69] sm:$0xff]
        %v481 = vld [vmem:[%s422 + $0x79] sm:$0xff]
        %v482 = vld [vmem:[%s422 + $0x81] sm:$0xff]
        %v483 = vld [vmem:[%s422 + $0x91] sm:$0xff]
        %v484 = vld [vmem:[%s422 + $0x99] sm:$0xff]
        %v485 = vld [vmem:[%s422 + $0xa9] sm:$0xff]
        %v486 = vld [vmem:[%s422 + $0xb1] sm:$0xff]
        %v487 = vld [vmem:[%s422 + $0xc1] sm:$0xff]
        %v488 = vld [vmem:[%s422 + $0xc9] sm:$0xff]
        %v489 = vld [vmem:[%s422 + $0xd9] sm:$0xff]
        %v490 = vld [vmem:[%s422 + $0xe1] sm:$0xff]
        %v491 = vld [vmem:[%s422 + $0xf1] sm:$0xff]
        %v492 = vld [vmem:[%s422 + $0xf9] sm:$0xff]
        %v493 = vld [vmem:[%s422 + $0x109] sm:$0xff]
        %v494 = vld [vmem:[%s422 + $0x111] sm:$0xff]
        %v495 = vld [vmem:[%s422 + $0x121] sm:$0xff]
        %v496 = vld [vmem:[%s422 + $0x129] sm:$0xff]
        %v497 = vld [vmem:[%s422 + $0x139] sm:$0xff]
        %v498 = vld [vmem:[%s422 + $0x141] sm:$0xff]
        %v499 = vld [vmem:[%s422 + $0x151] sm:$0xff]
        %v500 = vld [vmem:[%s422 + $0x159] sm:$0xff]
        %v501 = vld [vmem:[%s422 + $0x169] sm:$0xff]
        %v502 = vld [vmem:[%s422 + $0x171] sm:$0xff]
        %v503 = vpack.c.bf16 %v472, %v471
        %v504 = vpack.c.bf16 %v474, %v473
        %v505 = vpack.c.bf16 %v476, %v475
        %v506 = vpack.c.bf16 %v478, %v477
        %v507 = vpack.c.bf16 %v480, %v479
        %v508 = vpack.c.bf16 %v482, %v481
        %v509 = vpack.c.bf16 %v484, %v483
        %v510 = vpack.c.bf16 %v486, %v485
        %v511 = vpack.c.bf16 %v488, %v487
        %v512 = vpack.c.bf16 %v490, %v489
        %v513 = vpack.c.bf16 %v492, %v491
        %v514 = vpack.c.bf16 %v494, %v493
        %v515 = vpack.c.bf16 %v496, %v495
        %v516 = vpack.c.bf16 %v498, %v497
        %v517 = vpack.c.bf16 %v500, %v499
        %v518 = vpack.c.bf16 %v502, %v501
        %v519 = vld [vmem:[%s422 + $0x2] sm:$0xff]
        %v520 = vld [vmem:[%s422 + $0xa] sm:$0xff]
        %v521 = vld [vmem:[%s422 + $0x1a] sm:$0xff]
        %v522 = vld [vmem:[%s422 + $0x22] sm:$0xff]
        %v523 = vld [vmem:[%s422 + $0x32] sm:$0xff]
        %v524 = vld [vmem:[%s422 + $0x3a] sm:$0xff]
        %v525 = vld [vmem:[%s422 + $0x4a] sm:$0xff]
        %v526 = vld [vmem:[%s422 + $0x52] sm:$0xff]
        %v527 = vld [vmem:[%s422 + $0x62] sm:$0xff]
        %v528 = vld [vmem:[%s422 + $0x6a] sm:$0xff]
        %v529 = vld [vmem:[%s422 + $0x7a] sm:$0xff]
        %v530 = vld [vmem:[%s422 + $0x82] sm:$0xff]
        %v531 = vld [vmem:[%s422 + $0x92] sm:$0xff]
        %v532 = vld [vmem:[%s422 + $0x9a] sm:$0xff]
        %v533 = vld [vmem:[%s422 + $0xaa] sm:$0xff]
        %v534 = vld [vmem:[%s422 + $0xb2] sm:$0xff]
        %v535 = vld [vmem:[%s422 + $0xc2] sm:$0xff]
        %v536 = vld [vmem:[%s422 + $0xca] sm:$0xff]
        %v537 = vld [vmem:[%s422 + $0xda] sm:$0xff]
        %v538 = vld [vmem:[%s422 + $0xe2] sm:$0xff]
        %v539 = vld [vmem:[%s422 + $0xf2] sm:$0xff]
        %v540 = vld [vmem:[%s422 + $0xfa] sm:$0xff]
        %v541 = vld [vmem:[%s422 + $0x10a] sm:$0xff]
        %v542 = vld [vmem:[%s422 + $0x112] sm:$0xff]
        %v543 = vld [vmem:[%s422 + $0x122] sm:$0xff]
        %v544 = vld [vmem:[%s422 + $0x12a] sm:$0xff]
        %v545 = vld [vmem:[%s422 + $0x13a] sm:$0xff]
        %v546 = vld [vmem:[%s422 + $0x142] sm:$0xff]
        %v547 = vld [vmem:[%s422 + $0x152] sm:$0xff]
        %v548 = vld [vmem:[%s422 + $0x15a] sm:$0xff]
        %v549 = vld [vmem:[%s422 + $0x16a] sm:$0xff]
        %v550 = vld [vmem:[%s422 + $0x172] sm:$0xff]
        %v551 = vpack.c.bf16 %v520, %v519
        %v552 = vpack.c.bf16 %v522, %v521
        %v553 = vpack.c.bf16 %v524, %v523
        %v554 = vpack.c.bf16 %v526, %v525
        %v555 = vpack.c.bf16 %v528, %v527
        %v556 = vpack.c.bf16 %v530, %v529
        %v557 = vpack.c.bf16 %v532, %v531
        %v558 = vpack.c.bf16 %v534, %v533
        %v559 = vpack.c.bf16 %v536, %v535
        %v560 = vpack.c.bf16 %v538, %v537
        %v561 = vpack.c.bf16 %v540, %v539
        %v562 = vpack.c.bf16 %v542, %v541
        %v563 = vpack.c.bf16 %v544, %v543
        %v564 = vpack.c.bf16 %v546, %v545
        %v565 = vpack.c.bf16 %v548, %v547
        %v566 = vpack.c.bf16 %v550, %v549
        %s567 = scalar_lea.vmem %s276, 96
        %v568 = vld [vmem:[%s567] sm:$0xff]
        %v569 = vld [vmem:[%s567 + $0x8] sm:$0xff]
        %v570 = vld [vmem:[%s567 + $0x18] sm:$0xff]
        %v571 = vld [vmem:[%s567 + $0x20] sm:$0xff]
        %v572 = vld [vmem:[%s567 + $0x30] sm:$0xff]
        %v573 = vld [vmem:[%s567 + $0x38] sm:$0xff]
        %v574 = vld [vmem:[%s567 + $0x48] sm:$0xff]
        %v575 = vld [vmem:[%s567 + $0x50] sm:$0xff]
        %v576 = vld [vmem:[%s567 + $0x60] sm:$0xff]
        %v577 = vld [vmem:[%s567 + $0x68] sm:$0xff]
        %v578 = vld [vmem:[%s567 + $0x78] sm:$0xff]
        %v579 = vld [vmem:[%s567 + $0x80] sm:$0xff]
        %v580 = vld [vmem:[%s567 + $0x90] sm:$0xff]
        %v581 = vld [vmem:[%s567 + $0x98] sm:$0xff]
        %v582 = vld [vmem:[%s567 + $0xa8] sm:$0xff]
        %v583 = vld [vmem:[%s567 + $0xb0] sm:$0xff]
        %v584 = vld [vmem:[%s567 + $0xc0] sm:$0xff]
        %v585 = vld [vmem:[%s567 + $0xc8] sm:$0xff]
        %v586 = vld [vmem:[%s567 + $0xd8] sm:$0xff]
        %v587 = vld [vmem:[%s567 + $0xe0] sm:$0xff]
        %v588 = vld [vmem:[%s567 + $0xf0] sm:$0xff]
        %v589 = vld [vmem:[%s567 + $0xf8] sm:$0xff]
        %v590 = vld [vmem:[%s567 + $0x108] sm:$0xff]
        %v591 = vld [vmem:[%s567 + $0x110] sm:$0xff]
        %v592 = vld [vmem:[%s567 + $0x120] sm:$0xff]
        %v593 = vld [vmem:[%s567 + $0x128] sm:$0xff]
        %v594 = vld [vmem:[%s567 + $0x138] sm:$0xff]
        %v595 = vld [vmem:[%s567 + $0x140] sm:$0xff]
        %v596 = vld [vmem:[%s567 + $0x150] sm:$0xff]
        %v597 = vld [vmem:[%s567 + $0x158] sm:$0xff]
        %v598 = vld [vmem:[%s567 + $0x168] sm:$0xff]
        %v599 = vld [vmem:[%s567 + $0x170] sm:$0xff]
        %v600 = vpack.c.bf16 %v569, %v568
        %v601 = vpack.c.bf16 %v571, %v570
        %v602 = vpack.c.bf16 %v573, %v572
        %v603 = vpack.c.bf16 %v575, %v574
        %v604 = vpack.c.bf16 %v577, %v576
        %v605 = vpack.c.bf16 %v579, %v578
        %v606 = vpack.c.bf16 %v581, %v580
        %v607 = vpack.c.bf16 %v583, %v582
        %v608 = vpack.c.bf16 %v585, %v584
        %v609 = vpack.c.bf16 %v587, %v586
        %v610 = vpack.c.bf16 %v589, %v588
        %v611 = vpack.c.bf16 %v591, %v590
        %v612 = vpack.c.bf16 %v593, %v592
        %v613 = vpack.c.bf16 %v595, %v594
        %v614 = vpack.c.bf16 %v597, %v596
        %v615 = vpack.c.bf16 %v599, %v598
        %v616 = vld [vmem:[%s567 + $0x1] sm:$0xff]
        %v617 = vld [vmem:[%s567 + $0x9] sm:$0xff]
        %v618 = vld [vmem:[%s567 + $0x19] sm:$0xff]
        %v619 = vld [vmem:[%s567 + $0x21] sm:$0xff]
        %v620 = vld [vmem:[%s567 + $0x31] sm:$0xff]
        %v621 = vld [vmem:[%s567 + $0x39] sm:$0xff]
        %v622 = vld [vmem:[%s567 + $0x49] sm:$0xff]
        %v623 = vld [vmem:[%s567 + $0x51] sm:$0xff]
        %v624 = vld [vmem:[%s567 + $0x61] sm:$0xff]
        %v625 = vld [vmem:[%s567 + $0x69] sm:$0xff]
        %v626 = vld [vmem:[%s567 + $0x79] sm:$0xff]
        %v627 = vld [vmem:[%s567 + $0x81] sm:$0xff]
        %v628 = vld [vmem:[%s567 + $0x91] sm:$0xff]
        %v629 = vld [vmem:[%s567 + $0x99] sm:$0xff]
        %v630 = vld [vmem:[%s567 + $0xa9] sm:$0xff]
        %v631 = vld [vmem:[%s567 + $0xb1] sm:$0xff]
        %v632 = vld [vmem:[%s567 + $0xc1] sm:$0xff]
        %v633 = vld [vmem:[%s567 + $0xc9] sm:$0xff]
        %v634 = vld [vmem:[%s567 + $0xd9] sm:$0xff]
        %v635 = vld [vmem:[%s567 + $0xe1] sm:$0xff]
        %v636 = vld [vmem:[%s567 + $0xf1] sm:$0xff]
        %v637 = vld [vmem:[%s567 + $0xf9] sm:$0xff]
        %v638 = vld [vmem:[%s567 + $0x109] sm:$0xff]
        %v639 = vld [vmem:[%s567 + $0x111] sm:$0xff]
        %v640 = vld [vmem:[%s567 + $0x121] sm:$0xff]
        %v641 = vld [vmem:[%s567 + $0x129] sm:$0xff]
        %v642 = vld [vmem:[%s567 + $0x139] sm:$0xff]
        %v643 = vld [vmem:[%s567 + $0x141] sm:$0xff]
        %v644 = vld [vmem:[%s567 + $0x151] sm:$0xff]
        %v645 = vld [vmem:[%s567 + $0x159] sm:$0xff]
        %v646 = vld [vmem:[%s567 + $0x169] sm:$0xff]
        %v647 = vld [vmem:[%s567 + $0x171] sm:$0xff]
        %v648 = vpack.c.bf16 %v617, %v616
        %v649 = vpack.c.bf16 %v619, %v618
        %v650 = vpack.c.bf16 %v621, %v620
        %v651 = vpack.c.bf16 %v623, %v622
        %v652 = vpack.c.bf16 %v625, %v624
        %v653 = vpack.c.bf16 %v627, %v626
        %v654 = vpack.c.bf16 %v629, %v628
        %v655 = vpack.c.bf16 %v631, %v630
        %v656 = vpack.c.bf16 %v633, %v632
        %v657 = vpack.c.bf16 %v635, %v634
        %v658 = vpack.c.bf16 %v637, %v636
        %v659 = vpack.c.bf16 %v639, %v638
        %v660 = vpack.c.bf16 %v641, %v640
        %v661 = vpack.c.bf16 %v643, %v642
        %v662 = vpack.c.bf16 %v645, %v644
        %v663 = vpack.c.bf16 %v647, %v646
        %v664 = vld [vmem:[%s567 + $0x2] sm:$0xff]
        %v665 = vld [vmem:[%s567 + $0xa] sm:$0xff]
        %v666 = vld [vmem:[%s567 + $0x1a] sm:$0xff]
        %v667 = vld [vmem:[%s567 + $0x22] sm:$0xff]
        %v668 = vld [vmem:[%s567 + $0x32] sm:$0xff]
        %v669 = vld [vmem:[%s567 + $0x3a] sm:$0xff]
        %v670 = vld [vmem:[%s567 + $0x4a] sm:$0xff]
        %v671 = vld [vmem:[%s567 + $0x52] sm:$0xff]
        %v672 = vld [vmem:[%s567 + $0x62] sm:$0xff]
        %v673 = vld [vmem:[%s567 + $0x6a] sm:$0xff]
        %v674 = vld [vmem:[%s567 + $0x7a] sm:$0xff]
        %v675 = vld [vmem:[%s567 + $0x82] sm:$0xff]
        %v676 = vld [vmem:[%s567 + $0x92] sm:$0xff]
        %v677 = vld [vmem:[%s567 + $0x9a] sm:$0xff]
        %v678 = vld [vmem:[%s567 + $0xaa] sm:$0xff]
        %v679 = vld [vmem:[%s567 + $0xb2] sm:$0xff]
        %v680 = vld [vmem:[%s567 + $0xc2] sm:$0xff]
        %v681 = vld [vmem:[%s567 + $0xca] sm:$0xff]
        %v682 = vld [vmem:[%s567 + $0xda] sm:$0xff]
        %v683 = vld [vmem:[%s567 + $0xe2] sm:$0xff]
        %v684 = vld [vmem:[%s567 + $0xf2] sm:$0xff]
        %v685 = vld [vmem:[%s567 + $0xfa] sm:$0xff]
        %v686 = vld [vmem:[%s567 + $0x10a] sm:$0xff]
        %v687 = vld [vmem:[%s567 + $0x112] sm:$0xff]
        %v688 = vld [vmem:[%s567 + $0x122] sm:$0xff]
        %v689 = vld [vmem:[%s567 + $0x12a] sm:$0xff]
        %v690 = vld [vmem:[%s567 + $0x13a] sm:$0xff]
        %v691 = vld [vmem:[%s567 + $0x142] sm:$0xff]
        %v692 = vld [vmem:[%s567 + $0x152] sm:$0xff]
        %v693 = vld [vmem:[%s567 + $0x15a] sm:$0xff]
        %v694 = vld [vmem:[%s567 + $0x16a] sm:$0xff]
        %v695 = vld [vmem:[%s567 + $0x172] sm:$0xff]
        %v696 = vpack.c.bf16 %v665, %v664
        %v697 = vpack.c.bf16 %v667, %v666
        %v698 = vpack.c.bf16 %v669, %v668
        %v699 = vpack.c.bf16 %v671, %v670
        %v700 = vpack.c.bf16 %v673, %v672
        %v701 = vpack.c.bf16 %v675, %v674
        %v702 = vpack.c.bf16 %v677, %v676
        %v703 = vpack.c.bf16 %v679, %v678
        %v704 = vpack.c.bf16 %v681, %v680
        %v705 = vpack.c.bf16 %v683, %v682
        %v706 = vpack.c.bf16 %v685, %v684
        %v707 = vpack.c.bf16 %v687, %v686
        %v708 = vpack.c.bf16 %v689, %v688
        %v709 = vpack.c.bf16 %v691, %v690
        %v710 = vpack.c.bf16 %v693, %v692
        %v711 = vpack.c.bf16 %v695, %v694
        %728 = vrot.lane.b32.xlu0 %v358, 4
        %v729 = vpop.permute.xlu0 %728
        %730 = vrot.lane.b32.xlu0 %v359, 4
        %v731 = vpop.permute.xlu0 %730
        %732 = vrot.lane.b32.xlu0 %v360, 4
        %v733 = vpop.permute.xlu0 %732
        %734 = vrot.lane.b32.xlu0 %v361, 4
        %v735 = vpop.permute.xlu0 %734
        %736 = vrot.lane.b32.xlu0 %v362, 4
        %v737 = vpop.permute.xlu0 %736
        %738 = vrot.lane.b32.xlu0 %v363, 4
        %v739 = vpop.permute.xlu0 %738
        %740 = vrot.lane.b32.xlu0 %v364, 4
        %v741 = vpop.permute.xlu0 %740
        %742 = vrot.lane.b32.xlu0 %v365, 4
        %v743 = vpop.permute.xlu0 %742
        %744 = vrot.lane.b32.xlu0 %v366, 4
        %v745 = vpop.permute.xlu0 %744
        %746 = vrot.lane.b32.xlu0 %v367, 4
        %v747 = vpop.permute.xlu0 %746
        %748 = vrot.lane.b32.xlu0 %v368, 4
        %v749 = vpop.permute.xlu0 %748
        %750 = vrot.lane.b32.xlu0 %v369, 4
        %v751 = vpop.permute.xlu0 %750
        %752 = vrot.lane.b32.xlu0 %v370, 4
        %v753 = vpop.permute.xlu0 %752
        %754 = vrot.lane.b32.xlu0 %v371, 4
        %v755 = vpop.permute.xlu0 %754
        %756 = vrot.lane.b32.xlu0 %v372, 4
        %v757 = vpop.permute.xlu0 %756
        %758 = vrot.lane.b32.xlu0 %v373, 4
        %v759 = vpop.permute.xlu0 %758
        %776 = vrot.lane.b32.xlu0 %v406, 8
        %v777 = vpop.permute.xlu0 %776
        %778 = vrot.lane.b32.xlu0 %v407, 8
        %v779 = vpop.permute.xlu0 %778
        %780 = vrot.lane.b32.xlu0 %v408, 8
        %v781 = vpop.permute.xlu0 %780
        %782 = vrot.lane.b32.xlu0 %v409, 8
        %v783 = vpop.permute.xlu0 %782
        %784 = vrot.lane.b32.xlu0 %v410, 8
        %v785 = vpop.permute.xlu0 %784
        %786 = vrot.lane.b32.xlu0 %v411, 8
        %v787 = vpop.permute.xlu0 %786
        %788 = vrot.lane.b32.xlu0 %v412, 8
        %v789 = vpop.permute.xlu0 %788
        %790 = vrot.lane.b32.xlu0 %v413, 8
        %v791 = vpop.permute.xlu0 %790
        %792 = vrot.lane.b32.xlu0 %v414, 8
        %v793 = vpop.permute.xlu0 %792
        %794 = vrot.lane.b32.xlu0 %v415, 8
        %v795 = vpop.permute.xlu0 %794
        %796 = vrot.lane.b32.xlu0 %v416, 8
        %v797 = vpop.permute.xlu0 %796
        %798 = vrot.lane.b32.xlu0 %v417, 8
        %v799 = vpop.permute.xlu0 %798
        %800 = vrot.lane.b32.xlu0 %v418, 8
        %v801 = vpop.permute.xlu0 %800
        %802 = vrot.lane.b32.xlu0 %v419, 8
        %v803 = vpop.permute.xlu0 %802
        %804 = vrot.lane.b32.xlu0 %v420, 8
        %v805 = vpop.permute.xlu0 %804
        %806 = vrot.lane.b32.xlu0 %v421, 8
        %v807 = vpop.permute.xlu0 %806
        %824 = vrot.lane.b32.xlu0 %v455, 12
        %v825 = vpop.permute.xlu0 %824
        %826 = vrot.lane.b32.xlu0 %v456, 12
        %v827 = vpop.permute.xlu0 %826
        %828 = vrot.lane.b32.xlu0 %v457, 12
        %v829 = vpop.permute.xlu0 %828
        %830 = vrot.lane.b32.xlu0 %v458, 12
        %v831 = vpop.permute.xlu0 %830
        %832 = vrot.lane.b32.xlu0 %v459, 12
        %v833 = vpop.permute.xlu0 %832
        %834 = vrot.lane.b32.xlu0 %v460, 12
        %v835 = vpop.permute.xlu0 %834
        %836 = vrot.lane.b32.xlu0 %v461, 12
        %v837 = vpop.permute.xlu0 %836
        %838 = vrot.lane.b32.xlu0 %v462, 12
        %v839 = vpop.permute.xlu0 %838
        %840 = vrot.lane.b32.xlu0 %v463, 12
        %v841 = vpop.permute.xlu0 %840
        %842 = vrot.lane.b32.xlu0 %v464, 12
        %v843 = vpop.permute.xlu0 %842
        %844 = vrot.lane.b32.xlu0 %v465, 12
        %v845 = vpop.permute.xlu0 %844
        %846 = vrot.lane.b32.xlu0 %v466, 12
        %v847 = vpop.permute.xlu0 %846
        %848 = vrot.lane.b32.xlu0 %v467, 12
        %v849 = vpop.permute.xlu0 %848
        %850 = vrot.lane.b32.xlu0 %v468, 12
        %v851 = vpop.permute.xlu0 %850
        %852 = vrot.lane.b32.xlu0 %v469, 12
        %v853 = vpop.permute.xlu0 %852
        %854 = vrot.lane.b32.xlu0 %v470, 12
        %v855 = vpop.permute.xlu0 %854
        %872 = vrot.lane.b32.xlu0 %v503, 16
        %v873 = vpop.permute.xlu0 %872
        %874 = vrot.lane.b32.xlu0 %v504, 16
        %v875 = vpop.permute.xlu0 %874
        %876 = vrot.lane.b32.xlu0 %v505, 16
        %v877 = vpop.permute.xlu0 %876
        %878 = vrot.lane.b32.xlu0 %v506, 16
        %v879 = vpop.permute.xlu0 %878
        %880 = vrot.lane.b32.xlu0 %v507, 16
        %v881 = vpop.permute.xlu0 %880
        %882 = vrot.lane.b32.xlu0 %v508, 16
        %v883 = vpop.permute.xlu0 %882
        %884 = vrot.lane.b32.xlu0 %v509, 16
        %v885 = vpop.permute.xlu0 %884
        %886 = vrot.lane.b32.xlu0 %v510, 16
        %v887 = vpop.permute.xlu0 %886
        %888 = vrot.lane.b32.xlu0 %v511, 16
        %v889 = vpop.permute.xlu0 %888
        %890 = vrot.lane.b32.xlu0 %v512, 16
        %v891 = vpop.permute.xlu0 %890
        %892 = vrot.lane.b32.xlu0 %v513, 16
        %v893 = vpop.permute.xlu0 %892
        %894 = vrot.lane.b32.xlu0 %v514, 16
        %v895 = vpop.permute.xlu0 %894
        %896 = vrot.lane.b32.xlu0 %v515, 16
        %v897 = vpop.permute.xlu0 %896
        %898 = vrot.lane.b32.xlu0 %v516, 16
        %v899 = vpop.permute.xlu0 %898
        %900 = vrot.lane.b32.xlu0 %v517, 16
        %v901 = vpop.permute.xlu0 %900
        %902 = vrot.lane.b32.xlu0 %v518, 16
        %v903 = vpop.permute.xlu0 %902
        %920 = vrot.lane.b32.xlu0 %v551, 20
        %v921 = vpop.permute.xlu0 %920
        %922 = vrot.lane.b32.xlu0 %v552, 20
        %v923 = vpop.permute.xlu0 %922
        %924 = vrot.lane.b32.xlu0 %v553, 20
        %v925 = vpop.permute.xlu0 %924
        %926 = vrot.lane.b32.xlu0 %v554, 20
        %v927 = vpop.permute.xlu0 %926
        %928 = vrot.lane.b32.xlu0 %v555, 20
        %v929 = vpop.permute.xlu0 %928
        %930 = vrot.lane.b32.xlu0 %v556, 20
        %v931 = vpop.permute.xlu0 %930
        %932 = vrot.lane.b32.xlu0 %v557, 20
        %v933 = vpop.permute.xlu0 %932
        %934 = vrot.lane.b32.xlu0 %v558, 20
        %v935 = vpop.permute.xlu0 %934
        %936 = vrot.lane.b32.xlu0 %v559, 20
        %v937 = vpop.permute.xlu0 %936
        %938 = vrot.lane.b32.xlu0 %v560, 20
        %v939 = vpop.permute.xlu0 %938
        %940 = vrot.lane.b32.xlu0 %v561, 20
        %v941 = vpop.permute.xlu0 %940
        %942 = vrot.lane.b32.xlu0 %v562, 20
        %v943 = vpop.permute.xlu0 %942
        %944 = vrot.lane.b32.xlu0 %v563, 20
        %v945 = vpop.permute.xlu0 %944
        %946 = vrot.lane.b32.xlu0 %v564, 20
        %v947 = vpop.permute.xlu0 %946
        %948 = vrot.lane.b32.xlu0 %v565, 20
        %v949 = vpop.permute.xlu0 %948
        %950 = vrot.lane.b32.xlu0 %v566, 20
        %v951 = vpop.permute.xlu0 %950
        %968 = vrot.lane.b32.xlu0 %v600, 24
        %v969 = vpop.permute.xlu0 %968
        %970 = vrot.lane.b32.xlu0 %v601, 24
        %v971 = vpop.permute.xlu0 %970
        %972 = vrot.lane.b32.xlu0 %v602, 24
        %v973 = vpop.permute.xlu0 %972
        %974 = vrot.lane.b32.xlu0 %v603, 24
        %v975 = vpop.permute.xlu0 %974
        %976 = vrot.lane.b32.xlu0 %v604, 24
        %v977 = vpop.permute.xlu0 %976
        %978 = vrot.lane.b32.xlu0 %v605, 24
        %v979 = vpop.permute.xlu0 %978
        %980 = vrot.lane.b32.xlu0 %v606, 24
        %v981 = vpop.permute.xlu0 %980
        %982 = vrot.lane.b32.xlu0 %v607, 24
        %v983 = vpop.permute.xlu0 %982
        %984 = vrot.lane.b32.xlu0 %v608, 24
        %v985 = vpop.permute.xlu0 %984
        %986 = vrot.lane.b32.xlu0 %v609, 24
        %v987 = vpop.permute.xlu0 %986
        %988 = vrot.lane.b32.xlu0 %v610, 24
        %v989 = vpop.permute.xlu0 %988
        %990 = vrot.lane.b32.xlu0 %v611, 24
        %v991 = vpop.permute.xlu0 %990
        %992 = vrot.lane.b32.xlu0 %v612, 24
        %v993 = vpop.permute.xlu0 %992
        %994 = vrot.lane.b32.xlu0 %v613, 24
        %v995 = vpop.permute.xlu0 %994
        %996 = vrot.lane.b32.xlu0 %v614, 24
        %v997 = vpop.permute.xlu0 %996
        %998 = vrot.lane.b32.xlu0 %v615, 24
        %v999 = vpop.permute.xlu0 %998
        %1016 = vrot.lane.b32.xlu0 %v648, 28
        %v1017 = vpop.permute.xlu0 %1016
        %1018 = vrot.lane.b32.xlu0 %v649, 28
        %v1019 = vpop.permute.xlu0 %1018
        %1020 = vrot.lane.b32.xlu0 %v650, 28
        %v1021 = vpop.permute.xlu0 %1020
        %1022 = vrot.lane.b32.xlu0 %v651, 28
        %v1023 = vpop.permute.xlu0 %1022
        %1024 = vrot.lane.b32.xlu0 %v652, 28
        %v1025 = vpop.permute.xlu0 %1024
        %1026 = vrot.lane.b32.xlu0 %v653, 28
        %v1027 = vpop.permute.xlu0 %1026
        %1028 = vrot.lane.b32.xlu0 %v654, 28
        %v1029 = vpop.permute.xlu0 %1028
        %1030 = vrot.lane.b32.xlu0 %v655, 28
        %v1031 = vpop.permute.xlu0 %1030
        %1032 = vrot.lane.b32.xlu0 %v656, 28
        %v1033 = vpop.permute.xlu0 %1032
        %1034 = vrot.lane.b32.xlu0 %v657, 28
        %v1035 = vpop.permute.xlu0 %1034
        %1036 = vrot.lane.b32.xlu0 %v658, 28
        %v1037 = vpop.permute.xlu0 %1036
        %1038 = vrot.lane.b32.xlu0 %v659, 28
        %v1039 = vpop.permute.xlu0 %1038
        %1040 = vrot.lane.b32.xlu0 %v660, 28
        %v1041 = vpop.permute.xlu0 %1040
        %1042 = vrot.lane.b32.xlu0 %v661, 28
        %v1043 = vpop.permute.xlu0 %1042
        %1044 = vrot.lane.b32.xlu0 %v662, 28
        %v1045 = vpop.permute.xlu0 %1044
        %1046 = vrot.lane.b32.xlu0 %v663, 28
        %v1047 = vpop.permute.xlu0 %1046
        %1064 = vrot.lane.b32.xlu0 %v696, 32
        %v1065 = vpop.permute.xlu0 %1064
        %1066 = vrot.lane.b32.xlu0 %v697, 32
        %v1067 = vpop.permute.xlu0 %1066
        %1068 = vrot.lane.b32.xlu0 %v698, 32
        %v1069 = vpop.permute.xlu0 %1068
        %1070 = vrot.lane.b32.xlu0 %v699, 32
        %v1071 = vpop.permute.xlu0 %1070
        %1072 = vrot.lane.b32.xlu0 %v700, 32
        %v1073 = vpop.permute.xlu0 %1072
        %1074 = vrot.lane.b32.xlu0 %v701, 32
        %v1075 = vpop.permute.xlu0 %1074
        %1076 = vrot.lane.b32.xlu0 %v702, 32
        %v1077 = vpop.permute.xlu0 %1076
        %1078 = vrot.lane.b32.xlu0 %v703, 32
        %v1079 = vpop.permute.xlu0 %1078
        %1080 = vrot.lane.b32.xlu0 %v704, 32
        %v1081 = vpop.permute.xlu0 %1080
        %1082 = vrot.lane.b32.xlu0 %v705, 32
        %v1083 = vpop.permute.xlu0 %1082
        %1084 = vrot.lane.b32.xlu0 %v706, 32
        %v1085 = vpop.permute.xlu0 %1084
        %1086 = vrot.lane.b32.xlu0 %v707, 32
        %v1087 = vpop.permute.xlu0 %1086
        %1088 = vrot.lane.b32.xlu0 %v708, 32
        %v1089 = vpop.permute.xlu0 %1088
        %1090 = vrot.lane.b32.xlu0 %v709, 32
        %v1091 = vpop.permute.xlu0 %1090
        %1092 = vrot.lane.b32.xlu0 %v710, 32
        %v1093 = vpop.permute.xlu0 %1092
        %1094 = vrot.lane.b32.xlu0 %v711, 32
        %v1095 = vpop.permute.xlu0 %1094
        %vm1096 = vcmask 31744
        %v1099 = vsel %vm1096, %v310, %v729
        %v1102 = vsel %vm1096, %v311, %v731
        %v1105 = vsel %vm1096, %v312, %v733
        %v1108 = vsel %vm1096, %v313, %v735
        %v1111 = vsel %vm1096, %v314, %v737
        %v1114 = vsel %vm1096, %v315, %v739
        %v1117 = vsel %vm1096, %v316, %v741
        %v1120 = vsel %vm1096, %v317, %v743
        %v1123 = vsel %vm1096, %v318, %v745
        %v1126 = vsel %vm1096, %v319, %v747
        %v1129 = vsel %vm1096, %v320, %v749
        %v1132 = vsel %vm1096, %v321, %v751
        %v1135 = vsel %vm1096, %v322, %v753
        %v1138 = vsel %vm1096, %v323, %v755
        %v1141 = vsel %vm1096, %v324, %v757
        %v1144 = vsel %vm1096, %v325, %v759
        %vm1145 = vcmask 64512
        %v1147 = vsel %vm1145, %v1099, %v777
        %v1149 = vsel %vm1145, %v1102, %v779
        %v1151 = vsel %vm1145, %v1105, %v781
        %v1153 = vsel %vm1145, %v1108, %v783
        %v1155 = vsel %vm1145, %v1111, %v785
        %v1157 = vsel %vm1145, %v1114, %v787
        %v1159 = vsel %vm1145, %v1117, %v789
        %v1161 = vsel %vm1145, %v1120, %v791
        %v1163 = vsel %vm1145, %v1123, %v793
        %v1165 = vsel %vm1145, %v1126, %v795
        %v1167 = vsel %vm1145, %v1129, %v797
        %v1169 = vsel %vm1145, %v1132, %v799
        %v1171 = vsel %vm1145, %v1135, %v801
        %v1173 = vsel %vm1145, %v1138, %v803
        %v1175 = vsel %vm1145, %v1141, %v805
        %v1177 = vsel %vm1145, %v1144, %v807
        %vm1178 = vcmask 97280
        %v1180 = vsel %vm1178, %v1147, %v825
        %v1182 = vsel %vm1178, %v1149, %v827
        %v1184 = vsel %vm1178, %v1151, %v829
        %v1186 = vsel %vm1178, %v1153, %v831
        %v1188 = vsel %vm1178, %v1155, %v833
        %v1190 = vsel %vm1178, %v1157, %v835
        %v1192 = vsel %vm1178, %v1159, %v837
        %v1194 = vsel %vm1178, %v1161, %v839
        %v1196 = vsel %vm1178, %v1163, %v841
        %v1198 = vsel %vm1178, %v1165, %v843
        %v1200 = vsel %vm1178, %v1167, %v845
        %v1202 = vsel %vm1178, %v1169, %v847
        %v1204 = vsel %vm1178, %v1171, %v849
        %v1206 = vsel %vm1178, %v1173, %v851
        %v1208 = vsel %vm1178, %v1175, %v853
        %v1210 = vsel %vm1178, %v1177, %v855
        %vm1211 = vcmask 130048
        %v1213 = vsel %vm1211, %v1180, %v873
        %v1215 = vsel %vm1211, %v1182, %v875
        %v1217 = vsel %vm1211, %v1184, %v877
        %v1219 = vsel %vm1211, %v1186, %v879
        %v1221 = vsel %vm1211, %v1188, %v881
        %v1223 = vsel %vm1211, %v1190, %v883
        %v1225 = vsel %vm1211, %v1192, %v885
        %v1227 = vsel %vm1211, %v1194, %v887
        %v1229 = vsel %vm1211, %v1196, %v889
        %v1231 = vsel %vm1211, %v1198, %v891
        %v1233 = vsel %vm1211, %v1200, %v893
        %v1235 = vsel %vm1211, %v1202, %v895
        %v1237 = vsel %vm1211, %v1204, %v897
        %v1239 = vsel %vm1211, %v1206, %v899
        %v1241 = vsel %vm1211, %v1208, %v901
        %v1243 = vsel %vm1211, %v1210, %v903
        %vm1244 = vcmask 162816
        %v1246 = vsel %vm1244, %v1213, %v921
        %v1248 = vsel %vm1244, %v1215, %v923
        %v1250 = vsel %vm1244, %v1217, %v925
        %v1252 = vsel %vm1244, %v1219, %v927
        %v1254 = vsel %vm1244, %v1221, %v929
        %v1256 = vsel %vm1244, %v1223, %v931
        %v1258 = vsel %vm1244, %v1225, %v933
        %v1260 = vsel %vm1244, %v1227, %v935
        %v1262 = vsel %vm1244, %v1229, %v937
        %v1264 = vsel %vm1244, %v1231, %v939
        %v1266 = vsel %vm1244, %v1233, %v941
        %v1268 = vsel %vm1244, %v1235, %v943
        %v1270 = vsel %vm1244, %v1237, %v945
        %v1272 = vsel %vm1244, %v1239, %v947
        %v1274 = vsel %vm1244, %v1241, %v949
        %v1276 = vsel %vm1244, %v1243, %v951
        %vm1277 = vcmask 195584
        %v1279 = vsel %vm1277, %v1246, %v969
        %v1281 = vsel %vm1277, %v1248, %v971
        %v1283 = vsel %vm1277, %v1250, %v973
        %v1285 = vsel %vm1277, %v1252, %v975
        %v1287 = vsel %vm1277, %v1254, %v977
        %v1289 = vsel %vm1277, %v1256, %v979
        %v1291 = vsel %vm1277, %v1258, %v981
        %v1293 = vsel %vm1277, %v1260, %v983
        %v1295 = vsel %vm1277, %v1262, %v985
        %v1297 = vsel %vm1277, %v1264, %v987
        %v1299 = vsel %vm1277, %v1266, %v989
        %v1301 = vsel %vm1277, %v1268, %v991
        %v1303 = vsel %vm1277, %v1270, %v993
        %v1305 = vsel %vm1277, %v1272, %v995
        %v1307 = vsel %vm1277, %v1274, %v997
        %v1309 = vsel %vm1277, %v1276, %v999
        %vm1310 = vcmask 228352
        %v1312 = vsel %vm1310, %v1279, %v1017
        %v1314 = vsel %vm1310, %v1281, %v1019
        %v1316 = vsel %vm1310, %v1283, %v1021
        %v1318 = vsel %vm1310, %v1285, %v1023
        %v1320 = vsel %vm1310, %v1287, %v1025
        %v1322 = vsel %vm1310, %v1289, %v1027
        %v1324 = vsel %vm1310, %v1291, %v1029
        %v1326 = vsel %vm1310, %v1293, %v1031
        %v1328 = vsel %vm1310, %v1295, %v1033
        %v1330 = vsel %vm1310, %v1297, %v1035
        %v1332 = vsel %vm1310, %v1299, %v1037
        %v1334 = vsel %vm1310, %v1301, %v1039
        %v1336 = vsel %vm1310, %v1303, %v1041
        %v1338 = vsel %vm1310, %v1305, %v1043
        %v1340 = vsel %vm1310, %v1307, %v1045
        %v1342 = vsel %vm1310, %v1309, %v1047
        %vm1343 = vcmask 261120
        %v1345 = vsel %vm1343, %v1312, %v1065
        %v1347 = vsel %vm1343, %v1314, %v1067
        %v1349 = vsel %vm1343, %v1316, %v1069
        %v1351 = vsel %vm1343, %v1318, %v1071
        %v1353 = vsel %vm1343, %v1320, %v1073
        %v1355 = vsel %vm1343, %v1322, %v1075
        %v1357 = vsel %vm1343, %v1324, %v1077
        %v1359 = vsel %vm1343, %v1326, %v1079
        %v1361 = vsel %vm1343, %v1328, %v1081
        %v1363 = vsel %vm1343, %v1330, %v1083
        %v1365 = vsel %vm1343, %v1332, %v1085
        %v1367 = vsel %vm1343, %v1334, %v1087
        %v1369 = vsel %vm1343, %v1336, %v1089
        %v1371 = vsel %vm1343, %v1338, %v1091
        %v1373 = vsel %vm1343, %v1340, %v1093
        %v1375 = vsel %vm1343, %v1342, %v1095
        %v1376 = vld [vmem:[%s1] sm:$0xf]
        %v1377 = vld [vmem:[%s1 + $0x4] sm:$0xf]
        %v1378 = vld [vmem:[%s1 + $0x8] sm:$0xf]
        %v1379 = vld [vmem:[%s1 + $0xc] sm:$0xf]
        %v1380 = vld [vmem:[%s1 + $0x10] sm:$0x3]
        %v1381 = vld [vmem:[%s2] sm:$0x1]
        %v1383 = vlaneseq
        %v1384 = vshrl.u32 %v1383, 7
        %v1385 = vsub.s32 0, %v1384
        %v1386 = vrot.slane %v1381, %v1385
        %v1393 = vunpack.c.l.b16 %v1376
        %v1394 = vunpack.c.l.b16 %v1377
        %v1395 = vunpack.c.l.b16 %v1378
        %v1396 = vunpack.c.l.b16 %v1379
        %v1397 = vunpack.c.l.b16 %v1380
        %v1398 = vpack.c.b16 %v1394, %v1393
        %v1399 = vpack.c.b16 %v1396, %v1395
        %v1400 = vpack.c.b16 %v1397, %v1397
        %vm1403 = vcmask 293888
        %v1404 = vsel %vm1403, %v1345, 0
        %v1406 = vsel %vm1403, %v1347, 0
        %v1408 = vsel %vm1403, %v1349, 0
        %v1410 = vsel %vm1403, %v1351, 0
        %v1412 = vsel %vm1403, %v1353, 0
        %v1414 = vsel %vm1403, %v1355, 0
        %v1416 = vsel %vm1403, %v1357, 0
        %v1418 = vsel %vm1403, %v1359, 0
        %v1420 = vsel %vm1403, %v1361, 0
        %v1422 = vsel %vm1403, %v1363, 0
        %v1424 = vsel %vm1403, %v1365, 0
        %v1426 = vsel %vm1403, %v1367, 0
        %v1428 = vsel %vm1403, %v1369, 0
        %v1430 = vsel %vm1403, %v1371, 0
        %v1432 = vsel %vm1403, %v1373, 0
        %v1434 = vsel %vm1403, %v1375, 0
        %vm1436 = vcmask 1041408
        %v1438 = vsel %vm1436, %v1400, 0
        %1440 = vmatprep.subr.bf16.mxu0 0
        %1441 = vmatpush1.bf16.msra.mxu0 %v1398
        %1442 = vmatprep.subr.bf16.mxu0 0
        %1443 = vmatpush1.bf16.msra.mxu0 %v1399
        %1444 = vmatprep.subr.bf16.mxu0 0
        %1445 = vmatpush1.bf16.msra.mxu0 %v1438
        %1446 = vmatprep.subr.bf16.mxu0 0
        %1447 = vmatpush1.bf16.msra.mxu0 0
        %1448 = vmatprep.subr.bf16.mxu0 0
        %1449 = vmatpush1.bf16.msra.mxu0 0
        %1450 = vmatprep.subr.bf16.mxu0 0
        %1451 = vmatpush1.bf16.msra.mxu0 0
        %1452 = vmatprep.subr.bf16.mxu0 0
        %1453 = vmatpush1.bf16.msra.mxu0 0
        %1454 = vmatprep.subr.bf16.mxu0 0
        %1455 = vmatpush1.bf16.msra.mxu0 0
        %1456 = vmatprep.subr.bf16.mxu0 0
        %1457 = vmatpush1.bf16.msra.mxu0 0
        %1458 = vmatprep.subr.bf16.mxu0 0
        %1459 = vmatpush1.bf16.msra.mxu0 0
        %1460 = vmatprep.subr.bf16.mxu0 0
        %1461 = vmatpush1.bf16.msra.mxu0 0
        %1462 = vmatprep.subr.bf16.mxu0 0
        %1463 = vmatpush1.bf16.msra.mxu0 0
        %1464 = vmatprep.subr.bf16.mxu0 0
        %1465 = vmatpush1.bf16.msra.mxu0 0
        %1466 = vmatprep.subr.bf16.mxu0 0
        %1467 = vmatpush1.bf16.msra.mxu0 0
        %1468 = vmatprep.subr.bf16.mxu0 0
        %1469 = vmatpush1.bf16.msra.mxu0 0
        %1470 = vmatprep.subr.bf16.mxu0 0
        %1471 = vmatpush1.bf16.msra.mxu0 0
        %1472 = vmatprep.mubr.bf16.mxu0 0
        %1473 = vmatmul.mubr.bf16.gmra.mrb[0].mxu0 %v1404
        %v1474 = vpop.f32.mrb[0].mxu0
        %v1475 = vadd.f32 %v1386, %v1474
        %v1476 = vpop.f32.mrb[0].mxu0
        %v1477 = vpop.f32.mrb[0].mxu0
        %v1478 = vadd.f32 %v1386, %v1477
        %v1479 = vpop.f32.mrb[0].mxu0
        %1480 = vmatprep.mubr.bf16.mxu0 0
        %1481 = vmatmul.mubr.bf16.gmra.mrb[0].mxu0 %v1406
        %v1482 = vpop.f32.mrb[0].mxu0
        %v1483 = vadd.f32 %v1386, %v1482
        %v1484 = vpop.f32.mrb[0].mxu0
        %v1485 = vpop.f32.mrb[0].mxu0
        %v1486 = vadd.f32 %v1386, %v1485
        %v1487 = vpop.f32.mrb[0].mxu0
        %1488 = vmatprep.mubr.bf16.mxu0 0
        %1489 = vmatmul.mubr.bf16.gmra.mrb[0].mxu0 %v1408
        %v1490 = vpop.f32.mrb[0].mxu0
        %v1491 = vadd.f32 %v1386, %v1490
        %v1492 = vpop.f32.mrb[0].mxu0
        %v1493 = vpop.f32.mrb[0].mxu0
        %v1494 = vadd.f32 %v1386, %v1493
        %v1495 = vpop.f32.mrb[0].mxu0
        %1496 = vmatprep.mubr.bf16.mxu0 0
        %1497 = vmatmul.mubr.bf16.gmra.mrb[0].mxu0 %v1410
        %v1498 = vpop.f32.mrb[0].mxu0
        %v1499 = vadd.f32 %v1386, %v1498
        %v1500 = vpop.f32.mrb[0].mxu0
        %v1501 = vpop.f32.mrb[0].mxu0
        %v1502 = vadd.f32 %v1386, %v1501
        %v1503 = vpop.f32.mrb[0].mxu0
        %1504 = vmatprep.mubr.bf16.mxu0 0
        %1505 = vmatmul.mubr.bf16.gmra.mrb[0].mxu0 %v1412
        %v1506 = vpop.f32.mrb[0].mxu0
        %v1507 = vadd.f32 %v1386, %v1506
        %v1508 = vpop.f32.mrb[0].mxu0
        %v1509 = vpop.f32.mrb[0].mxu0
        %v1510 = vadd.f32 %v1386, %v1509
        %v1511 = vpop.f32.mrb[0].mxu0
        %1512 = vmatprep.mubr.bf16.mxu0 0
        %1513 = vmatmul.mubr.bf16.gmra.mrb[0].mxu0 %v1414
        %v1514 = vpop.f32.mrb[0].mxu0
        %v1515 = vadd.f32 %v1386, %v1514
        %v1516 = vpop.f32.mrb[0].mxu0
        %v1517 = vpop.f32.mrb[0].mxu0
        %v1518 = vadd.f32 %v1386, %v1517
        %v1519 = vpop.f32.mrb[0].mxu0
        %1520 = vmatprep.mubr.bf16.mxu0 0
        %1521 = vmatmul.mubr.bf16.gmra.mrb[0].mxu0 %v1416
        %v1522 = vpop.f32.mrb[0].mxu0
        %v1523 = vadd.f32 %v1386, %v1522
        %v1524 = vpop.f32.mrb[0].mxu0
        %v1525 = vpop.f32.mrb[0].mxu0
        %v1526 = vadd.f32 %v1386, %v1525
        %v1527 = vpop.f32.mrb[0].mxu0
        %1528 = vmatprep.mubr.bf16.mxu0 0
        %1529 = vmatmul.mubr.bf16.gmra.mrb[0].mxu0 %v1418
        %v1530 = vpop.f32.mrb[0].mxu0
        %v1531 = vadd.f32 %v1386, %v1530
        %v1532 = vpop.f32.mrb[0].mxu0
        %v1533 = vpop.f32.mrb[0].mxu0
        %v1534 = vadd.f32 %v1386, %v1533
        %v1535 = vpop.f32.mrb[0].mxu0
        %1536 = vmatprep.mubr.bf16.mxu0 0
        %1537 = vmatmul.mubr.bf16.gmra.mrb[0].mxu0 %v1420
        %v1538 = vpop.f32.mrb[0].mxu0
        %v1539 = vadd.f32 %v1386, %v1538
        %v1540 = vpop.f32.mrb[0].mxu0
        %v1541 = vpop.f32.mrb[0].mxu0
        %v1542 = vadd.f32 %v1386, %v1541
        %v1543 = vpop.f32.mrb[0].mxu0
        %1544 = vmatprep.mubr.bf16.mxu0 0
        %1545 = vmatmul.mubr.bf16.gmra.mrb[0].mxu0 %v1422
        %v1546 = vpop.f32.mrb[0].mxu0
        %v1547 = vadd.f32 %v1386, %v1546
        %v1548 = vpop.f32.mrb[0].mxu0
        %v1549 = vpop.f32.mrb[0].mxu0
        %v1550 = vadd.f32 %v1386, %v1549
        %v1551 = vpop.f32.mrb[0].mxu0
        %1552 = vmatprep.mubr.bf16.mxu0 0
        %1553 = vmatmul.mubr.bf16.gmra.mrb[0].mxu0 %v1424
        %v1554 = vpop.f32.mrb[0].mxu0
        %v1555 = vadd.f32 %v1386, %v1554
        %v1556 = vpop.f32.mrb[0].mxu0
        %v1557 = vpop.f32.mrb[0].mxu0
        %v1558 = vadd.f32 %v1386, %v1557
        %v1559 = vpop.f32.mrb[0].mxu0
        %1560 = vmatprep.mubr.bf16.mxu0 0
        %1561 = vmatmul.mubr.bf16.gmra.mrb[0].mxu0 %v1426
        %v1562 = vpop.f32.mrb[0].mxu0
        %v1563 = vadd.f32 %v1386, %v1562
        %v1564 = vpop.f32.mrb[0].mxu0
        %v1565 = vpop.f32.mrb[0].mxu0
        %v1566 = vadd.f32 %v1386, %v1565
        %v1567 = vpop.f32.mrb[0].mxu0
        %1568 = vmatprep.mubr.bf16.mxu0 0
        %1569 = vmatmul.mubr.bf16.gmra.mrb[0].mxu0 %v1428
        %v1570 = vpop.f32.mrb[0].mxu0
        %v1571 = vadd.f32 %v1386, %v1570
        %v1572 = vpop.f32.mrb[0].mxu0
        %v1573 = vpop.f32.mrb[0].mxu0
        %v1574 = vadd.f32 %v1386, %v1573
        %v1575 = vpop.f32.mrb[0].mxu0
        %1576 = vmatprep.mubr.bf16.mxu0 0
        %1577 = vmatmul.mubr.bf16.gmra.mrb[0].mxu0 %v1430
        %v1578 = vpop.f32.mrb[0].mxu0
        %v1579 = vadd.f32 %v1386, %v1578
        %v1580 = vpop.f32.mrb[0].mxu0
        %v1581 = vpop.f32.mrb[0].mxu0
        %v1582 = vadd.f32 %v1386, %v1581
        %v1583 = vpop.f32.mrb[0].mxu0
        %1584 = vmatprep.mubr.bf16.mxu0 0
        %1585 = vmatmul.mubr.bf16.gmra.mrb[0].mxu0 %v1432
        %v1586 = vpop.f32.mrb[0].mxu0
        %v1587 = vadd.f32 %v1386, %v1586
        %v1588 = vpop.f32.mrb[0].mxu0
        %v1589 = vpop.f32.mrb[0].mxu0
        %v1590 = vadd.f32 %v1386, %v1589
        %v1591 = vpop.f32.mrb[0].mxu0
        %1592 = vmatprep.mubr.bf16.mxu0 0
        %1593 = vmatmul.mubr.bf16.gmra.mrb[0].mxu0 %v1434
        %v1594 = vpop.f32.mrb[0].mxu0
        %v1595 = vadd.f32 %v1386, %v1594
        %v1596 = vpop.f32.mrb[0].mxu0
        %v1597 = vpop.f32.mrb[0].mxu0
        %v1598 = vadd.f32 %v1386, %v1597
        %v1599 = vpop.f32.mrb[0].mxu0
        %1600 = vdwg.mxu0
        %vm1601 = vcmp.gt.f32.partialorder %v1475, 0.0
        %vm1602 = vcmp.gt.f32.partialorder %v1478, 0.0
        %vm1603 = vcmp.gt.f32.partialorder %v1483, 0.0
        %vm1604 = vcmp.gt.f32.partialorder %v1486, 0.0
        %vm1605 = vcmp.gt.f32.partialorder %v1491, 0.0
        %vm1606 = vcmp.gt.f32.partialorder %v1494, 0.0
        %vm1607 = vcmp.gt.f32.partialorder %v1499, 0.0
        %vm1608 = vcmp.gt.f32.partialorder %v1502, 0.0
        %vm1609 = vcmp.gt.f32.partialorder %v1507, 0.0
        %vm1610 = vcmp.gt.f32.partialorder %v1510, 0.0
        %vm1611 = vcmp.gt.f32.partialorder %v1515, 0.0
        %vm1612 = vcmp.gt.f32.partialorder %v1518, 0.0
        %vm1613 = vcmp.gt.f32.partialorder %v1523, 0.0
        %vm1614 = vcmp.gt.f32.partialorder %v1526, 0.0
        %vm1615 = vcmp.gt.f32.partialorder %v1531, 0.0
        %vm1616 = vcmp.gt.f32.partialorder %v1534, 0.0
        %vm1617 = vcmp.gt.f32.partialorder %v1539, 0.0
        %vm1618 = vcmp.gt.f32.partialorder %v1542, 0.0
        %vm1619 = vcmp.gt.f32.partialorder %v1547, 0.0
        %vm1620 = vcmp.gt.f32.partialorder %v1550, 0.0
        %vm1621 = vcmp.gt.f32.partialorder %v1555, 0.0
        %vm1622 = vcmp.gt.f32.partialorder %v1558, 0.0
        %vm1623 = vcmp.gt.f32.partialorder %v1563, 0.0
        %vm1624 = vcmp.gt.f32.partialorder %v1566, 0.0
        %vm1625 = vcmp.gt.f32.partialorder %v1571, 0.0
        %vm1626 = vcmp.gt.f32.partialorder %v1574, 0.0
        %vm1627 = vcmp.gt.f32.partialorder %v1579, 0.0
        %vm1628 = vcmp.gt.f32.partialorder %v1582, 0.0
        %vm1629 = vcmp.gt.f32.partialorder %v1587, 0.0
        %vm1630 = vcmp.gt.f32.partialorder %v1590, 0.0
        %vm1631 = vcmp.gt.f32.partialorder %v1595, 0.0
        %vm1632 = vcmp.gt.f32.partialorder %v1598, 0.0
        %v1633 = vmul.f32 %v1475, 0.1
        %v1634 = vmul.f32 %v1478, 0.1
        %v1635 = vmul.f32 %v1483, 0.1
        %v1636 = vmul.f32 %v1486, 0.1
        %v1637 = vmul.f32 %v1491, 0.1
        %v1638 = vmul.f32 %v1494, 0.1
        %v1639 = vmul.f32 %v1499, 0.1
        %v1640 = vmul.f32 %v1502, 0.1
        %v1641 = vmul.f32 %v1507, 0.1
        %v1642 = vmul.f32 %v1510, 0.1
        %v1643 = vmul.f32 %v1515, 0.1
        %v1644 = vmul.f32 %v1518, 0.1
        %v1645 = vmul.f32 %v1523, 0.1
        %v1646 = vmul.f32 %v1526, 0.1
        %v1647 = vmul.f32 %v1531, 0.1
        %v1648 = vmul.f32 %v1534, 0.1
        %v1649 = vmul.f32 %v1539, 0.1
        %v1650 = vmul.f32 %v1542, 0.1
        %v1651 = vmul.f32 %v1547, 0.1
        %v1652 = vmul.f32 %v1550, 0.1
        %v1653 = vmul.f32 %v1555, 0.1
        %v1654 = vmul.f32 %v1558, 0.1
        %v1655 = vmul.f32 %v1563, 0.1
        %v1656 = vmul.f32 %v1566, 0.1
        %v1657 = vmul.f32 %v1571, 0.1
        %v1658 = vmul.f32 %v1574, 0.1
        %v1659 = vmul.f32 %v1579, 0.1
        %v1660 = vmul.f32 %v1582, 0.1
        %v1661 = vmul.f32 %v1587, 0.1
        %v1662 = vmul.f32 %v1590, 0.1
        %v1663 = vmul.f32 %v1595, 0.1
        %v1664 = vmul.f32 %v1598, 0.1
        %v1665 = vsel %vm1601, %v1475, %v1633
        %v1666 = vsel %vm1602, %v1478, %v1634
        %v1667 = vsel %vm1603, %v1483, %v1635
        %v1668 = vsel %vm1604, %v1486, %v1636
        %v1669 = vsel %vm1605, %v1491, %v1637
        %v1670 = vsel %vm1606, %v1494, %v1638
        %v1671 = vsel %vm1607, %v1499, %v1639
        %v1672 = vsel %vm1608, %v1502, %v1640
        %v1673 = vsel %vm1609, %v1507, %v1641
        %v1674 = vsel %vm1610, %v1510, %v1642
        %v1675 = vsel %vm1611, %v1515, %v1643
        %v1676 = vsel %vm1612, %v1518, %v1644
        %v1677 = vsel %vm1613, %v1523, %v1645
        %v1678 = vsel %vm1614, %v1526, %v1646
        %v1679 = vsel %vm1615, %v1531, %v1647
        %v1680 = vsel %vm1616, %v1534, %v1648
        %v1681 = vsel %vm1617, %v1539, %v1649
        %v1682 = vsel %vm1618, %v1542, %v1650
        %v1683 = vsel %vm1619, %v1547, %v1651
        %v1684 = vsel %vm1620, %v1550, %v1652
        %v1685 = vsel %vm1621, %v1555, %v1653
        %v1686 = vsel %vm1622, %v1558, %v1654
        %v1687 = vsel %vm1623, %v1563, %v1655
        %v1688 = vsel %vm1624, %v1566, %v1656
        %v1689 = vsel %vm1625, %v1571, %v1657
        %v1690 = vsel %vm1626, %v1574, %v1658
        %v1691 = vsel %vm1627, %v1579, %v1659
        %v1692 = vsel %vm1628, %v1582, %v1660
        %v1693 = vsel %vm1629, %v1587, %v1661
        %v1694 = vsel %vm1630, %v1590, %v1662
        %v1695 = vsel %vm1631, %v1595, %v1663
        %v1696 = vsel %vm1632, %v1598, %v1664
        %1697 = vst.msk [vmem:[#allocation2] sm:$0xff] %vm1145, 0.0
        %1698 = vst.msk [vmem:[#allocation2 + $0x8] sm:$0xff] %vm1145, 0.0
        %vm1699 = vcmask 58368
        %1700 = vst.msk [vmem:[#allocation2 + $0x10] sm:$0x3] %vm1699, 0.0
        %1701 = vst.msk [vmem:[#allocation2 + $0x18] sm:$0xff] %vm1145, 0.0
        %1702 = vst.msk [vmem:[#allocation2 + $0x20] sm:$0xff] %vm1145, 0.0
        %1703 = vst.msk [vmem:[#allocation2 + $0x28] sm:$0x3] %vm1699, 0.0
        %1704 = vst.msk [vmem:[#allocation2 + $0x30] sm:$0xff] %vm1145, 0.0
        %1705 = vst.msk [vmem:[#allocation2 + $0x38] sm:$0xff] %vm1145, 0.0
        %1706 = vst.msk [vmem:[#allocation2 + $0x40] sm:$0x3] %vm1699, 0.0
        %1707 = vst.msk [vmem:[#allocation2 + $0x48] sm:$0xff] %vm1145, 0.0
        %1708 = vst.msk [vmem:[#allocation2 + $0x50] sm:$0xff] %vm1145, 0.0
        %1709 = vst.msk [vmem:[#allocation2 + $0x58] sm:$0x3] %vm1699, 0.0
        %1710 = vst.msk [vmem:[#allocation2 + $0x60] sm:$0xff] %vm1145, 0.0
        %1711 = vst.msk [vmem:[#allocation2 + $0x68] sm:$0xff] %vm1145, 0.0
        %1712 = vst.msk [vmem:[#allocation2 + $0x70] sm:$0x3] %vm1699, 0.0
        %1713 = vst.msk [vmem:[#allocation2 + $0x78] sm:$0xff] %vm1145, 0.0
        %1714 = vst.msk [vmem:[#allocation2 + $0x80] sm:$0xff] %vm1145, 0.0
        %1715 = vst.msk [vmem:[#allocation2 + $0x88] sm:$0x3] %vm1699, 0.0
        %1716 = vst.msk [vmem:[#allocation2 + $0x90] sm:$0xff] %vm1145, 0.0
        %1717 = vst.msk [vmem:[#allocation2 + $0x98] sm:$0xff] %vm1145, 0.0
        %1718 = vst.msk [vmem:[#allocation2 + $0xa0] sm:$0x3] %vm1699, 0.0
        %1719 = vst.msk [vmem:[#allocation2 + $0xa8] sm:$0xff] %vm1145, 0.0
        %1720 = vst.msk [vmem:[#allocation2 + $0xb0] sm:$0xff] %vm1145, 0.0
        %1721 = vst.msk [vmem:[#allocation2 + $0xb8] sm:$0x3] %vm1699, 0.0
        %1722 = vst.msk [vmem:[#allocation2 + $0xc0] sm:$0xff] %vm1145, 0.0
        %1723 = vst.msk [vmem:[#allocation2 + $0xc8] sm:$0xff] %vm1145, 0.0
        %1724 = vst.msk [vmem:[#allocation2 + $0xd0] sm:$0x3] %vm1699, 0.0
        %1725 = vst.msk [vmem:[#allocation2 + $0xd8] sm:$0xff] %vm1145, 0.0
        %1726 = vst.msk [vmem:[#allocation2 + $0xe0] sm:$0xff] %vm1145, 0.0
        %1727 = vst.msk [vmem:[#allocation2 + $0xe8] sm:$0x3] %vm1699, 0.0
        %1728 = vst.msk [vmem:[#allocation2 + $0xf0] sm:$0xff] %vm1145, 0.0
        %1729 = vst.msk [vmem:[#allocation2 + $0xf8] sm:$0xff] %vm1145, 0.0
        %1730 = vst.msk [vmem:[#allocation2 + $0x100] sm:$0x3] %vm1699, 0.0
        %1731 = vst.msk [vmem:[#allocation2 + $0x108] sm:$0xff] %vm1145, 0.0
        %1732 = vst.msk [vmem:[#allocation2 + $0x110] sm:$0xff] %vm1145, 0.0
        %1733 = vst.msk [vmem:[#allocation2 + $0x118] sm:$0x3] %vm1699, 0.0
        %1734 = vst.msk [vmem:[#allocation2 + $0x120] sm:$0xff] %vm1145, 0.0
        %1735 = vst.msk [vmem:[#allocation2 + $0x128] sm:$0xff] %vm1145, 0.0
        %1736 = vst.msk [vmem:[#allocation2 + $0x130] sm:$0x3] %vm1699, 0.0
        %1737 = vst.msk [vmem:[#allocation2 + $0x138] sm:$0xff] %vm1145, 0.0
        %1738 = vst.msk [vmem:[#allocation2 + $0x140] sm:$0xff] %vm1145, 0.0
        %1739 = vst.msk [vmem:[#allocation2 + $0x148] sm:$0x3] %vm1699, 0.0
        %1740 = vst.msk [vmem:[#allocation2 + $0x150] sm:$0xff] %vm1145, 0.0
        %1741 = vst.msk [vmem:[#allocation2 + $0x158] sm:$0xff] %vm1145, 0.0
        %1742 = vst.msk [vmem:[#allocation2 + $0x160] sm:$0x3] %vm1699, 0.0
        %1743 = vst.msk [vmem:[#allocation2 + $0x168] sm:$0xff] %vm1145, 0.0
        %1744 = vst.msk [vmem:[#allocation2 + $0x170] sm:$0xff] %vm1145, 0.0
        %1745 = vst.msk [vmem:[#allocation2 + $0x178] sm:$0x3] %vm1699, 0.0
        %1746 = vst.msk [vmem:[#allocation2 + $0x180] sm:$0xff] %vm1145, 0.0
        %1747 = vst.msk [vmem:[#allocation2 + $0x188] sm:$0xff] %vm1145, 0.0
        %1748 = vst.msk [vmem:[#allocation2 + $0x190] sm:$0x3] %vm1699, 0.0
        %1749 = vst.msk [vmem:[#allocation2 + $0x198] sm:$0xff] %vm1145, 0.0
        %1750 = vst.msk [vmem:[#allocation2 + $0x1a0] sm:$0xff] %vm1145, 0.0
        %1751 = vst.msk [vmem:[#allocation2 + $0x1a8] sm:$0x3] %vm1699, 0.0
        %1752 = vst.msk [vmem:[#allocation2 + $0x1b0] sm:$0xff] %vm1145, 0.0
        %1753 = vst.msk [vmem:[#allocation2 + $0x1b8] sm:$0xff] %vm1145, 0.0
        %1754 = vst.msk [vmem:[#allocation2 + $0x1c0] sm:$0x3] %vm1699, 0.0
        %1755 = vst.msk [vmem:[#allocation2 + $0x1c8] sm:$0xff] %vm1145, 0.0
        %1756 = vst.msk [vmem:[#allocation2 + $0x1d0] sm:$0xff] %vm1145, 0.0
        %1757 = vst.msk [vmem:[#allocation2 + $0x1d8] sm:$0x3] %vm1699, 0.0
        %s1758 = scalar_lea.vmem [#allocation2], 48
        %1759 = vst.msk [vmem:[%s1758 + $0x1] sm:$0xff] %vm1145, %v1665
        %1760 = vst.msk [vmem:[%s1758 + $0x9] sm:$0xff] %vm1145, %v1666
        %1761 = vst.msk [vmem:[%s1758 + $0x19] sm:$0xff] %vm1145, %v1667
        %1762 = vst.msk [vmem:[%s1758 + $0x21] sm:$0xff] %vm1145, %v1668
        %1763 = vst.msk [vmem:[%s1758 + $0x31] sm:$0xff] %vm1145, %v1669
        %1764 = vst.msk [vmem:[%s1758 + $0x39] sm:$0xff] %vm1145, %v1670
        %1765 = vst.msk [vmem:[%s1758 + $0x49] sm:$0xff] %vm1145, %v1671
        %1766 = vst.msk [vmem:[%s1758 + $0x51] sm:$0xff] %vm1145, %v1672
        %1767 = vst.msk [vmem:[%s1758 + $0x61] sm:$0xff] %vm1145, %v1673
        %1768 = vst.msk [vmem:[%s1758 + $0x69] sm:$0xff] %vm1145, %v1674
        %1769 = vst.msk [vmem:[%s1758 + $0x79] sm:$0xff] %vm1145, %v1675
        %1770 = vst.msk [vmem:[%s1758 + $0x81] sm:$0xff] %vm1145, %v1676
        %1771 = vst.msk [vmem:[%s1758 + $0x91] sm:$0xff] %vm1145, %v1677
        %1772 = vst.msk [vmem:[%s1758 + $0x99] sm:$0xff] %vm1145, %v1678
        %1773 = vst.msk [vmem:[%s1758 + $0xa9] sm:$0xff] %vm1145, %v1679
        %1774 = vst.msk [vmem:[%s1758 + $0xb1] sm:$0xff] %vm1145, %v1680
        %1775 = vst.msk [vmem:[%s1758 + $0xc1] sm:$0xff] %vm1145, %v1681
        %1776 = vst.msk [vmem:[%s1758 + $0xc9] sm:$0xff] %vm1145, %v1682
        %1777 = vst.msk [vmem:[%s1758 + $0xd9] sm:$0xff] %vm1145, %v1683
        %1778 = vst.msk [vmem:[%s1758 + $0xe1] sm:$0xff] %vm1145, %v1684
        %1779 = vst.msk [vmem:[%s1758 + $0xf1] sm:$0xff] %vm1145, %v1685
        %1780 = vst.msk [vmem:[%s1758 + $0xf9] sm:$0xff] %vm1145, %v1686
        %1781 = vst.msk [vmem:[%s1758 + $0x109] sm:$0xff] %vm1145, %v1687
        %1782 = vst.msk [vmem:[%s1758 + $0x111] sm:$0xff] %vm1145, %v1688
        %1783 = vst.msk [vmem:[%s1758 + $0x121] sm:$0xff] %vm1145, %v1689
        %1784 = vst.msk [vmem:[%s1758 + $0x129] sm:$0xff] %vm1145, %v1690
        %1785 = vst.msk [vmem:[%s1758 + $0x139] sm:$0xff] %vm1145, %v1691
        %1786 = vst.msk [vmem:[%s1758 + $0x141] sm:$0xff] %vm1145, %v1692
        %1787 = vst.msk [vmem:[%s1758 + $0x151] sm:$0xff] %vm1145, %v1693
        %1788 = vst.msk [vmem:[%s1758 + $0x159] sm:$0xff] %vm1145, %v1694
        %1789 = vst.msk [vmem:[%s1758 + $0x169] sm:$0xff] %vm1145, %v1695
        %1790 = vst.msk [vmem:[%s1758 + $0x171] sm:$0xff] %vm1145, %v1696
        %v1791 = vld [vmem:[#allocation2] sm:$0xff]
        %v1792 = vld [vmem:[#allocation2 + $0x8] sm:$0xff]
        %v1793 = vld [vmem:[#allocation2 + $0x18] sm:$0xff]
        %v1794 = vld [vmem:[#allocation2 + $0x20] sm:$0xff]
        %v1795 = vld [vmem:[#allocation2 + $0x30] sm:$0xff]
        %v1796 = vld [vmem:[#allocation2 + $0x38] sm:$0xff]
        %v1797 = vld [vmem:[#allocation2 + $0x48] sm:$0xff]
        %v1798 = vld [vmem:[#allocation2 + $0x50] sm:$0xff]
        %v1799 = vld [vmem:[#allocation2 + $0x60] sm:$0xff]
        %v1800 = vld [vmem:[#allocation2 + $0x68] sm:$0xff]
        %v1801 = vld [vmem:[#allocation2 + $0x78] sm:$0xff]
        %v1802 = vld [vmem:[#allocation2 + $0x80] sm:$0xff]
        %v1803 = vld [vmem:[#allocation2 + $0x90] sm:$0xff]
        %v1804 = vld [vmem:[#allocation2 + $0x98] sm:$0xff]
        %v1805 = vld [vmem:[#allocation2 + $0xa8] sm:$0xff]
        %v1806 = vld [vmem:[#allocation2 + $0xb0] sm:$0xff]
        %v1807 = vld [vmem:[#allocation2 + $0xc0] sm:$0xff]
        %v1808 = vld [vmem:[#allocation2 + $0xc8] sm:$0xff]
        %v1809 = vld [vmem:[#allocation2 + $0xd8] sm:$0xff]
        %v1810 = vld [vmem:[#allocation2 + $0xe0] sm:$0xff]
        %v1811 = vld [vmem:[#allocation2 + $0xf0] sm:$0xff]
        %v1812 = vld [vmem:[#allocation2 + $0xf8] sm:$0xff]
        %v1813 = vld [vmem:[#allocation2 + $0x108] sm:$0xff]
        %v1814 = vld [vmem:[#allocation2 + $0x110] sm:$0xff]
        %v1815 = vld [vmem:[#allocation2 + $0x120] sm:$0xff]
        %v1816 = vld [vmem:[#allocation2 + $0x128] sm:$0xff]
        %v1817 = vld [vmem:[#allocation2 + $0x138] sm:$0xff]
        %v1818 = vld [vmem:[#allocation2 + $0x140] sm:$0xff]
        %v1819 = vld [vmem:[#allocation2 + $0x150] sm:$0xff]
        %v1820 = vld [vmem:[#allocation2 + $0x158] sm:$0xff]
        %v1821 = vld [vmem:[#allocation2 + $0x168] sm:$0xff]
        %v1822 = vld [vmem:[#allocation2 + $0x170] sm:$0xff]
        %v1823 = vpack.c.bf16 %v1792, %v1791
        %v1824 = vpack.c.bf16 %v1794, %v1793
        %v1825 = vpack.c.bf16 %v1796, %v1795
        %v1826 = vpack.c.bf16 %v1798, %v1797
        %v1827 = vpack.c.bf16 %v1800, %v1799
        %v1828 = vpack.c.bf16 %v1802, %v1801
        %v1829 = vpack.c.bf16 %v1804, %v1803
        %v1830 = vpack.c.bf16 %v1806, %v1805
        %v1831 = vpack.c.bf16 %v1808, %v1807
        %v1832 = vpack.c.bf16 %v1810, %v1809
        %v1833 = vpack.c.bf16 %v1812, %v1811
        %v1834 = vpack.c.bf16 %v1814, %v1813
        %v1835 = vpack.c.bf16 %v1816, %v1815
        %v1836 = vpack.c.bf16 %v1818, %v1817
        %v1837 = vpack.c.bf16 %v1820, %v1819
        %v1838 = vpack.c.bf16 %v1822, %v1821
        %v1839 = vld [vmem:[#allocation2 + $0x1] sm:$0xff]
        %v1840 = vld [vmem:[#allocation2 + $0x9] sm:$0xff]
        %v1841 = vld [vmem:[#allocation2 + $0x19] sm:$0xff]
        %v1842 = vld [vmem:[#allocation2 + $0x21] sm:$0xff]
        %v1843 = vld [vmem:[#allocation2 + $0x31] sm:$0xff]
        %v1844 = vld [vmem:[#allocation2 + $0x39] sm:$0xff]
        %v1845 = vld [vmem:[#allocation2 + $0x49] sm:$0xff]
        %v1846 = vld [vmem:[#allocation2 + $0x51] sm:$0xff]
        %v1847 = vld [vmem:[#allocation2 + $0x61] sm:$0xff]
        %v1848 = vld [vmem:[#allocation2 + $0x69] sm:$0xff]
        %v1849 = vld [vmem:[#allocation2 + $0x79] sm:$0xff]
        %v1850 = vld [vmem:[#allocation2 + $0x81] sm:$0xff]
        %v1851 = vld [vmem:[#allocation2 + $0x91] sm:$0xff]
        %v1852 = vld [vmem:[#allocation2 + $0x99] sm:$0xff]
        %v1853 = vld [vmem:[#allocation2 + $0xa9] sm:$0xff]
        %v1854 = vld [vmem:[#allocation2 + $0xb1] sm:$0xff]
        %v1855 = vld [vmem:[#allocation2 + $0xc1] sm:$0xff]
        %v1856 = vld [vmem:[#allocation2 + $0xc9] sm:$0xff]
        %v1857 = vld [vmem:[#allocation2 + $0xd9] sm:$0xff]
        %v1858 = vld [vmem:[#allocation2 + $0xe1] sm:$0xff]
        %v1859 = vld [vmem:[#allocation2 + $0xf1] sm:$0xff]
        %v1860 = vld [vmem:[#allocation2 + $0xf9] sm:$0xff]
        %v1861 = vld [vmem:[#allocation2 + $0x109] sm:$0xff]
        %v1862 = vld [vmem:[#allocation2 + $0x111] sm:$0xff]
        %v1863 = vld [vmem:[#allocation2 + $0x121] sm:$0xff]
        %v1864 = vld [vmem:[#allocation2 + $0x129] sm:$0xff]
        %v1865 = vld [vmem:[#allocation2 + $0x139] sm:$0xff]
        %v1866 = vld [vmem:[#allocation2 + $0x141] sm:$0xff]
        %v1867 = vld [vmem:[#allocation2 + $0x151] sm:$0xff]
        %v1868 = vld [vmem:[#allocation2 + $0x159] sm:$0xff]
        %v1869 = vld [vmem:[#allocation2 + $0x169] sm:$0xff]
        %v1870 = vld [vmem:[#allocation2 + $0x171] sm:$0xff]
        %v1871 = vpack.c.bf16 %v1840, %v1839
        %v1872 = vpack.c.bf16 %v1842, %v1841
        %v1873 = vpack.c.bf16 %v1844, %v1843
        %v1874 = vpack.c.bf16 %v1846, %v1845
        %v1875 = vpack.c.bf16 %v1848, %v1847
        %v1876 = vpack.c.bf16 %v1850, %v1849
        %v1877 = vpack.c.bf16 %v1852, %v1851
        %v1878 = vpack.c.bf16 %v1854, %v1853
        %v1879 = vpack.c.bf16 %v1856, %v1855
        %v1880 = vpack.c.bf16 %v1858, %v1857
        %v1881 = vpack.c.bf16 %v1860, %v1859
        %v1882 = vpack.c.bf16 %v1862, %v1861
        %v1883 = vpack.c.bf16 %v1864, %v1863
        %v1884 = vpack.c.bf16 %v1866, %v1865
        %v1885 = vpack.c.bf16 %v1868, %v1867
        %v1886 = vpack.c.bf16 %v1870, %v1869
        %v1887 = vld [vmem:[#allocation2 + $0x2] sm:$0xff]
        %v1888 = vld [vmem:[#allocation2 + $0xa] sm:$0xff]
        %v1889 = vld [vmem:[#allocation2 + $0x1a] sm:$0xff]
        %v1890 = vld [vmem:[#allocation2 + $0x22] sm:$0xff]
        %v1891 = vld [vmem:[#allocation2 + $0x32] sm:$0xff]
        %v1892 = vld [vmem:[#allocation2 + $0x3a] sm:$0xff]
        %v1893 = vld [vmem:[#allocation2 + $0x4a] sm:$0xff]
        %v1894 = vld [vmem:[#allocation2 + $0x52] sm:$0xff]
        %v1895 = vld [vmem:[#allocation2 + $0x62] sm:$0xff]
        %v1896 = vld [vmem:[#allocation2 + $0x6a] sm:$0xff]
        %v1897 = vld [vmem:[#allocation2 + $0x7a] sm:$0xff]
        %v1898 = vld [vmem:[#allocation2 + $0x82] sm:$0xff]
        %v1899 = vld [vmem:[#allocation2 + $0x92] sm:$0xff]
        %v1900 = vld [vmem:[#allocation2 + $0x9a] sm:$0xff]
        %v1901 = vld [vmem:[#allocation2 + $0xaa] sm:$0xff]
        %v1902 = vld [vmem:[#allocation2 + $0xb2] sm:$0xff]
        %v1903 = vld [vmem:[#allocation2 + $0xc2] sm:$0xff]
        %v1904 = vld [vmem:[#allocation2 + $0xca] sm:$0xff]
        %v1905 = vld [vmem:[#allocation2 + $0xda] sm:$0xff]
        %v1906 = vld [vmem:[#allocation2 + $0xe2] sm:$0xff]
        %v1907 = vld [vmem:[#allocation2 + $0xf2] sm:$0xff]
        %v1908 = vld [vmem:[#allocation2 + $0xfa] sm:$0xff]
        %v1909 = vld [vmem:[#allocation2 + $0x10a] sm:$0xff]
        %v1910 = vld [vmem:[#allocation2 + $0x112] sm:$0xff]
        %v1911 = vld [vmem:[#allocation2 + $0x122] sm:$0xff]
        %v1912 = vld [vmem:[#allocation2 + $0x12a] sm:$0xff]
        %v1913 = vld [vmem:[#allocation2 + $0x13a] sm:$0xff]
        %v1914 = vld [vmem:[#allocation2 + $0x142] sm:$0xff]
        %v1915 = vld [vmem:[#allocation2 + $0x152] sm:$0xff]
        %v1916 = vld [vmem:[#allocation2 + $0x15a] sm:$0xff]
        %v1917 = vld [vmem:[#allocation2 + $0x16a] sm:$0xff]
        %v1918 = vld [vmem:[#allocation2 + $0x172] sm:$0xff]
        %v1919 = vpack.c.bf16 %v1888, %v1887
        %v1920 = vpack.c.bf16 %v1890, %v1889
        %v1921 = vpack.c.bf16 %v1892, %v1891
        %v1922 = vpack.c.bf16 %v1894, %v1893
        %v1923 = vpack.c.bf16 %v1896, %v1895
        %v1924 = vpack.c.bf16 %v1898, %v1897
        %v1925 = vpack.c.bf16 %v1900, %v1899
        %v1926 = vpack.c.bf16 %v1902, %v1901
        %v1927 = vpack.c.bf16 %v1904, %v1903
        %v1928 = vpack.c.bf16 %v1906, %v1905
        %v1929 = vpack.c.bf16 %v1908, %v1907
        %v1930 = vpack.c.bf16 %v1910, %v1909
        %v1931 = vpack.c.bf16 %v1912, %v1911
        %v1932 = vpack.c.bf16 %v1914, %v1913
        %v1933 = vpack.c.bf16 %v1916, %v1915
        %v1934 = vpack.c.bf16 %v1918, %v1917
        %v1935 = vld [vmem:[%s1758] sm:$0xff]
        %v1936 = vld [vmem:[%s1758 + $0x8] sm:$0xff]
        %v1937 = vld [vmem:[%s1758 + $0x18] sm:$0xff]
        %v1938 = vld [vmem:[%s1758 + $0x20] sm:$0xff]
        %v1939 = vld [vmem:[%s1758 + $0x30] sm:$0xff]
        %v1940 = vld [vmem:[%s1758 + $0x38] sm:$0xff]
        %v1941 = vld [vmem:[%s1758 + $0x48] sm:$0xff]
        %v1942 = vld [vmem:[%s1758 + $0x50] sm:$0xff]
        %v1943 = vld [vmem:[%s1758 + $0x60] sm:$0xff]
        %v1944 = vld [vmem:[%s1758 + $0x68] sm:$0xff]
        %v1945 = vld [vmem:[%s1758 + $0x78] sm:$0xff]
        %v1946 = vld [vmem:[%s1758 + $0x80] sm:$0xff]
        %v1947 = vld [vmem:[%s1758 + $0x90] sm:$0xff]
        %v1948 = vld [vmem:[%s1758 + $0x98] sm:$0xff]
        %v1949 = vld [vmem:[%s1758 + $0xa8] sm:$0xff]
        %v1950 = vld [vmem:[%s1758 + $0xb0] sm:$0xff]
        %v1951 = vld [vmem:[%s1758 + $0xc0] sm:$0xff]
        %v1952 = vld [vmem:[%s1758 + $0xc8] sm:$0xff]
        %v1953 = vld [vmem:[%s1758 + $0xd8] sm:$0xff]
        %v1954 = vld [vmem:[%s1758 + $0xe0] sm:$0xff]
        %v1955 = vld [vmem:[%s1758 + $0xf0] sm:$0xff]
        %v1956 = vld [vmem:[%s1758 + $0xf8] sm:$0xff]
        %v1957 = vld [vmem:[%s1758 + $0x108] sm:$0xff]
        %v1958 = vld [vmem:[%s1758 + $0x110] sm:$0xff]
        %v1959 = vld [vmem:[%s1758 + $0x120] sm:$0xff]
        %v1960 = vld [vmem:[%s1758 + $0x128] sm:$0xff]
        %v1961 = vld [vmem:[%s1758 + $0x138] sm:$0xff]
        %v1962 = vld [vmem:[%s1758 + $0x140] sm:$0xff]
        %v1963 = vld [vmem:[%s1758 + $0x150] sm:$0xff]
        %v1964 = vld [vmem:[%s1758 + $0x158] sm:$0xff]
        %v1965 = vld [vmem:[%s1758 + $0x168] sm:$0xff]
        %v1966 = vld [vmem:[%s1758 + $0x170] sm:$0xff]
        %v1967 = vpack.c.bf16 %v1936, %v1935
        %v1968 = vpack.c.bf16 %v1938, %v1937
        %v1969 = vpack.c.bf16 %v1940, %v1939
        %v1970 = vpack.c.bf16 %v1942, %v1941
        %v1971 = vpack.c.bf16 %v1944, %v1943
        %v1972 = vpack.c.bf16 %v1946, %v1945
        %v1973 = vpack.c.bf16 %v1948, %v1947
        %v1974 = vpack.c.bf16 %v1950, %v1949
        %v1975 = vpack.c.bf16 %v1952, %v1951
        %v1976 = vpack.c.bf16 %v1954, %v1953
        %v1977 = vpack.c.bf16 %v1956, %v1955
        %v1978 = vpack.c.bf16 %v1958, %v1957
        %v1979 = vpack.c.bf16 %v1960, %v1959
        %v1980 = vpack.c.bf16 %v1962, %v1961
        %v1981 = vpack.c.bf16 %v1964, %v1963
        %v1982 = vpack.c.bf16 %v1966, %v1965
        %v1983 = vld [vmem:[%s1758 + $0x1] sm:$0xff]
        %v1984 = vld [vmem:[%s1758 + $0x9] sm:$0xff]
        %v1985 = vld [vmem:[%s1758 + $0x19] sm:$0xff]
        %v1986 = vld [vmem:[%s1758 + $0x21] sm:$0xff]
        %v1987 = vld [vmem:[%s1758 + $0x31] sm:$0xff]
        %v1988 = vld [vmem:[%s1758 + $0x39] sm:$0xff]
        %v1989 = vld [vmem:[%s1758 + $0x49] sm:$0xff]
        %v1990 = vld [vmem:[%s1758 + $0x51] sm:$0xff]
        %v1991 = vld [vmem:[%s1758 + $0x61] sm:$0xff]
        %v1992 = vld [vmem:[%s1758 + $0x69] sm:$0xff]
        %v1993 = vld [vmem:[%s1758 + $0x79] sm:$0xff]
        %v1994 = vld [vmem:[%s1758 + $0x81] sm:$0xff]
        %v1995 = vld [vmem:[%s1758 + $0x91] sm:$0xff]
        %v1996 = vld [vmem:[%s1758 + $0x99] sm:$0xff]
        %v1997 = vld [vmem:[%s1758 + $0xa9] sm:$0xff]
        %v1998 = vld [vmem:[%s1758 + $0xb1] sm:$0xff]
        %v1999 = vld [vmem:[%s1758 + $0xc1] sm:$0xff]
        %v2000 = vld [vmem:[%s1758 + $0xc9] sm:$0xff]
        %v2001 = vld [vmem:[%s1758 + $0xd9] sm:$0xff]
        %v2002 = vld [vmem:[%s1758 + $0xe1] sm:$0xff]
        %v2003 = vld [vmem:[%s1758 + $0xf1] sm:$0xff]
        %v2004 = vld [vmem:[%s1758 + $0xf9] sm:$0xff]
        %v2005 = vld [vmem:[%s1758 + $0x109] sm:$0xff]
        %v2006 = vld [vmem:[%s1758 + $0x111] sm:$0xff]
        %v2007 = vld [vmem:[%s1758 + $0x121] sm:$0xff]
        %v2008 = vld [vmem:[%s1758 + $0x129] sm:$0xff]
        %v2009 = vld [vmem:[%s1758 + $0x139] sm:$0xff]
        %v2010 = vld [vmem:[%s1758 + $0x141] sm:$0xff]
        %v2011 = vld [vmem:[%s1758 + $0x151] sm:$0xff]
        %v2012 = vld [vmem:[%s1758 + $0x159] sm:$0xff]
        %v2013 = vld [vmem:[%s1758 + $0x169] sm:$0xff]
        %v2014 = vld [vmem:[%s1758 + $0x171] sm:$0xff]
        %v2015 = vpack.c.bf16 %v1984, %v1983
        %v2016 = vpack.c.bf16 %v1986, %v1985
        %v2017 = vpack.c.bf16 %v1988, %v1987
        %v2018 = vpack.c.bf16 %v1990, %v1989
        %v2019 = vpack.c.bf16 %v1992, %v1991
        %v2020 = vpack.c.bf16 %v1994, %v1993
        %v2021 = vpack.c.bf16 %v1996, %v1995
        %v2022 = vpack.c.bf16 %v1998, %v1997
        %v2023 = vpack.c.bf16 %v2000, %v1999
        %v2024 = vpack.c.bf16 %v2002, %v2001
        %v2025 = vpack.c.bf16 %v2004, %v2003
        %v2026 = vpack.c.bf16 %v2006, %v2005
        %v2027 = vpack.c.bf16 %v2008, %v2007
        %v2028 = vpack.c.bf16 %v2010, %v2009
        %v2029 = vpack.c.bf16 %v2012, %v2011
        %v2030 = vpack.c.bf16 %v2014, %v2013
        %v2031 = vld [vmem:[%s1758 + $0x2] sm:$0xff]
        %v2032 = vld [vmem:[%s1758 + $0xa] sm:$0xff]
        %v2033 = vld [vmem:[%s1758 + $0x1a] sm:$0xff]
        %v2034 = vld [vmem:[%s1758 + $0x22] sm:$0xff]
        %v2035 = vld [vmem:[%s1758 + $0x32] sm:$0xff]
        %v2036 = vld [vmem:[%s1758 + $0x3a] sm:$0xff]
        %v2037 = vld [vmem:[%s1758 + $0x4a] sm:$0xff]
        %v2038 = vld [vmem:[%s1758 + $0x52] sm:$0xff]
        %v2039 = vld [vmem:[%s1758 + $0x62] sm:$0xff]
        %v2040 = vld [vmem:[%s1758 + $0x6a] sm:$0xff]
        %v2041 = vld [vmem:[%s1758 + $0x7a] sm:$0xff]
        %v2042 = vld [vmem:[%s1758 + $0x82] sm:$0xff]
        %v2043 = vld [vmem:[%s1758 + $0x92] sm:$0xff]
        %v2044 = vld [vmem:[%s1758 + $0x9a] sm:$0xff]
        %v2045 = vld [vmem:[%s1758 + $0xaa] sm:$0xff]
        %v2046 = vld [vmem:[%s1758 + $0xb2] sm:$0xff]
        %v2047 = vld [vmem:[%s1758 + $0xc2] sm:$0xff]
        %v2048 = vld [vmem:[%s1758 + $0xca] sm:$0xff]
        %v2049 = vld [vmem:[%s1758 + $0xda] sm:$0xff]
        %v2050 = vld [vmem:[%s1758 + $0xe2] sm:$0xff]
        %v2051 = vld [vmem:[%s1758 + $0xf2] sm:$0xff]
        %v2052 = vld [vmem:[%s1758 + $0xfa] sm:$0xff]
        %v2053 = vld [vmem:[%s1758 + $0x10a] sm:$0xff]
        %v2054 = vld [vmem:[%s1758 + $0x112] sm:$0xff]
        %v2055 = vld [vmem:[%s1758 + $0x122] sm:$0xff]
        %v2056 = vld [vmem:[%s1758 + $0x12a] sm:$0xff]
        %v2057 = vld [vmem:[%s1758 + $0x13a] sm:$0xff]
        %v2058 = vld [vmem:[%s1758 + $0x142] sm:$0xff]
        %v2059 = vld [vmem:[%s1758 + $0x152] sm:$0xff]
        %v2060 = vld [vmem:[%s1758 + $0x15a] sm:$0xff]
        %v2061 = vld [vmem:[%s1758 + $0x16a] sm:$0xff]
        %v2062 = vld [vmem:[%s1758 + $0x172] sm:$0xff]
        %v2063 = vpack.c.bf16 %v2032, %v2031
        %v2064 = vpack.c.bf16 %v2034, %v2033
        %v2065 = vpack.c.bf16 %v2036, %v2035
        %v2066 = vpack.c.bf16 %v2038, %v2037
        %v2067 = vpack.c.bf16 %v2040, %v2039
        %v2068 = vpack.c.bf16 %v2042, %v2041
        %v2069 = vpack.c.bf16 %v2044, %v2043
        %v2070 = vpack.c.bf16 %v2046, %v2045
        %v2071 = vpack.c.bf16 %v2048, %v2047
        %v2072 = vpack.c.bf16 %v2050, %v2049
        %v2073 = vpack.c.bf16 %v2052, %v2051
        %v2074 = vpack.c.bf16 %v2054, %v2053
        %v2075 = vpack.c.bf16 %v2056, %v2055
        %v2076 = vpack.c.bf16 %v2058, %v2057
        %v2077 = vpack.c.bf16 %v2060, %v2059
        %v2078 = vpack.c.bf16 %v2062, %v2061
        %s2079 = scalar_lea.vmem [#allocation2], 96
        %v2080 = vld [vmem:[%s2079] sm:$0xff]
        %v2081 = vld [vmem:[%s2079 + $0x8] sm:$0xff]
        %v2082 = vld [vmem:[%s2079 + $0x18] sm:$0xff]
        %v2083 = vld [vmem:[%s2079 + $0x20] sm:$0xff]
        %v2084 = vld [vmem:[%s2079 + $0x30] sm:$0xff]
        %v2085 = vld [vmem:[%s2079 + $0x38] sm:$0xff]
        %v2086 = vld [vmem:[%s2079 + $0x48] sm:$0xff]
        %v2087 = vld [vmem:[%s2079 + $0x50] sm:$0xff]
        %v2088 = vld [vmem:[%s2079 + $0x60] sm:$0xff]
        %v2089 = vld [vmem:[%s2079 + $0x68] sm:$0xff]
        %v2090 = vld [vmem:[%s2079 + $0x78] sm:$0xff]
        %v2091 = vld [vmem:[%s2079 + $0x80] sm:$0xff]
        %v2092 = vld [vmem:[%s2079 + $0x90] sm:$0xff]
        %v2093 = vld [vmem:[%s2079 + $0x98] sm:$0xff]
        %v2094 = vld [vmem:[%s2079 + $0xa8] sm:$0xff]
        %v2095 = vld [vmem:[%s2079 + $0xb0] sm:$0xff]
        %v2096 = vld [vmem:[%s2079 + $0xc0] sm:$0xff]
        %v2097 = vld [vmem:[%s2079 + $0xc8] sm:$0xff]
        %v2098 = vld [vmem:[%s2079 + $0xd8] sm:$0xff]
        %v2099 = vld [vmem:[%s2079 + $0xe0] sm:$0xff]
        %v2100 = vld [vmem:[%s2079 + $0xf0] sm:$0xff]
        %v2101 = vld [vmem:[%s2079 + $0xf8] sm:$0xff]
        %v2102 = vld [vmem:[%s2079 + $0x108] sm:$0xff]
        %v2103 = vld [vmem:[%s2079 + $0x110] sm:$0xff]
        %v2104 = vld [vmem:[%s2079 + $0x120] sm:$0xff]
        %v2105 = vld [vmem:[%s2079 + $0x128] sm:$0xff]
        %v2106 = vld [vmem:[%s2079 + $0x138] sm:$0xff]
        %v2107 = vld [vmem:[%s2079 + $0x140] sm:$0xff]
        %v2108 = vld [vmem:[%s2079 + $0x150] sm:$0xff]
        %v2109 = vld [vmem:[%s2079 + $0x158] sm:$0xff]
        %v2110 = vld [vmem:[%s2079 + $0x168] sm:$0xff]
        %v2111 = vld [vmem:[%s2079 + $0x170] sm:$0xff]
        %v2112 = vpack.c.bf16 %v2081, %v2080
        %v2113 = vpack.c.bf16 %v2083, %v2082
        %v2114 = vpack.c.bf16 %v2085, %v2084
        %v2115 = vpack.c.bf16 %v2087, %v2086
        %v2116 = vpack.c.bf16 %v2089, %v2088
        %v2117 = vpack.c.bf16 %v2091, %v2090
        %v2118 = vpack.c.bf16 %v2093, %v2092
        %v2119 = vpack.c.bf16 %v2095, %v2094
        %v2120 = vpack.c.bf16 %v2097, %v2096
        %v2121 = vpack.c.bf16 %v2099, %v2098
        %v2122 = vpack.c.bf16 %v2101, %v2100
        %v2123 = vpack.c.bf16 %v2103, %v2102
        %v2124 = vpack.c.bf16 %v2105, %v2104
        %v2125 = vpack.c.bf16 %v2107, %v2106
        %v2126 = vpack.c.bf16 %v2109, %v2108
        %v2127 = vpack.c.bf16 %v2111, %v2110
        %v2128 = vld [vmem:[%s2079 + $0x1] sm:$0xff]
        %v2129 = vld [vmem:[%s2079 + $0x9] sm:$0xff]
        %v2130 = vld [vmem:[%s2079 + $0x19] sm:$0xff]
        %v2131 = vld [vmem:[%s2079 + $0x21] sm:$0xff]
        %v2132 = vld [vmem:[%s2079 + $0x31] sm:$0xff]
        %v2133 = vld [vmem:[%s2079 + $0x39] sm:$0xff]
        %v2134 = vld [vmem:[%s2079 + $0x49] sm:$0xff]
        %v2135 = vld [vmem:[%s2079 + $0x51] sm:$0xff]
        %v2136 = vld [vmem:[%s2079 + $0x61] sm:$0xff]
        %v2137 = vld [vmem:[%s2079 + $0x69] sm:$0xff]
        %v2138 = vld [vmem:[%s2079 + $0x79] sm:$0xff]
        %v2139 = vld [vmem:[%s2079 + $0x81] sm:$0xff]
        %v2140 = vld [vmem:[%s2079 + $0x91] sm:$0xff]
        %v2141 = vld [vmem:[%s2079 + $0x99] sm:$0xff]
        %v2142 = vld [vmem:[%s2079 + $0xa9] sm:$0xff]
        %v2143 = vld [vmem:[%s2079 + $0xb1] sm:$0xff]
        %v2144 = vld [vmem:[%s2079 + $0xc1] sm:$0xff]
        %v2145 = vld [vmem:[%s2079 + $0xc9] sm:$0xff]
        %v2146 = vld [vmem:[%s2079 + $0xd9] sm:$0xff]
        %v2147 = vld [vmem:[%s2079 + $0xe1] sm:$0xff]
        %v2148 = vld [vmem:[%s2079 + $0xf1] sm:$0xff]
        %v2149 = vld [vmem:[%s2079 + $0xf9] sm:$0xff]
        %v2150 = vld [vmem:[%s2079 + $0x109] sm:$0xff]
        %v2151 = vld [vmem:[%s2079 + $0x111] sm:$0xff]
        %v2152 = vld [vmem:[%s2079 + $0x121] sm:$0xff]
        %v2153 = vld [vmem:[%s2079 + $0x129] sm:$0xff]
        %v2154 = vld [vmem:[%s2079 + $0x139] sm:$0xff]
        %v2155 = vld [vmem:[%s2079 + $0x141] sm:$0xff]
        %v2156 = vld [vmem:[%s2079 + $0x151] sm:$0xff]
        %v2157 = vld [vmem:[%s2079 + $0x159] sm:$0xff]
        %v2158 = vld [vmem:[%s2079 + $0x169] sm:$0xff]
        %v2159 = vld [vmem:[%s2079 + $0x171] sm:$0xff]
        %v2160 = vpack.c.bf16 %v2129, %v2128
        %v2161 = vpack.c.bf16 %v2131, %v2130
        %v2162 = vpack.c.bf16 %v2133, %v2132
        %v2163 = vpack.c.bf16 %v2135, %v2134
        %v2164 = vpack.c.bf16 %v2137, %v2136
        %v2165 = vpack.c.bf16 %v2139, %v2138
        %v2166 = vpack.c.bf16 %v2141, %v2140
        %v2167 = vpack.c.bf16 %v2143, %v2142
        %v2168 = vpack.c.bf16 %v2145, %v2144
        %v2169 = vpack.c.bf16 %v2147, %v2146
        %v2170 = vpack.c.bf16 %v2149, %v2148
        %v2171 = vpack.c.bf16 %v2151, %v2150
        %v2172 = vpack.c.bf16 %v2153, %v2152
        %v2173 = vpack.c.bf16 %v2155, %v2154
        %v2174 = vpack.c.bf16 %v2157, %v2156
        %v2175 = vpack.c.bf16 %v2159, %v2158
        %v2176 = vld [vmem:[%s2079 + $0x2] sm:$0xff]
        %v2177 = vld [vmem:[%s2079 + $0xa] sm:$0xff]
        %v2178 = vld [vmem:[%s2079 + $0x1a] sm:$0xff]
        %v2179 = vld [vmem:[%s2079 + $0x22] sm:$0xff]
        %v2180 = vld [vmem:[%s2079 + $0x32] sm:$0xff]
        %v2181 = vld [vmem:[%s2079 + $0x3a] sm:$0xff]
        %v2182 = vld [vmem:[%s2079 + $0x4a] sm:$0xff]
        %v2183 = vld [vmem:[%s2079 + $0x52] sm:$0xff]
        %v2184 = vld [vmem:[%s2079 + $0x62] sm:$0xff]
        %v2185 = vld [vmem:[%s2079 + $0x6a] sm:$0xff]
        %v2186 = vld [vmem:[%s2079 + $0x7a] sm:$0xff]
        %v2187 = vld [vmem:[%s2079 + $0x82] sm:$0xff]
        %v2188 = vld [vmem:[%s2079 + $0x92] sm:$0xff]
        %v2189 = vld [vmem:[%s2079 + $0x9a] sm:$0xff]
        %v2190 = vld [vmem:[%s2079 + $0xaa] sm:$0xff]
        %v2191 = vld [vmem:[%s2079 + $0xb2] sm:$0xff]
        %v2192 = vld [vmem:[%s2079 + $0xc2] sm:$0xff]
        %v2193 = vld [vmem:[%s2079 + $0xca] sm:$0xff]
        %v2194 = vld [vmem:[%s2079 + $0xda] sm:$0xff]
        %v2195 = vld [vmem:[%s2079 + $0xe2] sm:$0xff]
        %v2196 = vld [vmem:[%s2079 + $0xf2] sm:$0xff]
        %v2197 = vld [vmem:[%s2079 + $0xfa] sm:$0xff]
        %v2198 = vld [vmem:[%s2079 + $0x10a] sm:$0xff]
        %v2199 = vld [vmem:[%s2079 + $0x112] sm:$0xff]
        %v2200 = vld [vmem:[%s2079 + $0x122] sm:$0xff]
        %v2201 = vld [vmem:[%s2079 + $0x12a] sm:$0xff]
        %v2202 = vld [vmem:[%s2079 + $0x13a] sm:$0xff]
        %v2203 = vld [vmem:[%s2079 + $0x142] sm:$0xff]
        %v2204 = vld [vmem:[%s2079 + $0x152] sm:$0xff]
        %v2205 = vld [vmem:[%s2079 + $0x15a] sm:$0xff]
        %v2206 = vld [vmem:[%s2079 + $0x16a] sm:$0xff]
        %v2207 = vld [vmem:[%s2079 + $0x172] sm:$0xff]
        %v2208 = vpack.c.bf16 %v2177, %v2176
        %v2209 = vpack.c.bf16 %v2179, %v2178
        %v2210 = vpack.c.bf16 %v2181, %v2180
        %v2211 = vpack.c.bf16 %v2183, %v2182
        %v2212 = vpack.c.bf16 %v2185, %v2184
        %v2213 = vpack.c.bf16 %v2187, %v2186
        %v2214 = vpack.c.bf16 %v2189, %v2188
        %v2215 = vpack.c.bf16 %v2191, %v2190
        %v2216 = vpack.c.bf16 %v2193, %v2192
        %v2217 = vpack.c.bf16 %v2195, %v2194
        %v2218 = vpack.c.bf16 %v2197, %v2196
        %v2219 = vpack.c.bf16 %v2199, %v2198
        %v2220 = vpack.c.bf16 %v2201, %v2200
        %v2221 = vpack.c.bf16 %v2203, %v2202
        %v2222 = vpack.c.bf16 %v2205, %v2204
        %v2223 = vpack.c.bf16 %v2207, %v2206
        %2240 = vrot.lane.b32.xlu0 %v1871, 8
        %v2241 = vpop.permute.xlu0 %2240
        %2242 = vrot.lane.b32.xlu0 %v1872, 8
        %v2243 = vpop.permute.xlu0 %2242
        %2244 = vrot.lane.b32.xlu0 %v1873, 8
        %v2245 = vpop.permute.xlu0 %2244
        %2246 = vrot.lane.b32.xlu0 %v1874, 8
        %v2247 = vpop.permute.xlu0 %2246
        %2248 = vrot.lane.b32.xlu0 %v1875, 8
        %v2249 = vpop.permute.xlu0 %2248
        %2250 = vrot.lane.b32.xlu0 %v1876, 8
        %v2251 = vpop.permute.xlu0 %2250
        %2252 = vrot.lane.b32.xlu0 %v1877, 8
        %v2253 = vpop.permute.xlu0 %2252
        %2254 = vrot.lane.b32.xlu0 %v1878, 8
        %v2255 = vpop.permute.xlu0 %2254
        %2256 = vrot.lane.b32.xlu0 %v1879, 8
        %v2257 = vpop.permute.xlu0 %2256
        %2258 = vrot.lane.b32.xlu0 %v1880, 8
        %v2259 = vpop.permute.xlu0 %2258
        %2260 = vrot.lane.b32.xlu0 %v1881, 8
        %v2261 = vpop.permute.xlu0 %2260
        %2262 = vrot.lane.b32.xlu0 %v1882, 8
        %v2263 = vpop.permute.xlu0 %2262
        %2264 = vrot.lane.b32.xlu0 %v1883, 8
        %v2265 = vpop.permute.xlu0 %2264
        %2266 = vrot.lane.b32.xlu0 %v1884, 8
        %v2267 = vpop.permute.xlu0 %2266
        %2268 = vrot.lane.b32.xlu0 %v1885, 8
        %v2269 = vpop.permute.xlu0 %2268
        %2270 = vrot.lane.b32.xlu0 %v1886, 8
        %v2271 = vpop.permute.xlu0 %2270
        %2288 = vrot.lane.b32.xlu0 %v1919, 16
        %v2289 = vpop.permute.xlu0 %2288
        %2290 = vrot.lane.b32.xlu0 %v1920, 16
        %v2291 = vpop.permute.xlu0 %2290
        %2292 = vrot.lane.b32.xlu0 %v1921, 16
        %v2293 = vpop.permute.xlu0 %2292
        %2294 = vrot.lane.b32.xlu0 %v1922, 16
        %v2295 = vpop.permute.xlu0 %2294
        %2296 = vrot.lane.b32.xlu0 %v1923, 16
        %v2297 = vpop.permute.xlu0 %2296
        %2298 = vrot.lane.b32.xlu0 %v1924, 16
        %v2299 = vpop.permute.xlu0 %2298
        %2300 = vrot.lane.b32.xlu0 %v1925, 16
        %v2301 = vpop.permute.xlu0 %2300
        %2302 = vrot.lane.b32.xlu0 %v1926, 16
        %v2303 = vpop.permute.xlu0 %2302
        %2304 = vrot.lane.b32.xlu0 %v1927, 16
        %v2305 = vpop.permute.xlu0 %2304
        %2306 = vrot.lane.b32.xlu0 %v1928, 16
        %v2307 = vpop.permute.xlu0 %2306
        %2308 = vrot.lane.b32.xlu0 %v1929, 16
        %v2309 = vpop.permute.xlu0 %2308
        %2310 = vrot.lane.b32.xlu0 %v1930, 16
        %v2311 = vpop.permute.xlu0 %2310
        %2312 = vrot.lane.b32.xlu0 %v1931, 16
        %v2313 = vpop.permute.xlu0 %2312
        %2314 = vrot.lane.b32.xlu0 %v1932, 16
        %v2315 = vpop.permute.xlu0 %2314
        %2316 = vrot.lane.b32.xlu0 %v1933, 16
        %v2317 = vpop.permute.xlu0 %2316
        %2318 = vrot.lane.b32.xlu0 %v1934, 16
        %v2319 = vpop.permute.xlu0 %2318
        %2336 = vrot.lane.b32.xlu0 %v1967, 24
        %v2337 = vpop.permute.xlu0 %2336
        %2338 = vrot.lane.b32.xlu0 %v1968, 24
        %v2339 = vpop.permute.xlu0 %2338
        %2340 = vrot.lane.b32.xlu0 %v1969, 24
        %v2341 = vpop.permute.xlu0 %2340
        %2342 = vrot.lane.b32.xlu0 %v1970, 24
        %v2343 = vpop.permute.xlu0 %2342
        %2344 = vrot.lane.b32.xlu0 %v1971, 24
        %v2345 = vpop.permute.xlu0 %2344
        %2346 = vrot.lane.b32.xlu0 %v1972, 24
        %v2347 = vpop.permute.xlu0 %2346
        %2348 = vrot.lane.b32.xlu0 %v1973, 24
        %v2349 = vpop.permute.xlu0 %2348
        %2350 = vrot.lane.b32.xlu0 %v1974, 24
        %v2351 = vpop.permute.xlu0 %2350
        %2352 = vrot.lane.b32.xlu0 %v1975, 24
        %v2353 = vpop.permute.xlu0 %2352
        %2354 = vrot.lane.b32.xlu0 %v1976, 24
        %v2355 = vpop.permute.xlu0 %2354
        %2356 = vrot.lane.b32.xlu0 %v1977, 24
        %v2357 = vpop.permute.xlu0 %2356
        %2358 = vrot.lane.b32.xlu0 %v1978, 24
        %v2359 = vpop.permute.xlu0 %2358
        %2360 = vrot.lane.b32.xlu0 %v1979, 24
        %v2361 = vpop.permute.xlu0 %2360
        %2362 = vrot.lane.b32.xlu0 %v1980, 24
        %v2363 = vpop.permute.xlu0 %2362
        %2364 = vrot.lane.b32.xlu0 %v1981, 24
        %v2365 = vpop.permute.xlu0 %2364
        %2366 = vrot.lane.b32.xlu0 %v1982, 24
        %v2367 = vpop.permute.xlu0 %2366
        %2384 = vrot.lane.b32.xlu0 %v2015, 32
        %v2385 = vpop.permute.xlu0 %2384
        %2386 = vrot.lane.b32.xlu0 %v2016, 32
        %v2387 = vpop.permute.xlu0 %2386
        %2388 = vrot.lane.b32.xlu0 %v2017, 32
        %v2389 = vpop.permute.xlu0 %2388
        %2390 = vrot.lane.b32.xlu0 %v2018, 32
        %v2391 = vpop.permute.xlu0 %2390
        %2392 = vrot.lane.b32.xlu0 %v2019, 32
        %v2393 = vpop.permute.xlu0 %2392
        %2394 = vrot.lane.b32.xlu0 %v2020, 32
        %v2395 = vpop.permute.xlu0 %2394
        %2396 = vrot.lane.b32.xlu0 %v2021, 32
        %v2397 = vpop.permute.xlu0 %2396
        %2398 = vrot.lane.b32.xlu0 %v2022, 32
        %v2399 = vpop.permute.xlu0 %2398
        %2400 = vrot.lane.b32.xlu0 %v2023, 32
        %v2401 = vpop.permute.xlu0 %2400
        %2402 = vrot.lane.b32.xlu0 %v2024, 32
        %v2403 = vpop.permute.xlu0 %2402
        %2404 = vrot.lane.b32.xlu0 %v2025, 32
        %v2405 = vpop.permute.xlu0 %2404
        %2406 = vrot.lane.b32.xlu0 %v2026, 32
        %v2407 = vpop.permute.xlu0 %2406
        %2408 = vrot.lane.b32.xlu0 %v2027, 32
        %v2409 = vpop.permute.xlu0 %2408
        %2410 = vrot.lane.b32.xlu0 %v2028, 32
        %v2411 = vpop.permute.xlu0 %2410
        %2412 = vrot.lane.b32.xlu0 %v2029, 32
        %v2413 = vpop.permute.xlu0 %2412
        %2414 = vrot.lane.b32.xlu0 %v2030, 32
        %v2415 = vpop.permute.xlu0 %2414
        %2432 = vrot.lane.b32.xlu0 %v2063, 40
        %v2433 = vpop.permute.xlu0 %2432
        %2434 = vrot.lane.b32.xlu0 %v2064, 40
        %v2435 = vpop.permute.xlu0 %2434
        %2436 = vrot.lane.b32.xlu0 %v2065, 40
        %v2437 = vpop.permute.xlu0 %2436
        %2438 = vrot.lane.b32.xlu0 %v2066, 40
        %v2439 = vpop.permute.xlu0 %2438
        %2440 = vrot.lane.b32.xlu0 %v2067, 40
        %v2441 = vpop.permute.xlu0 %2440
        %2442 = vrot.lane.b32.xlu0 %v2068, 40
        %v2443 = vpop.permute.xlu0 %2442
        %2444 = vrot.lane.b32.xlu0 %v2069, 40
        %v2445 = vpop.permute.xlu0 %2444
        %2446 = vrot.lane.b32.xlu0 %v2070, 40
        %v2447 = vpop.permute.xlu0 %2446
        %2448 = vrot.lane.b32.xlu0 %v2071, 40
        %v2449 = vpop.permute.xlu0 %2448
        %2450 = vrot.lane.b32.xlu0 %v2072, 40
        %v2451 = vpop.permute.xlu0 %2450
        %2452 = vrot.lane.b32.xlu0 %v2073, 40
        %v2453 = vpop.permute.xlu0 %2452
        %2454 = vrot.lane.b32.xlu0 %v2074, 40
        %v2455 = vpop.permute.xlu0 %2454
        %2456 = vrot.lane.b32.xlu0 %v2075, 40
        %v2457 = vpop.permute.xlu0 %2456
        %2458 = vrot.lane.b32.xlu0 %v2076, 40
        %v2459 = vpop.permute.xlu0 %2458
        %2460 = vrot.lane.b32.xlu0 %v2077, 40
        %v2461 = vpop.permute.xlu0 %2460
        %2462 = vrot.lane.b32.xlu0 %v2078, 40
        %v2463 = vpop.permute.xlu0 %2462
        %2480 = vrot.lane.b32.xlu0 %v2112, 48
        %v2481 = vpop.permute.xlu0 %2480
        %2482 = vrot.lane.b32.xlu0 %v2113, 48
        %v2483 = vpop.permute.xlu0 %2482
        %2484 = vrot.lane.b32.xlu0 %v2114, 48
        %v2485 = vpop.permute.xlu0 %2484
        %2486 = vrot.lane.b32.xlu0 %v2115, 48
        %v2487 = vpop.permute.xlu0 %2486
        %2488 = vrot.lane.b32.xlu0 %v2116, 48
        %v2489 = vpop.permute.xlu0 %2488
        %2490 = vrot.lane.b32.xlu0 %v2117, 48
        %v2491 = vpop.permute.xlu0 %2490
        %2492 = vrot.lane.b32.xlu0 %v2118, 48
        %v2493 = vpop.permute.xlu0 %2492
        %2494 = vrot.lane.b32.xlu0 %v2119, 48
        %v2495 = vpop.permute.xlu0 %2494
        %2496 = vrot.lane.b32.xlu0 %v2120, 48
        %v2497 = vpop.permute.xlu0 %2496
        %2498 = vrot.lane.b32.xlu0 %v2121, 48
        %v2499 = vpop.permute.xlu0 %2498
        %2500 = vrot.lane.b32.xlu0 %v2122, 48
        %v2501 = vpop.permute.xlu0 %2500
        %2502 = vrot.lane.b32.xlu0 %v2123, 48
        %v2503 = vpop.permute.xlu0 %2502
        %2504 = vrot.lane.b32.xlu0 %v2124, 48
        %v2505 = vpop.permute.xlu0 %2504
        %2506 = vrot.lane.b32.xlu0 %v2125, 48
        %v2507 = vpop.permute.xlu0 %2506
        %2508 = vrot.lane.b32.xlu0 %v2126, 48
        %v2509 = vpop.permute.xlu0 %2508
        %2510 = vrot.lane.b32.xlu0 %v2127, 48
        %v2511 = vpop.permute.xlu0 %2510
        %2528 = vrot.lane.b32.xlu0 %v2160, 56
        %v2529 = vpop.permute.xlu0 %2528
        %2530 = vrot.lane.b32.xlu0 %v2161, 56
        %v2531 = vpop.permute.xlu0 %2530
        %2532 = vrot.lane.b32.xlu0 %v2162, 56
        %v2533 = vpop.permute.xlu0 %2532
        %2534 = vrot.lane.b32.xlu0 %v2163, 56
        %v2535 = vpop.permute.xlu0 %2534
        %2536 = vrot.lane.b32.xlu0 %v2164, 56
        %v2537 = vpop.permute.xlu0 %2536
        %2538 = vrot.lane.b32.xlu0 %v2165, 56
        %v2539 = vpop.permute.xlu0 %2538
        %2540 = vrot.lane.b32.xlu0 %v2166, 56
        %v2541 = vpop.permute.xlu0 %2540
        %2542 = vrot.lane.b32.xlu0 %v2167, 56
        %v2543 = vpop.permute.xlu0 %2542
        %2544 = vrot.lane.b32.xlu0 %v2168, 56
        %v2545 = vpop.permute.xlu0 %2544
        %2546 = vrot.lane.b32.xlu0 %v2169, 56
        %v2547 = vpop.permute.xlu0 %2546
        %2548 = vrot.lane.b32.xlu0 %v2170, 56
        %v2549 = vpop.permute.xlu0 %2548
        %2550 = vrot.lane.b32.xlu0 %v2171, 56
        %v2551 = vpop.permute.xlu0 %2550
        %2552 = vrot.lane.b32.xlu0 %v2172, 56
        %v2553 = vpop.permute.xlu0 %2552
        %2554 = vrot.lane.b32.xlu0 %v2173, 56
        %v2555 = vpop.permute.xlu0 %2554
        %2556 = vrot.lane.b32.xlu0 %v2174, 56
        %v2557 = vpop.permute.xlu0 %2556
        %2558 = vrot.lane.b32.xlu0 %v2175, 56
        %v2559 = vpop.permute.xlu0 %2558
        %2576 = vrot.lane.b32.xlu0 %v2208, 64
        %v2577 = vpop.permute.xlu0 %2576
        %2578 = vrot.lane.b32.xlu0 %v2209, 64
        %v2579 = vpop.permute.xlu0 %2578
        %2580 = vrot.lane.b32.xlu0 %v2210, 64
        %v2581 = vpop.permute.xlu0 %2580
        %2582 = vrot.lane.b32.xlu0 %v2211, 64
        %v2583 = vpop.permute.xlu0 %2582
        %2584 = vrot.lane.b32.xlu0 %v2212, 64
        %v2585 = vpop.permute.xlu0 %2584
        %2586 = vrot.lane.b32.xlu0 %v2213, 64
        %v2587 = vpop.permute.xlu0 %2586
        %2588 = vrot.lane.b32.xlu0 %v2214, 64
        %v2589 = vpop.permute.xlu0 %2588
        %2590 = vrot.lane.b32.xlu0 %v2215, 64
        %v2591 = vpop.permute.xlu0 %2590
        %2592 = vrot.lane.b32.xlu0 %v2216, 64
        %v2593 = vpop.permute.xlu0 %2592
        %2594 = vrot.lane.b32.xlu0 %v2217, 64
        %v2595 = vpop.permute.xlu0 %2594
        %2596 = vrot.lane.b32.xlu0 %v2218, 64
        %v2597 = vpop.permute.xlu0 %2596
        %2598 = vrot.lane.b32.xlu0 %v2219, 64
        %v2599 = vpop.permute.xlu0 %2598
        %2600 = vrot.lane.b32.xlu0 %v2220, 64
        %v2601 = vpop.permute.xlu0 %2600
        %2602 = vrot.lane.b32.xlu0 %v2221, 64
        %v2603 = vpop.permute.xlu0 %2602
        %2604 = vrot.lane.b32.xlu0 %v2222, 64
        %v2605 = vpop.permute.xlu0 %2604
        %2606 = vrot.lane.b32.xlu0 %v2223, 64
        %v2607 = vpop.permute.xlu0 %2606
        %v2610 = vsel %vm1145, %v1823, %v2241
        %v2613 = vsel %vm1145, %v1824, %v2243
        %v2616 = vsel %vm1145, %v1825, %v2245
        %v2619 = vsel %vm1145, %v1826, %v2247
        %v2622 = vsel %vm1145, %v1827, %v2249
        %v2625 = vsel %vm1145, %v1828, %v2251
        %v2628 = vsel %vm1145, %v1829, %v2253
        %v2631 = vsel %vm1145, %v1830, %v2255
        %v2634 = vsel %vm1145, %v1831, %v2257
        %v2637 = vsel %vm1145, %v1832, %v2259
        %v2640 = vsel %vm1145, %v1833, %v2261
        %v2643 = vsel %vm1145, %v1834, %v2263
        %v2646 = vsel %vm1145, %v1835, %v2265
        %v2649 = vsel %vm1145, %v1836, %v2267
        %v2652 = vsel %vm1145, %v1837, %v2269
        %v2655 = vsel %vm1145, %v1838, %v2271
        %v2657 = vsel %vm1211, %v2610, %v2289
        %v2659 = vsel %vm1211, %v2613, %v2291
        %v2661 = vsel %vm1211, %v2616, %v2293
        %v2663 = vsel %vm1211, %v2619, %v2295
        %v2665 = vsel %vm1211, %v2622, %v2297
        %v2667 = vsel %vm1211, %v2625, %v2299
        %v2669 = vsel %vm1211, %v2628, %v2301
        %v2671 = vsel %vm1211, %v2631, %v2303
        %v2673 = vsel %vm1211, %v2634, %v2305
        %v2675 = vsel %vm1211, %v2637, %v2307
        %v2677 = vsel %vm1211, %v2640, %v2309
        %v2679 = vsel %vm1211, %v2643, %v2311
        %v2681 = vsel %vm1211, %v2646, %v2313
        %v2683 = vsel %vm1211, %v2649, %v2315
        %v2685 = vsel %vm1211, %v2652, %v2317
        %v2687 = vsel %vm1211, %v2655, %v2319
        %v2689 = vsel %vm1277, %v2657, %v2337
        %v2691 = vsel %vm1277, %v2659, %v2339
        %v2693 = vsel %vm1277, %v2661, %v2341
        %v2695 = vsel %vm1277, %v2663, %v2343
        %v2697 = vsel %vm1277, %v2665, %v2345
        %v2699 = vsel %vm1277, %v2667, %v2347
        %v2701 = vsel %vm1277, %v2669, %v2349
        %v2703 = vsel %vm1277, %v2671, %v2351
        %v2705 = vsel %vm1277, %v2673, %v2353
        %v2707 = vsel %vm1277, %v2675, %v2355
        %v2709 = vsel %vm1277, %v2677, %v2357
        %v2711 = vsel %vm1277, %v2679, %v2359
        %v2713 = vsel %vm1277, %v2681, %v2361
        %v2715 = vsel %vm1277, %v2683, %v2363
        %v2717 = vsel %vm1277, %v2685, %v2365
        %v2719 = vsel %vm1277, %v2687, %v2367
        %v2721 = vsel %vm1343, %v2689, %v2385
        %v2723 = vsel %vm1343, %v2691, %v2387
        %v2725 = vsel %vm1343, %v2693, %v2389
        %v2727 = vsel %vm1343, %v2695, %v2391
        %v2729 = vsel %vm1343, %v2697, %v2393
        %v2731 = vsel %vm1343, %v2699, %v2395
        %v2733 = vsel %vm1343, %v2701, %v2397
        %v2735 = vsel %vm1343, %v2703, %v2399
        %v2737 = vsel %vm1343, %v2705, %v2401
        %v2739 = vsel %vm1343, %v2707, %v2403
        %v2741 = vsel %vm1343, %v2709, %v2405
        %v2743 = vsel %vm1343, %v2711, %v2407
        %v2745 = vsel %vm1343, %v2713, %v2409
        %v2747 = vsel %vm1343, %v2715, %v2411
        %v2749 = vsel %vm1343, %v2717, %v2413
        %v2751 = vsel %vm1343, %v2719, %v2415
        %vm2752 = vcmask 326656
        %v2754 = vsel %vm2752, %v2721, %v2433
        %v2756 = vsel %vm2752, %v2723, %v2435
        %v2758 = vsel %vm2752, %v2725, %v2437
        %v2760 = vsel %vm2752, %v2727, %v2439
        %v2762 = vsel %vm2752, %v2729, %v2441
        %v2764 = vsel %vm2752, %v2731, %v2443
        %v2766 = vsel %vm2752, %v2733, %v2445
        %v2768 = vsel %vm2752, %v2735, %v2447
        %v2770 = vsel %vm2752, %v2737, %v2449
        %v2772 = vsel %vm2752, %v2739, %v2451
        %v2774 = vsel %vm2752, %v2741, %v2453
        %v2776 = vsel %vm2752, %v2743, %v2455
        %v2778 = vsel %vm2752, %v2745, %v2457
        %v2780 = vsel %vm2752, %v2747, %v2459
        %v2782 = vsel %vm2752, %v2749, %v2461
        %v2784 = vsel %vm2752, %v2751, %v2463
        %vm2785 = vcmask 392192
        %v2787 = vsel %vm2785, %v2754, %v2481
        %v2789 = vsel %vm2785, %v2756, %v2483
        %v2791 = vsel %vm2785, %v2758, %v2485
        %v2793 = vsel %vm2785, %v2760, %v2487
        %v2795 = vsel %vm2785, %v2762, %v2489
        %v2797 = vsel %vm2785, %v2764, %v2491
        %v2799 = vsel %vm2785, %v2766, %v2493
        %v2801 = vsel %vm2785, %v2768, %v2495
        %v2803 = vsel %vm2785, %v2770, %v2497
        %v2805 = vsel %vm2785, %v2772, %v2499
        %v2807 = vsel %vm2785, %v2774, %v2501
        %v2809 = vsel %vm2785, %v2776, %v2503
        %v2811 = vsel %vm2785, %v2778, %v2505
        %v2813 = vsel %vm2785, %v2780, %v2507
        %v2815 = vsel %vm2785, %v2782, %v2509
        %v2817 = vsel %vm2785, %v2784, %v2511
        %vm2818 = vcmask 457728
        %v2820 = vsel %vm2818, %v2787, %v2529
        %v2822 = vsel %vm2818, %v2789, %v2531
        %v2824 = vsel %vm2818, %v2791, %v2533
        %v2826 = vsel %vm2818, %v2793, %v2535
        %v2828 = vsel %vm2818, %v2795, %v2537
        %v2830 = vsel %vm2818, %v2797, %v2539
        %v2832 = vsel %vm2818, %v2799, %v2541
        %v2834 = vsel %vm2818, %v2801, %v2543
        %v2836 = vsel %vm2818, %v2803, %v2545
        %v2838 = vsel %vm2818, %v2805, %v2547
        %v2840 = vsel %vm2818, %v2807, %v2549
        %v2842 = vsel %vm2818, %v2809, %v2551
        %v2844 = vsel %vm2818, %v2811, %v2553
        %v2846 = vsel %vm2818, %v2813, %v2555
        %v2848 = vsel %vm2818, %v2815, %v2557
        %v2850 = vsel %vm2818, %v2817, %v2559
        %vm2851 = vcmask 523264
        %v2853 = vsel %vm2851, %v2820, %v2577
        %v2855 = vsel %vm2851, %v2822, %v2579
        %v2857 = vsel %vm2851, %v2824, %v2581
        %v2859 = vsel %vm2851, %v2826, %v2583
        %v2861 = vsel %vm2851, %v2828, %v2585
        %v2863 = vsel %vm2851, %v2830, %v2587
        %v2865 = vsel %vm2851, %v2832, %v2589
        %v2867 = vsel %vm2851, %v2834, %v2591
        %v2869 = vsel %vm2851, %v2836, %v2593
        %v2871 = vsel %vm2851, %v2838, %v2595
        %v2873 = vsel %vm2851, %v2840, %v2597
        %v2875 = vsel %vm2851, %v2842, %v2599
        %v2877 = vsel %vm2851, %v2844, %v2601
        %v2879 = vsel %vm2851, %v2846, %v2603
        %v2881 = vsel %vm2851, %v2848, %v2605
        %v2883 = vsel %vm2851, %v2850, %v2607
        %v2884 = vld [vmem:[%s3] sm:$0xf]
        %v2885 = vld [vmem:[%s3 + $0x4] sm:$0xf]
        %v2886 = vld [vmem:[%s3 + $0x8] sm:$0xf]
        %v2887 = vld [vmem:[%s3 + $0xc] sm:$0xf]
        %v2888 = vld [vmem:[%s3 + $0x10] sm:$0xf]
        %v2889 = vld [vmem:[%s3 + $0x14] sm:$0xf]
        %v2890 = vld [vmem:[%s3 + $0x18] sm:$0xf]
        %v2891 = vld [vmem:[%s3 + $0x1c] sm:$0xf]
        %v2892 = vld [vmem:[%s3 + $0x20] sm:$0xf]
        %v2893 = vld [vmem:[%s4] sm:$0x1]
        %v2895 = vlaneseq
        %v2896 = vshrl.u32 %v2895, 7
        %v2897 = vsub.s32 0, %v2896
        %v2898 = vrot.slane %v2893, %v2897
        %v2909 = vunpack.c.l.b16 %v2884
        %v2910 = vunpack.c.l.b16 %v2885
        %v2911 = vunpack.c.l.b16 %v2886
        %v2912 = vunpack.c.l.b16 %v2887
        %v2913 = vunpack.c.l.b16 %v2888
        %v2914 = vunpack.c.l.b16 %v2889
        %v2915 = vunpack.c.l.b16 %v2890
        %v2916 = vunpack.c.l.b16 %v2891
        %v2917 = vunpack.c.l.b16 %v2892
        %v2918 = vpack.c.b16 %v2910, %v2909
        %v2919 = vpack.c.b16 %v2912, %v2911
        %v2920 = vpack.c.b16 %v2914, %v2913
        %v2921 = vpack.c.b16 %v2916, %v2915
        %v2922 = vpack.c.b16 %v2917, %v2917
        %vm2927 = vcmask 588800
        %v2928 = vsel %vm2927, %v2853, 0
        %v2930 = vsel %vm2927, %v2855, 0
        %v2932 = vsel %vm2927, %v2857, 0
        %v2934 = vsel %vm2927, %v2859, 0
        %v2936 = vsel %vm2927, %v2861, 0
        %v2938 = vsel %vm2927, %v2863, 0
        %v2940 = vsel %vm2927, %v2865, 0
        %v2942 = vsel %vm2927, %v2867, 0
        %v2944 = vsel %vm2927, %v2869, 0
        %v2946 = vsel %vm2927, %v2871, 0
        %v2948 = vsel %vm2927, %v2873, 0
        %v2950 = vsel %vm2927, %v2875, 0
        %v2952 = vsel %vm2927, %v2877, 0
        %v2954 = vsel %vm2927, %v2879, 0
        %v2956 = vsel %vm2927, %v2881, 0
        %v2958 = vsel %vm2927, %v2883, 0
        %vm2960 = vcmask 1043456
        %v2962 = vsel %vm2960, %v2922, 0
        %2964 = vmatprep.subr.bf16.mxu0 0
        %2965 = vmatpush1.bf16.msra.mxu0 %v2918
        %2966 = vmatprep.subr.bf16.mxu0 0
        %2967 = vmatpush1.bf16.msra.mxu0 %v2919
        %2968 = vmatprep.subr.bf16.mxu0 0
        %2969 = vmatpush1.bf16.msra.mxu0 %v2920
        %2970 = vmatprep.subr.bf16.mxu0 0
        %2971 = vmatpush1.bf16.msra.mxu0 %v2921
        %2972 = vmatprep.subr.bf16.mxu0 0
        %2973 = vmatpush1.bf16.msra.mxu0 %v2962
        %2974 = vmatprep.subr.bf16.mxu0 0
        %2975 = vmatpush1.bf16.msra.mxu0 0
        %2976 = vmatprep.subr.bf16.mxu0 0
        %2977 = vmatpush1.bf16.msra.mxu0 0
        %2978 = vmatprep.subr.bf16.mxu0 0
        %2979 = vmatpush1.bf16.msra.mxu0 0
        %2980 = vmatprep.subr.bf16.mxu0 0
        %2981 = vmatpush1.bf16.msra.mxu0 0
        %2982 = vmatprep.subr.bf16.mxu0 0
        %2983 = vmatpush1.bf16.msra.mxu0 0
        %2984 = vmatprep.subr.bf16.mxu0 0
        %2985 = vmatpush1.bf16.msra.mxu0 0
        %2986 = vmatprep.subr.bf16.mxu0 0
        %2987 = vmatpush1.bf16.msra.mxu0 0
        %2988 = vmatprep.subr.bf16.mxu0 0
        %2989 = vmatpush1.bf16.msra.mxu0 0
        %2990 = vmatprep.subr.bf16.mxu0 0
        %2991 = vmatpush1.bf16.msra.mxu0 0
        %2992 = vmatprep.subr.bf16.mxu0 0
        %2993 = vmatpush1.bf16.msra.mxu0 0
        %2994 = vmatprep.subr.bf16.mxu0 0
        %2995 = vmatpush1.bf16.msra.mxu0 0
        %2996 = vmatprep.mubr.bf16.mxu0 0
        %2997 = vmatmul.mubr.bf16.gmra.mrb[0].mxu0 %v2928
        %v2998 = vpop.f32.mrb[0].mxu0
        %v2999 = vadd.f32 %v2898, %v2998
        %v3000 = vpop.f32.mrb[0].mxu0
        %v3001 = vpop.f32.mrb[0].mxu0
        %v3002 = vadd.f32 %v2898, %v3001
        %v3003 = vpop.f32.mrb[0].mxu0
        %3004 = vmatprep.mubr.bf16.mxu0 0
        %3005 = vmatmul.mubr.bf16.gmra.mrb[0].mxu0 %v2930
        %v3006 = vpop.f32.mrb[0].mxu0
        %v3007 = vadd.f32 %v2898, %v3006
        %v3008 = vpop.f32.mrb[0].mxu0
        %v3009 = vpop.f32.mrb[0].mxu0
        %v3010 = vadd.f32 %v2898, %v3009
        %v3011 = vpop.f32.mrb[0].mxu0
        %3012 = vmatprep.mubr.bf16.mxu0 0
        %3013 = vmatmul.mubr.bf16.gmra.mrb[0].mxu0 %v2932
        %v3014 = vpop.f32.mrb[0].mxu0
        %v3015 = vadd.f32 %v2898, %v3014
        %v3016 = vpop.f32.mrb[0].mxu0
        %v3017 = vpop.f32.mrb[0].mxu0
        %v3018 = vadd.f32 %v2898, %v3017
        %v3019 = vpop.f32.mrb[0].mxu0
        %3020 = vmatprep.mubr.bf16.mxu0 0
        %3021 = vmatmul.mubr.bf16.gmra.mrb[0].mxu0 %v2934
        %v3022 = vpop.f32.mrb[0].mxu0
        %v3023 = vadd.f32 %v2898, %v3022
        %v3024 = vpop.f32.mrb[0].mxu0
        %v3025 = vpop.f32.mrb[0].mxu0
        %v3026 = vadd.f32 %v2898, %v3025
        %v3027 = vpop.f32.mrb[0].mxu0
        %3028 = vmatprep.mubr.bf16.mxu0 0
        %3029 = vmatmul.mubr.bf16.gmra.mrb[0].mxu0 %v2936
        %v3030 = vpop.f32.mrb[0].mxu0
        %v3031 = vadd.f32 %v2898, %v3030
        %v3032 = vpop.f32.mrb[0].mxu0
        %v3033 = vpop.f32.mrb[0].mxu0
        %v3034 = vadd.f32 %v2898, %v3033
        %v3035 = vpop.f32.mrb[0].mxu0
        %3036 = vmatprep.mubr.bf16.mxu0 0
        %3037 = vmatmul.mubr.bf16.gmra.mrb[0].mxu0 %v2938
        %v3038 = vpop.f32.mrb[0].mxu0
        %v3039 = vadd.f32 %v2898, %v3038
        %v3040 = vpop.f32.mrb[0].mxu0
        %v3041 = vpop.f32.mrb[0].mxu0
        %v3042 = vadd.f32 %v2898, %v3041
        %v3043 = vpop.f32.mrb[0].mxu0
        %3044 = vmatprep.mubr.bf16.mxu0 0
        %3045 = vmatmul.mubr.bf16.gmra.mrb[0].mxu0 %v2940
        %v3046 = vpop.f32.mrb[0].mxu0
        %v3047 = vadd.f32 %v2898, %v3046
        %v3048 = vpop.f32.mrb[0].mxu0
        %v3049 = vpop.f32.mrb[0].mxu0
        %v3050 = vadd.f32 %v2898, %v3049
        %v3051 = vpop.f32.mrb[0].mxu0
        %3052 = vmatprep.mubr.bf16.mxu0 0
        %3053 = vmatmul.mubr.bf16.gmra.mrb[0].mxu0 %v2942
        %v3054 = vpop.f32.mrb[0].mxu0
        %v3055 = vadd.f32 %v2898, %v3054
        %v3056 = vpop.f32.mrb[0].mxu0
        %v3057 = vpop.f32.mrb[0].mxu0
        %v3058 = vadd.f32 %v2898, %v3057
        %v3059 = vpop.f32.mrb[0].mxu0
        %3060 = vmatprep.mubr.bf16.mxu0 0
        %3061 = vmatmul.mubr.bf16.gmra.mrb[0].mxu0 %v2944
        %v3062 = vpop.f32.mrb[0].mxu0
        %v3063 = vadd.f32 %v2898, %v3062
        %v3064 = vpop.f32.mrb[0].mxu0
        %v3065 = vpop.f32.mrb[0].mxu0
        %v3066 = vadd.f32 %v2898, %v3065
        %v3067 = vpop.f32.mrb[0].mxu0
        %3068 = vmatprep.mubr.bf16.mxu0 0
        %3069 = vmatmul.mubr.bf16.gmra.mrb[0].mxu0 %v2946
        %v3070 = vpop.f32.mrb[0].mxu0
        %v3071 = vadd.f32 %v2898, %v3070
        %v3072 = vpop.f32.mrb[0].mxu0
        %v3073 = vpop.f32.mrb[0].mxu0
        %v3074 = vadd.f32 %v2898, %v3073
        %v3075 = vpop.f32.mrb[0].mxu0
        %3076 = vmatprep.mubr.bf16.mxu0 0
        %3077 = vmatmul.mubr.bf16.gmra.mrb[0].mxu0 %v2948
        %v3078 = vpop.f32.mrb[0].mxu0
        %v3079 = vadd.f32 %v2898, %v3078
        %v3080 = vpop.f32.mrb[0].mxu0
        %v3081 = vpop.f32.mrb[0].mxu0
        %v3082 = vadd.f32 %v2898, %v3081
        %v3083 = vpop.f32.mrb[0].mxu0
        %3084 = vmatprep.mubr.bf16.mxu0 0
        %3085 = vmatmul.mubr.bf16.gmra.mrb[0].mxu0 %v2950
        %v3086 = vpop.f32.mrb[0].mxu0
        %v3087 = vadd.f32 %v2898, %v3086
        %v3088 = vpop.f32.mrb[0].mxu0
        %v3089 = vpop.f32.mrb[0].mxu0
        %v3090 = vadd.f32 %v2898, %v3089
        %v3091 = vpop.f32.mrb[0].mxu0
        %3092 = vmatprep.mubr.bf16.mxu0 0
        %3093 = vmatmul.mubr.bf16.gmra.mrb[0].mxu0 %v2952
        %v3094 = vpop.f32.mrb[0].mxu0
        %v3095 = vadd.f32 %v2898, %v3094
        %v3096 = vpop.f32.mrb[0].mxu0
        %v3097 = vpop.f32.mrb[0].mxu0
        %v3098 = vadd.f32 %v2898, %v3097
        %v3099 = vpop.f32.mrb[0].mxu0
        %3100 = vmatprep.mubr.bf16.mxu0 0
        %3101 = vmatmul.mubr.bf16.gmra.mrb[0].mxu0 %v2954
        %v3102 = vpop.f32.mrb[0].mxu0
        %v3103 = vadd.f32 %v2898, %v3102
        %v3104 = vpop.f32.mrb[0].mxu0
        %v3105 = vpop.f32.mrb[0].mxu0
        %v3106 = vadd.f32 %v2898, %v3105
        %v3107 = vpop.f32.mrb[0].mxu0
        %3108 = vmatprep.mubr.bf16.mxu0 0
        %3109 = vmatmul.mubr.bf16.gmra.mrb[0].mxu0 %v2956
        %v3110 = vpop.f32.mrb[0].mxu0
        %v3111 = vadd.f32 %v2898, %v3110
        %v3112 = vpop.f32.mrb[0].mxu0
        %v3113 = vpop.f32.mrb[0].mxu0
        %v3114 = vadd.f32 %v2898, %v3113
        %v3115 = vpop.f32.mrb[0].mxu0
        %3116 = vmatprep.mubr.bf16.mxu0 0
        %3117 = vmatmul.mubr.bf16.gmra.mrb[0].mxu0 %v2958
        %v3118 = vpop.f32.mrb[0].mxu0
        %v3119 = vadd.f32 %v2898, %v3118
        %v3120 = vpop.f32.mrb[0].mxu0
        %v3121 = vpop.f32.mrb[0].mxu0
        %v3122 = vadd.f32 %v2898, %v3121
        %v3123 = vpop.f32.mrb[0].mxu0
        %3124 = vdwg.mxu0
        %vm3125 = vcmp.gt.f32.partialorder %v2999, 0.0
        %vm3126 = vcmp.gt.f32.partialorder %v3002, 0.0
        %vm3127 = vcmp.gt.f32.partialorder %v3007, 0.0
        %vm3128 = vcmp.gt.f32.partialorder %v3010, 0.0
        %vm3129 = vcmp.gt.f32.partialorder %v3015, 0.0
        %vm3130 = vcmp.gt.f32.partialorder %v3018, 0.0
        %vm3131 = vcmp.gt.f32.partialorder %v3023, 0.0
        %vm3132 = vcmp.gt.f32.partialorder %v3026, 0.0
        %vm3133 = vcmp.gt.f32.partialorder %v3031, 0.0
        %vm3134 = vcmp.gt.f32.partialorder %v3034, 0.0
        %vm3135 = vcmp.gt.f32.partialorder %v3039, 0.0
        %vm3136 = vcmp.gt.f32.partialorder %v3042, 0.0
        %vm3137 = vcmp.gt.f32.partialorder %v3047, 0.0
        %vm3138 = vcmp.gt.f32.partialorder %v3050, 0.0
        %vm3139 = vcmp.gt.f32.partialorder %v3055, 0.0
        %vm3140 = vcmp.gt.f32.partialorder %v3058, 0.0
        %vm3141 = vcmp.gt.f32.partialorder %v3063, 0.0
        %vm3142 = vcmp.gt.f32.partialorder %v3066, 0.0
        %vm3143 = vcmp.gt.f32.partialorder %v3071, 0.0
        %vm3144 = vcmp.gt.f32.partialorder %v3074, 0.0
        %vm3145 = vcmp.gt.f32.partialorder %v3079, 0.0
        %vm3146 = vcmp.gt.f32.partialorder %v3082, 0.0
        %vm3147 = vcmp.gt.f32.partialorder %v3087, 0.0
        %vm3148 = vcmp.gt.f32.partialorder %v3090, 0.0
        %vm3149 = vcmp.gt.f32.partialorder %v3095, 0.0
        %vm3150 = vcmp.gt.f32.partialorder %v3098, 0.0
        %vm3151 = vcmp.gt.f32.partialorder %v3103, 0.0
        %vm3152 = vcmp.gt.f32.partialorder %v3106, 0.0
        %vm3153 = vcmp.gt.f32.partialorder %v3111, 0.0
        %vm3154 = vcmp.gt.f32.partialorder %v3114, 0.0
        %vm3155 = vcmp.gt.f32.partialorder %v3119, 0.0
        %vm3156 = vcmp.gt.f32.partialorder %v3122, 0.0
        %v3157 = vmul.f32 %v2999, 0.1
        %v3158 = vmul.f32 %v3002, 0.1
        %v3159 = vmul.f32 %v3007, 0.1
        %v3160 = vmul.f32 %v3010, 0.1
        %v3161 = vmul.f32 %v3015, 0.1
        %v3162 = vmul.f32 %v3018, 0.1
        %v3163 = vmul.f32 %v3023, 0.1
        %v3164 = vmul.f32 %v3026, 0.1
        %v3165 = vmul.f32 %v3031, 0.1
        %v3166 = vmul.f32 %v3034, 0.1
        %v3167 = vmul.f32 %v3039, 0.1
        %v3168 = vmul.f32 %v3042, 0.1
        %v3169 = vmul.f32 %v3047, 0.1
        %v3170 = vmul.f32 %v3050, 0.1
        %v3171 = vmul.f32 %v3055, 0.1
        %v3172 = vmul.f32 %v3058, 0.1
        %v3173 = vmul.f32 %v3063, 0.1
        %v3174 = vmul.f32 %v3066, 0.1
        %v3175 = vmul.f32 %v3071, 0.1
        %v3176 = vmul.f32 %v3074, 0.1
        %v3177 = vmul.f32 %v3079, 0.1
        %v3178 = vmul.f32 %v3082, 0.1
        %v3179 = vmul.f32 %v3087, 0.1
        %v3180 = vmul.f32 %v3090, 0.1
        %v3181 = vmul.f32 %v3095, 0.1
        %v3182 = vmul.f32 %v3098, 0.1
        %v3183 = vmul.f32 %v3103, 0.1
        %v3184 = vmul.f32 %v3106, 0.1
        %v3185 = vmul.f32 %v3111, 0.1
        %v3186 = vmul.f32 %v3114, 0.1
        %v3187 = vmul.f32 %v3119, 0.1
        %v3188 = vmul.f32 %v3122, 0.1
        %v3189 = vsel %vm3125, %v2999, %v3157
        %v3190 = vsel %vm3126, %v3002, %v3158
        %v3191 = vsel %vm3127, %v3007, %v3159
        %v3192 = vsel %vm3128, %v3010, %v3160
        %v3193 = vsel %vm3129, %v3015, %v3161
        %v3194 = vsel %vm3130, %v3018, %v3162
        %v3195 = vsel %vm3131, %v3023, %v3163
        %v3196 = vsel %vm3132, %v3026, %v3164
        %v3197 = vsel %vm3133, %v3031, %v3165
        %v3198 = vsel %vm3134, %v3034, %v3166
        %v3199 = vsel %vm3135, %v3039, %v3167
        %v3200 = vsel %vm3136, %v3042, %v3168
        %v3201 = vsel %vm3137, %v3047, %v3169
        %v3202 = vsel %vm3138, %v3050, %v3170
        %v3203 = vsel %vm3139, %v3055, %v3171
        %v3204 = vsel %vm3140, %v3058, %v3172
        %v3205 = vsel %vm3141, %v3063, %v3173
        %v3206 = vsel %vm3142, %v3066, %v3174
        %v3207 = vsel %vm3143, %v3071, %v3175
        %v3208 = vsel %vm3144, %v3074, %v3176
        %v3209 = vsel %vm3145, %v3079, %v3177
        %v3210 = vsel %vm3146, %v3082, %v3178
        %v3211 = vsel %vm3147, %v3087, %v3179
        %v3212 = vsel %vm3148, %v3090, %v3180
        %v3213 = vsel %vm3149, %v3095, %v3181
        %v3214 = vsel %vm3150, %v3098, %v3182
        %v3215 = vsel %vm3151, %v3103, %v3183
        %v3216 = vsel %vm3152, %v3106, %v3184
        %v3217 = vsel %vm3153, %v3111, %v3185
        %v3218 = vsel %vm3154, %v3114, %v3186
        %v3219 = vsel %vm3155, %v3119, %v3187
        %v3220 = vsel %vm3156, %v3122, %v3188
        %v3221 = vld [vmem:[%s422 + $0x1] sm:$0xff]
        %v3222 = vld [vmem:[%s422 + $0x9] sm:$0xff]
        %v3223 = vld [vmem:[%s422 + $0x19] sm:$0xff]
        %v3224 = vld [vmem:[%s422 + $0x21] sm:$0xff]
        %v3225 = vld [vmem:[%s422 + $0x31] sm:$0xff]
        %v3226 = vld [vmem:[%s422 + $0x39] sm:$0xff]
        %v3227 = vld [vmem:[%s422 + $0x49] sm:$0xff]
        %v3228 = vld [vmem:[%s422 + $0x51] sm:$0xff]
        %v3229 = vld [vmem:[%s422 + $0x61] sm:$0xff]
        %v3230 = vld [vmem:[%s422 + $0x69] sm:$0xff]
        %v3231 = vld [vmem:[%s422 + $0x79] sm:$0xff]
        %v3232 = vld [vmem:[%s422 + $0x81] sm:$0xff]
        %v3233 = vld [vmem:[%s422 + $0x91] sm:$0xff]
        %v3234 = vld [vmem:[%s422 + $0x99] sm:$0xff]
        %v3235 = vld [vmem:[%s422 + $0xa9] sm:$0xff]
        %v3236 = vld [vmem:[%s422 + $0xb1] sm:$0xff]
        %v3237 = vld [vmem:[%s422 + $0xc1] sm:$0xff]
        %v3238 = vld [vmem:[%s422 + $0xc9] sm:$0xff]
        %v3239 = vld [vmem:[%s422 + $0xd9] sm:$0xff]
        %v3240 = vld [vmem:[%s422 + $0xe1] sm:$0xff]
        %v3241 = vld [vmem:[%s422 + $0xf1] sm:$0xff]
        %v3242 = vld [vmem:[%s422 + $0xf9] sm:$0xff]
        %v3243 = vld [vmem:[%s422 + $0x109] sm:$0xff]
        %v3244 = vld [vmem:[%s422 + $0x111] sm:$0xff]
        %v3245 = vld [vmem:[%s422 + $0x121] sm:$0xff]
        %v3246 = vld [vmem:[%s422 + $0x129] sm:$0xff]
        %v3247 = vld [vmem:[%s422 + $0x139] sm:$0xff]
        %v3248 = vld [vmem:[%s422 + $0x141] sm:$0xff]
        %v3249 = vld [vmem:[%s422 + $0x151] sm:$0xff]
        %v3250 = vld [vmem:[%s422 + $0x159] sm:$0xff]
        %v3251 = vld [vmem:[%s422 + $0x169] sm:$0xff]
        %v3252 = vld [vmem:[%s422 + $0x171] sm:$0xff]
        %v3253 = vpack.c.bf16 %v3222, %v3221
        %v3254 = vpack.c.bf16 %v3224, %v3223
        %v3255 = vpack.c.bf16 %v3226, %v3225
        %v3256 = vpack.c.bf16 %v3228, %v3227
        %v3257 = vpack.c.bf16 %v3230, %v3229
        %v3258 = vpack.c.bf16 %v3232, %v3231
        %v3259 = vpack.c.bf16 %v3234, %v3233
        %v3260 = vpack.c.bf16 %v3236, %v3235
        %v3261 = vpack.c.bf16 %v3238, %v3237
        %v3262 = vpack.c.bf16 %v3240, %v3239
        %v3263 = vpack.c.bf16 %v3242, %v3241
        %v3264 = vpack.c.bf16 %v3244, %v3243
        %v3265 = vpack.c.bf16 %v3246, %v3245
        %v3266 = vpack.c.bf16 %v3248, %v3247
        %v3267 = vpack.c.bf16 %v3250, %v3249
        %v3268 = vpack.c.bf16 %v3252, %v3251
        %v3269 = vld [vmem:[%s5] sm:$0x3]
        %v3270 = vld [vmem:[%s6] sm:$0x1]
        %v3272 = vlaneseq
        %v3273 = vshrl.u32 %v3272, 7
        %v3274 = vsub.s32 0, %v3273
        %v3275 = vrot.slane %v3270, %v3274
        %v3278 = vsel %vm1096, %v3253, 0
        %v3281 = vsel %vm1096, %v3254, 0
        %v3284 = vsel %vm1096, %v3255, 0
        %v3287 = vsel %vm1096, %v3256, 0
        %v3290 = vsel %vm1096, %v3257, 0
        %v3293 = vsel %vm1096, %v3258, 0
        %v3296 = vsel %vm1096, %v3259, 0
        %v3299 = vsel %vm1096, %v3260, 0
        %v3302 = vsel %vm1096, %v3261, 0
        %v3305 = vsel %vm1096, %v3262, 0
        %v3308 = vsel %vm1096, %v3263, 0
        %v3311 = vsel %vm1096, %v3264, 0
        %v3314 = vsel %vm1096, %v3265, 0
        %v3317 = vsel %vm1096, %v3266, 0
        %v3320 = vsel %vm1096, %v3267, 0
        %v3323 = vsel %vm1096, %v3268, 0
        %v3326 = vsel %vm1436, %v3269, 0
        %3328 = vmatprep.subr.bf16.mxu0 0
        %3329 = vmatpush1.bf16.msra.mxu0 %v3326
        %3330 = vmatprep.subr.bf16.mxu0 0
        %3331 = vmatpush1.bf16.msra.mxu0 0
        %3332 = vmatprep.subr.bf16.mxu0 0
        %3333 = vmatpush1.bf16.msra.mxu0 0
        %3334 = vmatprep.subr.bf16.mxu0 0
        %3335 = vmatpush1.bf16.msra.mxu0 0
        %3336 = vmatprep.subr.bf16.mxu0 0
        %3337 = vmatpush1.bf16.msra.mxu0 0
        %3338 = vmatprep.subr.bf16.mxu0 0
        %3339 = vmatpush1.bf16.msra.mxu0 0
        %3340 = vmatprep.subr.bf16.mxu0 0
        %3341 = vmatpush1.bf16.msra.mxu0 0
        %3342 = vmatprep.subr.bf16.mxu0 0
        %3343 = vmatpush1.bf16.msra.mxu0 0
        %3344 = vmatprep.subr.bf16.mxu0 0
        %3345 = vmatpush1.bf16.msra.mxu0 0
        %3346 = vmatprep.subr.bf16.mxu0 0
        %3347 = vmatpush1.bf16.msra.mxu0 0
        %3348 = vmatprep.subr.bf16.mxu0 0
        %3349 = vmatpush1.bf16.msra.mxu0 0
        %3350 = vmatprep.subr.bf16.mxu0 0
        %3351 = vmatpush1.bf16.msra.mxu0 0
        %3352 = vmatprep.subr.bf16.mxu0 0
        %3353 = vmatpush1.bf16.msra.mxu0 0
        %3354 = vmatprep.subr.bf16.mxu0 0
        %3355 = vmatpush1.bf16.msra.mxu0 0
        %3356 = vmatprep.subr.bf16.mxu0 0
        %3357 = vmatpush1.bf16.msra.mxu0 0
        %3358 = vmatprep.subr.bf16.mxu0 0
        %3359 = vmatpush1.bf16.msra.mxu0 0
        %3360 = vmatprep.mubr.bf16.mxu0 0
        %3361 = vmatmul.mubr.bf16.gmra.mrb[0].mxu0 %v3278
        %v3362 = vpop.f32.mrb[0].mxu0
        %v3363 = vadd.f32 %v3275, %v3362
        %v3364 = vpop.f32.mrb[0].mxu0
        %v3365 = vpop.f32.mrb[0].mxu0
        %v3366 = vadd.f32 %v3275, %v3365
        %v3367 = vpop.f32.mrb[0].mxu0
        %3368 = vmatprep.mubr.bf16.mxu0 0
        %3369 = vmatmul.mubr.bf16.gmra.mrb[0].mxu0 %v3281
        %v3370 = vpop.f32.mrb[0].mxu0
        %v3371 = vadd.f32 %v3275, %v3370
        %v3372 = vpop.f32.mrb[0].mxu0
        %v3373 = vpop.f32.mrb[0].mxu0
        %v3374 = vadd.f32 %v3275, %v3373
        %v3375 = vpop.f32.mrb[0].mxu0
        %3376 = vmatprep.mubr.bf16.mxu0 0
        %3377 = vmatmul.mubr.bf16.gmra.mrb[0].mxu0 %v3284
        %v3378 = vpop.f32.mrb[0].mxu0
        %v3379 = vadd.f32 %v3275, %v3378
        %v3380 = vpop.f32.mrb[0].mxu0
        %v3381 = vpop.f32.mrb[0].mxu0
        %v3382 = vadd.f32 %v3275, %v3381
        %v3383 = vpop.f32.mrb[0].mxu0
        %3384 = vmatprep.mubr.bf16.mxu0 0
        %3385 = vmatmul.mubr.bf16.gmra.mrb[0].mxu0 %v3287
        %v3386 = vpop.f32.mrb[0].mxu0
        %v3387 = vadd.f32 %v3275, %v3386
        %v3388 = vpop.f32.mrb[0].mxu0
        %v3389 = vpop.f32.mrb[0].mxu0
        %v3390 = vadd.f32 %v3275, %v3389
        %v3391 = vpop.f32.mrb[0].mxu0
        %3392 = vmatprep.mubr.bf16.mxu0 0
        %3393 = vmatmul.mubr.bf16.gmra.mrb[0].mxu0 %v3290
        %v3394 = vpop.f32.mrb[0].mxu0
        %v3395 = vadd.f32 %v3275, %v3394
        %v3396 = vpop.f32.mrb[0].mxu0
        %v3397 = vpop.f32.mrb[0].mxu0
        %v3398 = vadd.f32 %v3275, %v3397
        %v3399 = vpop.f32.mrb[0].mxu0
        %3400 = vmatprep.mubr.bf16.mxu0 0
        %3401 = vmatmul.mubr.bf16.gmra.mrb[0].mxu0 %v3293
        %v3402 = vpop.f32.mrb[0].mxu0
        %v3403 = vadd.f32 %v3275, %v3402
        %v3404 = vpop.f32.mrb[0].mxu0
        %v3405 = vpop.f32.mrb[0].mxu0
        %v3406 = vadd.f32 %v3275, %v3405
        %v3407 = vpop.f32.mrb[0].mxu0
        %3408 = vmatprep.mubr.bf16.mxu0 0
        %3409 = vmatmul.mubr.bf16.gmra.mrb[0].mxu0 %v3296
        %v3410 = vpop.f32.mrb[0].mxu0
        %v3411 = vadd.f32 %v3275, %v3410
        %v3412 = vpop.f32.mrb[0].mxu0
        %v3413 = vpop.f32.mrb[0].mxu0
        %v3414 = vadd.f32 %v3275, %v3413
        %v3415 = vpop.f32.mrb[0].mxu0
        %3416 = vmatprep.mubr.bf16.mxu0 0
        %3417 = vmatmul.mubr.bf16.gmra.mrb[0].mxu0 %v3299
        %v3418 = vpop.f32.mrb[0].mxu0
        %v3419 = vadd.f32 %v3275, %v3418
        %v3420 = vpop.f32.mrb[0].mxu0
        %v3421 = vpop.f32.mrb[0].mxu0
        %v3422 = vadd.f32 %v3275, %v3421
        %v3423 = vpop.f32.mrb[0].mxu0
        %3424 = vmatprep.mubr.bf16.mxu0 0
        %3425 = vmatmul.mubr.bf16.gmra.mrb[0].mxu0 %v3302
        %v3426 = vpop.f32.mrb[0].mxu0
        %v3427 = vadd.f32 %v3275, %v3426
        %v3428 = vpop.f32.mrb[0].mxu0
        %v3429 = vpop.f32.mrb[0].mxu0
        %v3430 = vadd.f32 %v3275, %v3429
        %v3431 = vpop.f32.mrb[0].mxu0
        %3432 = vmatprep.mubr.bf16.mxu0 0
        %3433 = vmatmul.mubr.bf16.gmra.mrb[0].mxu0 %v3305
        %v3434 = vpop.f32.mrb[0].mxu0
        %v3435 = vadd.f32 %v3275, %v3434
        %v3436 = vpop.f32.mrb[0].mxu0
        %v3437 = vpop.f32.mrb[0].mxu0
        %v3438 = vadd.f32 %v3275, %v3437
        %v3439 = vpop.f32.mrb[0].mxu0
        %3440 = vmatprep.mubr.bf16.mxu0 0
        %3441 = vmatmul.mubr.bf16.gmra.mrb[0].mxu0 %v3308
        %v3442 = vpop.f32.mrb[0].mxu0
        %v3443 = vadd.f32 %v3275, %v3442
        %v3444 = vpop.f32.mrb[0].mxu0
        %v3445 = vpop.f32.mrb[0].mxu0
        %v3446 = vadd.f32 %v3275, %v3445
        %v3447 = vpop.f32.mrb[0].mxu0
        %3448 = vmatprep.mubr.bf16.mxu0 0
        %3449 = vmatmul.mubr.bf16.gmra.mrb[0].mxu0 %v3311
        %v3450 = vpop.f32.mrb[0].mxu0
        %v3451 = vadd.f32 %v3275, %v3450
        %v3452 = vpop.f32.mrb[0].mxu0
        %v3453 = vpop.f32.mrb[0].mxu0
        %v3454 = vadd.f32 %v3275, %v3453
        %v3455 = vpop.f32.mrb[0].mxu0
        %3456 = vmatprep.mubr.bf16.mxu0 0
        %3457 = vmatmul.mubr.bf16.gmra.mrb[0].mxu0 %v3314
        %v3458 = vpop.f32.mrb[0].mxu0
        %v3459 = vadd.f32 %v3275, %v3458
        %v3460 = vpop.f32.mrb[0].mxu0
        %v3461 = vpop.f32.mrb[0].mxu0
        %v3462 = vadd.f32 %v3275, %v3461
        %v3463 = vpop.f32.mrb[0].mxu0
        %3464 = vmatprep.mubr.bf16.mxu0 0
        %3465 = vmatmul.mubr.bf16.gmra.mrb[0].mxu0 %v3317
        %v3466 = vpop.f32.mrb[0].mxu0
        %v3467 = vadd.f32 %v3275, %v3466
        %v3468 = vpop.f32.mrb[0].mxu0
        %v3469 = vpop.f32.mrb[0].mxu0
        %v3470 = vadd.f32 %v3275, %v3469
        %v3471 = vpop.f32.mrb[0].mxu0
        %3472 = vmatprep.mubr.bf16.mxu0 0
        %3473 = vmatmul.mubr.bf16.gmra.mrb[0].mxu0 %v3320
        %v3474 = vpop.f32.mrb[0].mxu0
        %v3475 = vadd.f32 %v3275, %v3474
        %v3476 = vpop.f32.mrb[0].mxu0
        %v3477 = vpop.f32.mrb[0].mxu0
        %v3478 = vadd.f32 %v3275, %v3477
        %v3479 = vpop.f32.mrb[0].mxu0
        %3480 = vmatprep.mubr.bf16.mxu0 0
        %3481 = vmatmul.mubr.bf16.gmra.mrb[0].mxu0 %v3323
        %v3482 = vpop.f32.mrb[0].mxu0
        %v3483 = vadd.f32 %v3275, %v3482
        %v3484 = vpop.f32.mrb[0].mxu0
        %v3485 = vpop.f32.mrb[0].mxu0
        %v3486 = vadd.f32 %v3275, %v3485
        %v3487 = vpop.f32.mrb[0].mxu0
        %3488 = vdwg.mxu0
        %v3489 = vadd.f32 %v3189, %v3363
        %v3490 = vadd.f32 %v3190, %v3366
        %v3491 = vadd.f32 %v3191, %v3371
        %v3492 = vadd.f32 %v3192, %v3374
        %v3493 = vadd.f32 %v3193, %v3379
        %v3494 = vadd.f32 %v3194, %v3382
        %v3495 = vadd.f32 %v3195, %v3387
        %v3496 = vadd.f32 %v3196, %v3390
        %v3497 = vadd.f32 %v3197, %v3395
        %v3498 = vadd.f32 %v3198, %v3398
        %v3499 = vadd.f32 %v3199, %v3403
        %v3500 = vadd.f32 %v3200, %v3406
        %v3501 = vadd.f32 %v3201, %v3411
        %v3502 = vadd.f32 %v3202, %v3414
        %v3503 = vadd.f32 %v3203, %v3419
        %v3504 = vadd.f32 %v3204, %v3422
        %v3505 = vadd.f32 %v3205, %v3427
        %v3506 = vadd.f32 %v3206, %v3430
        %v3507 = vadd.f32 %v3207, %v3435
        %v3508 = vadd.f32 %v3208, %v3438
        %v3509 = vadd.f32 %v3209, %v3443
        %v3510 = vadd.f32 %v3210, %v3446
        %v3511 = vadd.f32 %v3211, %v3451
        %v3512 = vadd.f32 %v3212, %v3454
        %v3513 = vadd.f32 %v3213, %v3459
        %v3514 = vadd.f32 %v3214, %v3462
        %v3515 = vadd.f32 %v3215, %v3467
        %v3516 = vadd.f32 %v3216, %v3470
        %v3517 = vadd.f32 %v3217, %v3475
        %v3518 = vadd.f32 %v3218, %v3478
        %v3519 = vadd.f32 %v3219, %v3483
        %v3520 = vadd.f32 %v3220, %v3486
        %v3521 = vmax.f32 %v3489, 0.0
        %v3522 = vmax.f32 %v3490, 0.0
        %v3523 = vmax.f32 %v3491, 0.0
        %v3524 = vmax.f32 %v3492, 0.0
        %v3525 = vmax.f32 %v3493, 0.0
        %v3526 = vmax.f32 %v3494, 0.0
        %v3527 = vmax.f32 %v3495, 0.0
        %v3528 = vmax.f32 %v3496, 0.0
        %v3529 = vmax.f32 %v3497, 0.0
        %v3530 = vmax.f32 %v3498, 0.0
        %v3531 = vmax.f32 %v3499, 0.0
        %v3532 = vmax.f32 %v3500, 0.0
        %v3533 = vmax.f32 %v3501, 0.0
        %v3534 = vmax.f32 %v3502, 0.0
        %v3535 = vmax.f32 %v3503, 0.0
        %v3536 = vmax.f32 %v3504, 0.0
        %v3537 = vmax.f32 %v3505, 0.0
        %v3538 = vmax.f32 %v3506, 0.0
        %v3539 = vmax.f32 %v3507, 0.0
        %v3540 = vmax.f32 %v3508, 0.0
        %v3541 = vmax.f32 %v3509, 0.0
        %v3542 = vmax.f32 %v3510, 0.0
        %v3543 = vmax.f32 %v3511, 0.0
        %v3544 = vmax.f32 %v3512, 0.0
        %v3545 = vmax.f32 %v3513, 0.0
        %v3546 = vmax.f32 %v3514, 0.0
        %v3547 = vmax.f32 %v3515, 0.0
        %v3548 = vmax.f32 %v3516, 0.0
        %v3549 = vmax.f32 %v3517, 0.0
        %v3550 = vmax.f32 %v3518, 0.0
        %v3551 = vmax.f32 %v3519, 0.0
        %v3552 = vmax.f32 %v3520, 0.0
        %3553 = vxpose.xlu0.b32.start [1/16] %v3521, 128
        %3554 = vxpose.xlu0.b32.cont [2/16] %v3522, 128
        %3555 = vxpose.xlu0.b32.cont [3/16] %v3523, 128
        %3556 = vxpose.xlu0.b32.cont [4/16] %v3524, 128
        %3557 = vxpose.xlu0.b32.cont [5/16] %v3525, 128
        %3558 = vxpose.xlu0.b32.cont [6/16] %v3526, 128
        %3559 = vxpose.xlu0.b32.cont [7/16] %v3527, 128
        %3560 = vxpose.xlu0.b32.cont [8/16] %v3528, 128
        %3561 = vxpose.xlu0.b32.cont [9/16] %v3529, 128
        %3562 = vxpose.xlu0.b32.cont [10/16] %v3530, 128
        %3563 = vxpose.xlu0.b32.cont [11/16] %v3531, 128
        %3564 = vxpose.xlu0.b32.cont [12/16] %v3532, 128
        %3565 = vxpose.xlu0.b32.cont [13/16] %v3533, 128
        %3566 = vxpose.xlu0.b32.cont [14/16] %v3534, 128
        %3567 = vxpose.xlu0.b32.cont [15/16] %v3535, 128
        %3568 = vxpose.xlu0.b32.end [16/16] %v3536, 128
        %v3569 = vpop.trf.xlu0
        %v3570 = vpop.trf.xlu0
        %v3571 = vpop.trf.xlu0
        %v3572 = vpop.trf.xlu0
        %v3573 = vpop.trf.xlu0
        %v3574 = vpop.trf.xlu0
        %v3575 = vpop.trf.xlu0
        %v3576 = vpop.trf.xlu0
        %v3577 = vpop.trf.xlu0
        %v3578 = vpop.trf.xlu0
        %v3579 = vpop.trf.xlu0
        %v3580 = vpop.trf.xlu0
        %v3581 = vpop.trf.xlu0
        %v3582 = vpop.trf.xlu0
        %v3583 = vpop.trf.xlu0
        %v3584 = vpop.trf.xlu0
        %3585 = vxpose.xlu0.b32.start [1/16] %v3537, 128
        %3586 = vxpose.xlu0.b32.cont [2/16] %v3538, 128
        %3587 = vxpose.xlu0.b32.cont [3/16] %v3539, 128
        %3588 = vxpose.xlu0.b32.cont [4/16] %v3540, 128
        %3589 = vxpose.xlu0.b32.cont [5/16] %v3541, 128
        %3590 = vxpose.xlu0.b32.cont [6/16] %v3542, 128
        %3591 = vxpose.xlu0.b32.cont [7/16] %v3543, 128
        %3592 = vxpose.xlu0.b32.cont [8/16] %v3544, 128
        %3593 = vxpose.xlu0.b32.cont [9/16] %v3545, 128
        %3594 = vxpose.xlu0.b32.cont [10/16] %v3546, 128
        %3595 = vxpose.xlu0.b32.cont [11/16] %v3547, 128
        %3596 = vxpose.xlu0.b32.cont [12/16] %v3548, 128
        %3597 = vxpose.xlu0.b32.cont [13/16] %v3549, 128
        %3598 = vxpose.xlu0.b32.cont [14/16] %v3550, 128
        %3599 = vxpose.xlu0.b32.cont [15/16] %v3551, 128
        %3600 = vxpose.xlu0.b32.end [16/16] %v3552, 128
        %v3601 = vpop.trf.xlu0
        %v3602 = vpop.trf.xlu0
        %v3603 = vpop.trf.xlu0
        %v3604 = vpop.trf.xlu0
        %v3605 = vpop.trf.xlu0
        %v3606 = vpop.trf.xlu0
        %v3607 = vpop.trf.xlu0
        %v3608 = vpop.trf.xlu0
        %v3609 = vpop.trf.xlu0
        %v3610 = vpop.trf.xlu0
        %v3611 = vpop.trf.xlu0
        %v3612 = vpop.trf.xlu0
        %v3613 = vpop.trf.xlu0
        %v3614 = vpop.trf.xlu0
        %v3615 = vpop.trf.xlu0
        %v3616 = vpop.trf.xlu0
        %3617 = vst [vmem:[%s271] sm:$0xff] %v3569
        %3618 = vst [vmem:[%s271 + $0x8] sm:$0xff] %v3601
        %s3619 = sand.u32 %s181, 1
        %s3620 = scalar_lea.sflag [#allocation4], %s3619
        %s3621 = sand.u32 %s181, 1
        %s3622 = smul.addr %s3621, 16
        %s3623 = scalar_lea.vmem [#allocation3], %s3622
        // Predicated region
        $region49: #{tpu_custom_call.1} parent=47 // pred_check
          %p3624 = pneg %p191
        $region50: #{tpu_custom_call.1} parent=47 // pred_check_branch
          %3626 = sbr.rel (%p3624) target = $region52
        $region51: #{tpu_custom_call.1} parent=47 // pred_region
          %s3628 = ssub.s32 256, 256
          %3629 = vsyncadd %s3620, %s3628
          %s3630 = smul.addr %s21, 2
          %s3631 = smul.addr %s3630, 128
          %s3632 = scalar_lea.hbm %s7, %s3631
          %s3634 = sshll.u32 %s3623, 4
          %s3635 = int_to_ptr.vmem [resolvable:$true] %s3634
          %3637 = dma.vmem_to_hbm [thread:$0]  %s3635, 256, %s3632, %s3620
        $region52: #{tpu_custom_call.1} parent=47 // pred_fallthru
          _
      $region48: #{tpu_custom_call.1} parent=5 // pred_fallthru
        _
      %p3638 = scmp.le.s32.totalorder 2, %s16
      // Predicated region
      $region53: #{tpu_custom_call.1} parent=5 // pred_check
        %p3639 = pneg %p3638
      $region54: #{tpu_custom_call.1} parent=5 // pred_check_branch
        %3641 = sbr.rel (%p3639) target = $region56
      $region55: #{tpu_custom_call.1} parent=5 // pred_region
        %s3642 = ssub.s32 %s16, 2
        // Predicated region
        $region57: #{tpu_custom_call.1} parent=55 // pred_check
          %p3643 = pneg %p197
        $region58: #{tpu_custom_call.1} parent=55 // pred_check_branch
          %3645 = sbr.rel (%p3643) target = $region60
        $region59: #{tpu_custom_call.1} parent=55 // pred_region
          %s3646 = sand.u32 %s182, 1
          %s3647 = scalar_lea.sflag [#allocation4], %s3646
          %s3648 = sand.u32 %s182, 1
          %s3649 = smul.addr %s3648, 16
          %s3650 = scalar_lea.vmem [#allocation3], %s3649
          %3651 = dma.done %s3647, 256
        $region60: #{tpu_custom_call.1} parent=55 // pred_fallthru
          _
      $region56: #{tpu_custom_call.1} parent=5 // pred_fallthru
        _
    $region6: #{tpu_custom_call.1} parent=1 // loop_footer
      %s20 = sadd.s32 1, %s16
    $region7: #{tpu_custom_call.1} parent=1 // loop_footer_branch
      %15 = sbr.rel target = $region3
    $region8: #{tpu_custom_call.1} parent=1 // loop_exit
      _
    %3652 = vsyncpa [#allocation4], 1
    %s3653 = scalar_lea.sflag [#allocation4], 1
    %3654 = vsyncpa %s3653, 1

</llo_original>
